<compile_context>
chip_gen: v6e
topology: v6e:2x2x1
jax: 0.10.0
libtpu: 0.0.40
codegen_flags: <defaults>
</compile_context>

<pallas_src>
import functools
import math

import jax
import jax.numpy as jnp
from jax import lax
from jax.experimental import pallas as pl
from jax.experimental.pallas import tpu as pltpu


# -----------------------------------------------------------------------------
# Generation-aware VMEM budget
# -----------------------------------------------------------------------------
def _vmem_limit_bytes():
    cap = 64 * 1024 * 1024                       # conservative fallback (v7x)
    try:
        info = pltpu.get_tpu_info()
        cap = int(getattr(info, "vmem_capacity_bytes", cap))
    except Exception:
        pass
    return int(cap * 7 // 8)                     # leave headroom


def _pick_batch_block(batch, seq_q, target_rows=256):
    """Batch elements per grid step: fill the MXU M dim, keep >=2 grid steps
    when possible (v7x has 2 TensorCores), and keep blocks whole."""
    bblk = max(1, min(batch, target_rows // max(seq_q, 1)))
    if batch > 1:
        bblk = min(bblk, max(1, batch // 2))
    while batch % bblk:
        bblk -= 1
    return bblk


# -----------------------------------------------------------------------------
# In-kernel helpers
# -----------------------------------------------------------------------------
def _pre_norm(x, g, b, eps):
    # HECTOR LayerNorm semantics: mean over last dim, *unbiased* std (Bessel),
    # eps added to the std (not the variance).  Exact divide (no approx recip)
    # so the normalization matches the torch reference closely.
    d = x.shape[-1]
    mean = jnp.mean(x, axis=-1, keepdims=True)
    diff = x - mean
    var = jnp.sum(diff * diff, axis=-1, keepdims=True) / (d - 1)
    return g * diff / (jnp.sqrt(var) + eps) + b


def _softmax_rows(s):
    s = s - jnp.max(s, axis=-1, keepdims=True)
    e = jnp.exp(s)
    return e * pl.reciprocal(jnp.sum(e, axis=-1, keepdims=True), approx=True)


def _mha_into_ctx(ctx_ref, q, k, v, mask_ref, bblk, sq, sk, n_heads, d_k):
    """Per-(batch, head) softmax(Q K^T) V written into the ctx VMEM scratch at
    static row/lane offsets.  q is already scaled by 1/sqrt(d_k)."""
    q_bf = q.astype(jnp.bfloat16)
    k_bf = k.astype(jnp.bfloat16)
    v_bf = v.astype(jnp.bfloat16)
    for b in range(bblk):                                  # static unrolled
        rq = slice(b * sq, (b + 1) * sq)
        rk = slice(b * sk, (b + 1) * sk)
        # mask is (1, Sk) or (Sq, Sk) int32; computed once per batch element,
        # shared across heads (no per-head replication).
        masked_b = jnp.broadcast_to(mask_ref[b], (sq, sk)) == 0
        for h in range(n_heads):                           # static unrolled
            cs = slice(h * d_k, (h + 1) * d_k)
            # scores = q_h @ k_h^T without materializing a transpose.
            s = lax.dot_general(q_bf[rq, cs], k_bf[rk, cs],
                                (((1,), (1,)), ((), ())),
                                preferred_element_type=jnp.float32)
            s = jnp.where(masked_b, -1e9, s)
            p = _softmax_rows(s)
            ctx_ref[rq, cs] = jnp.dot(p.astype(jnp.bfloat16), v_bf[rk, cs],
                                      preferred_element_type=jnp.float32)


# -----------------------------------------------------------------------------
# Fully fused DecoderLayer kernel: one grid step = `batch_block` batch elements
# -----------------------------------------------------------------------------
def _fused_decoder_layer_kernel(
        x_ref, mem_ref, tgt_mask_ref, src_mask_ref,
        ln0_g_ref, ln0_b_ref, wqkv_ref, bqkv_ref, wo0_ref, bo0_ref,
        ln1_g_ref, ln1_b_ref, wq_ref, bq_ref, wkv_ref, bkv_ref,
        wo1_ref, bo1_ref,
        ln2_g_ref, ln2_b_ref, w1_ref, b1_ref, w2_ref, b2_ref,
        o_ref,
        ctx_ref,
        *, n_heads, d_k, scale, eps):
    bblk, sq, d_model = x_ref.shape
    sk = mem_ref.shape[1]
    rows = bblk * sq

    # Activations kept 2-D (rows, D) so all projections use the full MXU M dim.
    x = x_ref[...].reshape(rows, d_model)                      # f32
    mem = mem_ref[...].reshape(bblk * sk, d_model)             # f32

    # ---- sublayer 0: x + Wo * SelfAttn(LN(x)) -------------------------------
    nx = _pre_norm(x, ln0_g_ref[...], ln0_b_ref[...], eps)
    qkv = jnp.dot(nx.astype(jnp.bfloat16), wqkv_ref[...],
                  preferred_element_type=jnp.float32) + bqkv_ref[...]
    q = qkv[:, :d_model] * scale            # scale folded into q once
    k = qkv[:, d_model:2 * d_model]
    v = qkv[:, 2 * d_model:]
    _mha_into_ctx(ctx_ref, q, k, v, tgt_mask_ref, bblk, sq, sq, n_heads, d_k)
    attn0 = jnp.dot(ctx_ref[...].astype(jnp.bfloat16), wo0_ref[...],
                    preferred_element_type=jnp.float32) + bo0_ref[...]
    x1 = x + attn0                                             # residual

    # ---- sublayer 1: x + Wo * SrcAttn(LN(x), memory, memory) ----------------
    nx1 = _pre_norm(x1, ln1_g_ref[...], ln1_b_ref[...], eps)
    q = (jnp.dot(nx1.astype(jnp.bfloat16), wq_ref[...],
                 preferred_element_type=jnp.float32) + bq_ref[...]) * scale
    kv = jnp.dot(mem.astype(jnp.bfloat16), wkv_ref[...],
                 preferred_element_type=jnp.float32) + bkv_ref[...]
    k = kv[:, :d_model]
    v = kv[:, d_model:]
    _mha_into_ctx(ctx_ref, q, k, v, src_mask_ref, bblk, sq, sk, n_heads, d_k)
    attn1 = jnp.dot(ctx_ref[...].astype(jnp.bfloat16), wo1_ref[...],
                    preferred_element_type=jnp.float32) + bo1_ref[...]
    x2 = x1 + attn1                                            # residual

    # ---- sublayer 2: x + W2 * ReLU(W1 * LN(x)) ------------------------------
    nx2 = _pre_norm(x2, ln2_g_ref[...], ln2_b_ref[...], eps)
    h = jnp.dot(nx2.astype(jnp.bfloat16), w1_ref[...],
                preferred_element_type=jnp.float32) + b1_ref[...]
    h = jnp.maximum(h, 0.0)
    y = jnp.dot(h.astype(jnp.bfloat16), w2_ref[...],
                preferred_element_type=jnp.float32) + b2_ref[...]
    o_ref[...] = (x2 + y).reshape(bblk, sq, d_model)           # residual


# -----------------------------------------------------------------------------
# DecoderLayer forward (dropout = identity, eval semantics)
# -----------------------------------------------------------------------------
def decoder_layer_forward(params, x, memory, src_mask, tgt_mask, n_heads,
                          eps=1e-6, batch_block=None):
    """x: (B, Sq, D), memory: (B, Sk, D), src_mask: (B,1|Sq,Sk),
    tgt_mask: (B,1|Sq,Sq) -> (B, Sq, D)."""
    B, Sq, D = x.shape
    Sk = memory.shape[1]
    assert D % n_heads == 0
    d_k = D // n_heads
    scale = 1.0 / math.sqrt(d_k)
    F = params["ffn"]["w1"].shape[1]

    bblk = batch_block if batch_block is not None else _pick_batch_block(B, Sq)
    grid = (B // bblk,)

    tgt_mask_i = tgt_mask.astype(jnp.int32)
    src_mask_i = src_mask.astype(jnp.int32)
    Mt = tgt_mask_i.shape[1]
    Ms = src_mask_i.shape[1]

    kernel = functools.partial(_fused_decoder_layer_kernel,
                               n_heads=n_heads, d_k=d_k, scale=scale, eps=eps)

    batch_spec = lambda s, d: pl.BlockSpec((bblk, s, d), lambda i: (i, 0, 0))
    const_spec = lambda r, c: pl.BlockSpec((r, c), lambda i: (0, 0))
    # NOTE: these weight specs have a constant index_map; on VMEM-tight
    # configurations (v7x, large D/d_ff) they should additionally be
    # single-buffered (pipeline_mode=pl.Buffered(1)).

    in_specs = [
        batch_spec(Sq, D),               # x
        batch_spec(Sk, D),               # memory
        batch_spec(Mt, Sq),              # tgt mask
        batch_spec(Ms, Sk),              # src mask
        const_spec(1, D), const_spec(1, D),              # ln0 g, b
        const_spec(D, 3 * D), const_spec(1, 3 * D),      # wqkv, bqkv
        const_spec(D, D), const_spec(1, D),              # wo0, bo0
        const_spec(1, D), const_spec(1, D),              # ln1 g, b
        const_spec(D, D), const_spec(1, D),              # wq, bq
        const_spec(D, 2 * D), const_spec(1, 2 * D),      # wkv, bkv
        const_spec(D, D), const_spec(1, D),              # wo1, bo1
        const_spec(1, D), const_spec(1, D),              # ln2 g, b
        const_spec(D, F), const_spec(1, F),              # w1, b1
        const_spec(F, D), const_spec(1, D),              # w2, b2
    ]

    sa = params["self_attn"]
    ca = params["src_attn"]
    ffn = params["ffn"]

    return pl.pallas_call(
        kernel,
        out_shape=jax.ShapeDtypeStruct((B, Sq, D), jnp.float32),
        grid=grid,
        in_specs=in_specs,
        out_specs=pl.BlockSpec((bblk, Sq, D), lambda i: (i, 0, 0)),
        scratch_shapes=[pltpu.VMEM((bblk * Sq, D), jnp.float32)],  # ctx buffer
        compiler_params=pltpu.CompilerParams(
            dimension_semantics=("parallel",),
            vmem_limit_bytes=_vmem_limit_bytes()),
    )(x, memory, tgt_mask_i, src_mask_i,
      params["ln0_g"], params["ln0_b"],
      sa["wqkv"], sa["bqkv"], sa["wo"], sa["bo"],
      params["ln1_g"], params["ln1_b"],
      ca["wq"], ca["bq"], ca["wkv"], ca["bkv"], ca["wo"], ca["bo"],
      params["ln2_g"], params["ln2_b"],
      ffn["w1"], ffn["b1"], ffn["w2"], ffn["b2"])


# -----------------------------------------------------------------------------
# Deterministic parameter init (nn.Linear-style uniform; weights stored bf16 —
# deliberate precision trade-off: bf16 MXU operands, f32 accumulation).
# -----------------------------------------------------------------------------
def _linear_init(key, fan_in, fan_out):
    k1, k2 = jax.random.split(key)
    bound = 1.0 / math.sqrt(fan_in)
    w = jax.random.uniform(k1, (fan_in, fan_out), jnp.float32, -bound, bound)
    b = jax.random.uniform(k2, (fan_out,), jnp.float32, -bound, bound)
    return w.astype(jnp.bfloat16), b.reshape(1, fan_out)


def _self_attn_params(key, d_model):
    ks = jax.random.split(key, 4)
    wq, bq = _linear_init(ks[0], d_model, d_model)
    wk, bk = _linear_init(ks[1], d_model, d_model)
    wv, bv = _linear_init(ks[2], d_model, d_model)
    wo, bo = _linear_init(ks[3], d_model, d_model)
    return dict(wqkv=jnp.concatenate([wq, wk, wv], axis=1),
                bqkv=jnp.concatenate([bq, bk, bv], axis=1),
                wo=wo, bo=bo)


def _src_attn_params(key, d_model):
    ks = jax.random.split(key, 4)
    wq, bq = _linear_init(ks[0], d_model, d_model)
    wk, bk = _linear_init(ks[1], d_model, d_model)
    wv, bv = _linear_init(ks[2], d_model, d_model)
    wo, bo = _linear_init(ks[3], d_model, d_model)
    return dict(wq=wq, bq=bq,
                wkv=jnp.concatenate([wk, wv], axis=1),
                bkv=jnp.concatenate([bk, bv], axis=1),
                wo=wo, bo=bo)


def init_decoder_layer_params(key, d_model, d_ff):
    ks = jax.random.split(key, 4)
    w1, b1 = _linear_init(ks[2], d_model, d_ff)
    w2, b2 = _linear_init(ks[3], d_ff, d_model)
    ones = jnp.ones((1, d_model), jnp.float32)
    zeros = jnp.zeros((1, d_model), jnp.float32)
    return dict(
        self_attn=_self_attn_params(ks[0], d_model),
        src_attn=_src_attn_params(ks[1], d_model),
        ffn=dict(w1=w1, b1=b1, w2=w2, b2=b2),
        ln0_g=ones, ln0_b=zeros,
        ln1_g=ones, ln1_b=zeros,
        ln2_g=ones, ln2_b=zeros,
    )


# -----------------------------------------------------------------------------
if __name__ == "__main__":
    # Small but TPU-friendly shapes: d_model multiple of 128 (lane-dense
    # activations / unmasked stores) and n_heads chosen so d_k = 128
    # (MXU-aligned per-head slices).
    B, S_tgt, S_src = 4, 8, 8
    d_model, n_heads, d_ff = 256, 2, 512

    key = jax.random.PRNGKey(0)
    kx, km, kp = jax.random.split(key, 3)
    x = jax.random.normal(kx, (B, S_tgt, d_model), jnp.float32)
    memory = jax.random.normal(km, (B, S_src, d_model), jnp.float32)
    src_mask = jnp.ones((B, 1, S_src), jnp.int32)                 # all valid
    tgt_mask = jnp.broadcast_to(
        jnp.tril(jnp.ones((S_tgt, S_tgt), jnp.int32))[None], (B, S_tgt, S_tgt))

    params = init_decoder_layer_params(kp, d_model, d_ff)

    fwd = jax.jit(functools.partial(decoder_layer_forward, n_heads=n_heads))
    out = fwd(params, x, memory, src_mask, tgt_mask)
    jax.block_until_ready(out)
    assert out.shape == (B, S_tgt, d_model)
    assert bool(jnp.all(jnp.isfinite(out)))
    print("KERNEL_OK")
</pallas_src>

<mosaic_0001>
module attributes {stable_mosaic.version = 11 : i64} {
  func.func @_fused_decoder_layer_kernel(%arg0: i32, %arg1: memref<2x8x256xf32, #tpu.memory_space<vmem>>, %arg2: memref<2x8x256xf32, #tpu.memory_space<vmem>>, %arg3: memref<2x8x8xi32, #tpu.memory_space<vmem>>, %arg4: memref<2x1x8xi32, #tpu.memory_space<vmem>>, %arg5: memref<1x256xf32, #tpu.memory_space<vmem>>, %arg6: memref<1x256xf32, #tpu.memory_space<vmem>>, %arg7: memref<256x768xbf16, #tpu.memory_space<vmem>>, %arg8: memref<1x768xf32, #tpu.memory_space<vmem>>, %arg9: memref<256x256xbf16, #tpu.memory_space<vmem>>, %arg10: memref<1x256xf32, #tpu.memory_space<vmem>>, %arg11: memref<1x256xf32, #tpu.memory_space<vmem>>, %arg12: memref<1x256xf32, #tpu.memory_space<vmem>>, %arg13: memref<256x256xbf16, #tpu.memory_space<vmem>>, %arg14: memref<1x256xf32, #tpu.memory_space<vmem>>, %arg15: memref<256x512xbf16, #tpu.memory_space<vmem>>, %arg16: memref<1x512xf32, #tpu.memory_space<vmem>>, %arg17: memref<256x256xbf16, #tpu.memory_space<vmem>>, %arg18: memref<1x256xf32, #tpu.memory_space<vmem>>, %arg19: memref<1x256xf32, #tpu.memory_space<vmem>>, %arg20: memref<1x256xf32, #tpu.memory_space<vmem>>, %arg21: memref<256x512xbf16, #tpu.memory_space<vmem>>, %arg22: memref<1x512xf32, #tpu.memory_space<vmem>>, %arg23: memref<512x256xbf16, #tpu.memory_space<vmem>>, %arg24: memref<1x256xf32, #tpu.memory_space<vmem>>, %arg25: memref<2x8x256xf32, #tpu.memory_space<vmem>>, %arg26: memref<16x256xf32, #tpu.memory_space<vmem>>) attributes {dimension_semantics = [#tpu.dimension_semantics<parallel>], iteration_bounds = array<i64: 2>, scalar_prefetch = 0 : i64, scratch_operands = 1 : i64, tpu.core_type = #tpu.core_type<tc>, window_params = [{transform_indices = @transform_0, window_bounds = array<i64: 2, 8, 256>}, {transform_indices = @transform_1, window_bounds = array<i64: 2, 8, 256>}, {transform_indices = @transform_2, window_bounds = array<i64: 2, 8, 8>}, {transform_indices = @transform_3, window_bounds = array<i64: 2, 1, 8>}, {pipeline_mode = #tpu.pipeline_mode<synchronous>, transform_indices = @transform_4, window_bounds = array<i64: 1, 256>}, {pipeline_mode = #tpu.pipeline_mode<synchronous>, transform_indices = @transform_5, window_bounds = array<i64: 1, 256>}, {pipeline_mode = #tpu.pipeline_mode<synchronous>, transform_indices = @transform_6, window_bounds = array<i64: 256, 768>}, {pipeline_mode = #tpu.pipeline_mode<synchronous>, transform_indices = @transform_7, window_bounds = array<i64: 1, 768>}, {pipeline_mode = #tpu.pipeline_mode<synchronous>, transform_indices = @transform_8, window_bounds = array<i64: 256, 256>}, {pipeline_mode = #tpu.pipeline_mode<synchronous>, transform_indices = @transform_9, window_bounds = array<i64: 1, 256>}, {pipeline_mode = #tpu.pipeline_mode<synchronous>, transform_indices = @transform_10, window_bounds = array<i64: 1, 256>}, {pipeline_mode = #tpu.pipeline_mode<synchronous>, transform_indices = @transform_11, window_bounds = array<i64: 1, 256>}, {pipeline_mode = #tpu.pipeline_mode<synchronous>, transform_indices = @transform_12, window_bounds = array<i64: 256, 256>}, {pipeline_mode = #tpu.pipeline_mode<synchronous>, transform_indices = @transform_13, window_bounds = array<i64: 1, 256>}, {pipeline_mode = #tpu.pipeline_mode<synchronous>, transform_indices = @transform_14, window_bounds = array<i64: 256, 512>}, {pipeline_mode = #tpu.pipeline_mode<synchronous>, transform_indices = @transform_15, window_bounds = array<i64: 1, 512>}, {pipeline_mode = #tpu.pipeline_mode<synchronous>, transform_indices = @transform_16, window_bounds = array<i64: 256, 256>}, {pipeline_mode = #tpu.pipeline_mode<synchronous>, transform_indices = @transform_17, window_bounds = array<i64: 1, 256>}, {pipeline_mode = #tpu.pipeline_mode<synchronous>, transform_indices = @transform_18, window_bounds = array<i64: 1, 256>}, {pipeline_mode = #tpu.pipeline_mode<synchronous>, transform_indices = @transform_19, window_bounds = array<i64: 1, 256>}, {pipeline_mode = #tpu.pipeline_mode<synchronous>, transform_indices = @transform_20, window_bounds = array<i64: 256, 512>}, {pipeline_mode = #tpu.pipeline_mode<synchronous>, transform_indices = @transform_21, window_bounds = array<i64: 1, 512>}, {pipeline_mode = #tpu.pipeline_mode<synchronous>, transform_indices = @transform_22, window_bounds = array<i64: 512, 256>}, {pipeline_mode = #tpu.pipeline_mode<synchronous>, transform_indices = @transform_23, window_bounds = array<i64: 1, 256>}, {transform_indices = @transform_24, window_bounds = array<i64: 2, 8, 256>}]} {
    %c0 = arith.constant 0 : index
    %c0_0 = arith.constant 0 : index
    %c0_1 = arith.constant 0 : index
    %0 = vector.load %arg1[%c0, %c0_0, %c0_1] : memref<2x8x256xf32, #tpu.memory_space<vmem>>, vector<2x8x256xf32>
    %1 = vector.shape_cast %0 : vector<2x8x256xf32> to vector<16x256xf32>
    %c0_2 = arith.constant 0 : index
    %c0_3 = arith.constant 0 : index
    %c0_4 = arith.constant 0 : index
    %2 = vector.load %arg2[%c0_2, %c0_3, %c0_4] : memref<2x8x256xf32, #tpu.memory_space<vmem>>, vector<2x8x256xf32>
    %3 = vector.shape_cast %2 : vector<2x8x256xf32> to vector<16x256xf32>
    %c0_5 = arith.constant 0 : index
    %c0_6 = arith.constant 0 : index
    %4 = vector.load %arg5[%c0_5, %c0_6] : memref<1x256xf32, #tpu.memory_space<vmem>>, vector<1x256xf32>
    %c0_7 = arith.constant 0 : index
    %c0_8 = arith.constant 0 : index
    %5 = vector.load %arg6[%c0_7, %c0_8] : memref<1x256xf32, #tpu.memory_space<vmem>>, vector<1x256xf32>
    %cst = arith.constant dense<0.000000e+00> : vector<16xf32>
    %6 = vector.multi_reduction <add>, %1, %cst [1] : vector<16x256xf32> to vector<16xf32>
    %7 = vector.shape_cast %6 : vector<16xf32> to vector<16x1xf32>
    %cst_9 = arith.constant 2.560000e+02 : f32
    %8 = vector.broadcast %cst_9 : f32 to vector<16x1xf32>
    %9 = arith.divf %7, %8 : vector<16x1xf32>
    %10 = vector.broadcast %9 : vector<16x1xf32> to vector<16x256xf32>
    %11 = arith.subf %1, %10 : vector<16x256xf32>
    %12 = arith.mulf %11, %11 : vector<16x256xf32>
    %cst_10 = arith.constant dense<0.000000e+00> : vector<16xf32>
    %13 = vector.multi_reduction <add>, %12, %cst_10 [1] : vector<16x256xf32> to vector<16xf32>
    %14 = vector.shape_cast %13 : vector<16xf32> to vector<16x1xf32>
    %cst_11 = arith.constant 2.550000e+02 : f32
    %15 = vector.broadcast %cst_11 : f32 to vector<16x1xf32>
    %16 = arith.divf %14, %15 : vector<16x1xf32>
    %17 = vector.broadcast %4 : vector<1x256xf32> to vector<16x256xf32>
    %18 = arith.mulf %17, %11 : vector<16x256xf32>
    %19 = math.sqrt %16 : vector<16x1xf32>
    %cst_12 = arith.constant 9.99999997E-7 : f32
    %20 = vector.broadcast %cst_12 : f32 to vector<16x1xf32>
    %21 = arith.addf %19, %20 : vector<16x1xf32>
    %22 = vector.broadcast %21 : vector<16x1xf32> to vector<16x256xf32>
    %23 = arith.divf %18, %22 : vector<16x256xf32>
    %24 = vector.broadcast %5 : vector<1x256xf32> to vector<16x256xf32>
    %25 = arith.addf %23, %24 : vector<16x256xf32>
    %26 = arith.truncf %25 : vector<16x256xf32> to vector<16x256xbf16>
    %c0_13 = arith.constant 0 : index
    %c0_14 = arith.constant 0 : index
    %27 = vector.load %arg7[%c0_13, %c0_14] : memref<256x768xbf16, #tpu.memory_space<vmem>>, vector<256x768xbf16>
    %cst_15 = arith.constant dense<0.000000e+00> : vector<16x768xf32>
    %28 = tpu.matmul %26, %27, %cst_15 {dimension_numbers = #tpu.dot_dimension_numbers<[1], [0], [0], [1], [0, 0, 1, 1], [], []>} : vector<16x256xbf16>, vector<256x768xbf16>, vector<16x768xf32> -> vector<16x768xf32>
    %c0_16 = arith.constant 0 : index
    %c0_17 = arith.constant 0 : index
    %29 = vector.load %arg8[%c0_16, %c0_17] : memref<1x768xf32, #tpu.memory_space<vmem>>, vector<1x768xf32>
    %30 = vector.broadcast %29 : vector<1x768xf32> to vector<16x768xf32>
    %31 = arith.addf %28, %30 : vector<16x768xf32>
    %32 = vector.extract_strided_slice %31 {offsets = [0, 0], sizes = [16, 256], strides = [1, 1]} : vector<16x768xf32> to vector<16x256xf32>
    %cst_18 = arith.constant 0.0883883461 : f32
    %33 = vector.broadcast %cst_18 : f32 to vector<16x256xf32>
    %34 = arith.mulf %32, %33 : vector<16x256xf32>
    %35 = vector.extract_strided_slice %31 {offsets = [0, 256], sizes = [16, 256], strides = [1, 1]} : vector<16x768xf32> to vector<16x256xf32>
    %36 = vector.extract_strided_slice %31 {offsets = [0, 512], sizes = [16, 256], strides = [1, 1]} : vector<16x768xf32> to vector<16x256xf32>
    %37 = arith.truncf %34 : vector<16x256xf32> to vector<16x256xbf16>
    %38 = arith.truncf %35 : vector<16x256xf32> to vector<16x256xbf16>
    %39 = arith.truncf %36 : vector<16x256xf32> to vector<16x256xbf16>
    %c0_19 = arith.constant 0 : index
    %c0_20 = arith.constant 0 : index
    %c0_21 = arith.constant 0 : index
    %40 = vector.load %arg3[%c0_19, %c0_20, %c0_21] : memref<2x8x8xi32, #tpu.memory_space<vmem>>, vector<1x8x8xi32>
    %41 = vector.shape_cast %40 : vector<1x8x8xi32> to vector<8x8xi32>
    %c0_i32 = arith.constant 0 : i32
    %42 = vector.broadcast %c0_i32 : i32 to vector<8x8xi32>
    %43 = arith.cmpi eq, %41, %42 : vector<8x8xi32>
    %44 = vector.extract_strided_slice %37 {offsets = [0, 0], sizes = [8, 128], strides = [1, 1]} : vector<16x256xbf16> to vector<8x128xbf16>
    %45 = vector.extract_strided_slice %38 {offsets = [0, 0], sizes = [8, 128], strides = [1, 1]} : vector<16x256xbf16> to vector<8x128xbf16>
    %cst_22 = arith.constant dense<0.000000e+00> : vector<8x8xf32>
    %46 = tpu.matmul %44, %45, %cst_22 {dimension_numbers = #tpu.dot_dimension_numbers<[1], [1], [0], [0], [0, 0, 1, 0], [], []>} : vector<8x128xbf16>, vector<8x128xbf16>, vector<8x8xf32> -> vector<8x8xf32>
    %cst_23 = arith.constant -1.000000e+09 : f32
    %47 = vector.broadcast %cst_23 : f32 to vector<8x8xf32>
    %48 = arith.select %43, %47, %46 : vector<8x8xi1>, vector<8x8xf32>
    %cst_24 = arith.constant dense<0xFF800000> : vector<8xf32>
    %49 = vector.multi_reduction <maximumf>, %48, %cst_24 [1] : vector<8x8xf32> to vector<8xf32>
    %50 = vector.shape_cast %49 : vector<8xf32> to vector<8x1xf32>
    %51 = vector.broadcast %50 : vector<8x1xf32> to vector<8x8xf32>
    %52 = arith.subf %48, %51 : vector<8x8xf32>
    %53 = math.exp %52 : vector<8x8xf32>
    %cst_25 = arith.constant dense<0.000000e+00> : vector<8xf32>
    %54 = vector.multi_reduction <add>, %53, %cst_25 [1] : vector<8x8xf32> to vector<8xf32>
    %55 = vector.shape_cast %54 : vector<8xf32> to vector<8x1xf32>
    %56 = tpu.reciprocal %55 {approx = true} : vector<8x1xf32> -> vector<8x1xf32>
    %57 = vector.broadcast %56 : vector<8x1xf32> to vector<8x8xf32>
    %58 = arith.mulf %53, %57 : vector<8x8xf32>
    %59 = arith.truncf %58 : vector<8x8xf32> to vector<8x8xbf16>
    %60 = vector.extract_strided_slice %39 {offsets = [0, 0], sizes = [8, 128], strides = [1, 1]} : vector<16x256xbf16> to vector<8x128xbf16>
    %cst_26 = arith.constant dense<0.000000e+00> : vector<8x128xf32>
    %61 = tpu.matmul %59, %60, %cst_26 {dimension_numbers = #tpu.dot_dimension_numbers<[1], [0], [0], [1], [0, 0, 1, 1], [], []>} : vector<8x8xbf16>, vector<8x128xbf16>, vector<8x128xf32> -> vector<8x128xf32>
    %c0_27 = arith.constant 0 : index
    %c0_28 = arith.constant 0 : index
    %62 = vector.load %arg26[%c0_27, %c0_28] : memref<16x256xf32, #tpu.memory_space<vmem>>, vector<8x128xf32>
    tpu.vector_store %arg26[%c0_27, %c0_28], %61 {strides = array<i32>} : memref<16x256xf32, #tpu.memory_space<vmem>>, vector<8x128xf32>,
    %63 = vector.extract_strided_slice %37 {offsets = [0, 128], sizes = [8, 128], strides = [1, 1]} : vector<16x256xbf16> to vector<8x128xbf16>
    %64 = vector.extract_strided_slice %38 {offsets = [0, 128], sizes = [8, 128], strides = [1, 1]} : vector<16x256xbf16> to vector<8x128xbf16>
    %cst_29 = arith.constant dense<0.000000e+00> : vector<8x8xf32>
    %65 = tpu.matmul %63, %64, %cst_29 {dimension_numbers = #tpu.dot_dimension_numbers<[1], [1], [0], [0], [0, 0, 1, 0], [], []>} : vector<8x128xbf16>, vector<8x128xbf16>, vector<8x8xf32> -> vector<8x8xf32>
    %cst_30 = arith.constant -1.000000e+09 : f32
    %66 = vector.broadcast %cst_30 : f32 to vector<8x8xf32>
    %67 = arith.select %43, %66, %65 : vector<8x8xi1>, vector<8x8xf32>
    %cst_31 = arith.constant dense<0xFF800000> : vector<8xf32>
    %68 = vector.multi_reduction <maximumf>, %67, %cst_31 [1] : vector<8x8xf32> to vector<8xf32>
    %69 = vector.shape_cast %68 : vector<8xf32> to vector<8x1xf32>
    %70 = vector.broadcast %69 : vector<8x1xf32> to vector<8x8xf32>
    %71 = arith.subf %67, %70 : vector<8x8xf32>
    %72 = math.exp %71 : vector<8x8xf32>
    %cst_32 = arith.constant dense<0.000000e+00> : vector<8xf32>
    %73 = vector.multi_reduction <add>, %72, %cst_32 [1] : vector<8x8xf32> to vector<8xf32>
    %74 = vector.shape_cast %73 : vector<8xf32> to vector<8x1xf32>
    %75 = tpu.reciprocal %74 {approx = true} : vector<8x1xf32> -> vector<8x1xf32>
    %76 = vector.broadcast %75 : vector<8x1xf32> to vector<8x8xf32>
    %77 = arith.mulf %72, %76 : vector<8x8xf32>
    %78 = arith.truncf %77 : vector<8x8xf32> to vector<8x8xbf16>
    %79 = vector.extract_strided_slice %39 {offsets = [0, 128], sizes = [8, 128], strides = [1, 1]} : vector<16x256xbf16> to vector<8x128xbf16>
    %cst_33 = arith.constant dense<0.000000e+00> : vector<8x128xf32>
    %80 = tpu.matmul %78, %79, %cst_33 {dimension_numbers = #tpu.dot_dimension_numbers<[1], [0], [0], [1], [0, 0, 1, 1], [], []>} : vector<8x8xbf16>, vector<8x128xbf16>, vector<8x128xf32> -> vector<8x128xf32>
    %c0_34 = arith.constant 0 : index
    %c128 = arith.constant 128 : index
    %81 = vector.load %arg26[%c0_34, %c128] : memref<16x256xf32, #tpu.memory_space<vmem>>, vector<8x128xf32>
    tpu.vector_store %arg26[%c0_34, %c128], %80 {strides = array<i32>} : memref<16x256xf32, #tpu.memory_space<vmem>>, vector<8x128xf32>,
    %c1 = arith.constant 1 : index
    %c0_35 = arith.constant 0 : index
    %c0_36 = arith.constant 0 : index
    %82 = vector.load %arg3[%c1, %c0_35, %c0_36] : memref<2x8x8xi32, #tpu.memory_space<vmem>>, vector<1x8x8xi32>
    %83 = vector.shape_cast %82 : vector<1x8x8xi32> to vector<8x8xi32>
    %c0_i32_37 = arith.constant 0 : i32
    %84 = vector.broadcast %c0_i32_37 : i32 to vector<8x8xi32>
    %85 = arith.cmpi eq, %83, %84 : vector<8x8xi32>
    %86 = vector.extract_strided_slice %37 {offsets = [8, 0], sizes = [8, 128], strides = [1, 1]} : vector<16x256xbf16> to vector<8x128xbf16>
    %87 = vector.extract_strided_slice %38 {offsets = [8, 0], sizes = [8, 128], strides = [1, 1]} : vector<16x256xbf16> to vector<8x128xbf16>
    %cst_38 = arith.constant dense<0.000000e+00> : vector<8x8xf32>
    %88 = tpu.matmul %86, %87, %cst_38 {dimension_numbers = #tpu.dot_dimension_numbers<[1], [1], [0], [0], [0, 0, 1, 0], [], []>} : vector<8x128xbf16>, vector<8x128xbf16>, vector<8x8xf32> -> vector<8x8xf32>
    %cst_39 = arith.constant -1.000000e+09 : f32
    %89 = vector.broadcast %cst_39 : f32 to vector<8x8xf32>
    %90 = arith.select %85, %89, %88 : vector<8x8xi1>, vector<8x8xf32>
    %cst_40 = arith.constant dense<0xFF800000> : vector<8xf32>
    %91 = vector.multi_reduction <maximumf>, %90, %cst_40 [1] : vector<8x8xf32> to vector<8xf32>
    %92 = vector.shape_cast %91 : vector<8xf32> to vector<8x1xf32>
    %93 = vector.broadcast %92 : vector<8x1xf32> to vector<8x8xf32>
    %94 = arith.subf %90, %93 : vector<8x8xf32>
    %95 = math.exp %94 : vector<8x8xf32>
    %cst_41 = arith.constant dense<0.000000e+00> : vector<8xf32>
    %96 = vector.multi_reduction <add>, %95, %cst_41 [1] : vector<8x8xf32> to vector<8xf32>
    %97 = vector.shape_cast %96 : vector<8xf32> to vector<8x1xf32>
    %98 = tpu.reciprocal %97 {approx = true} : vector<8x1xf32> -> vector<8x1xf32>
    %99 = vector.broadcast %98 : vector<8x1xf32> to vector<8x8xf32>
    %100 = arith.mulf %95, %99 : vector<8x8xf32>
    %101 = arith.truncf %100 : vector<8x8xf32> to vector<8x8xbf16>
    %102 = vector.extract_strided_slice %39 {offsets = [8, 0], sizes = [8, 128], strides = [1, 1]} : vector<16x256xbf16> to vector<8x128xbf16>
    %cst_42 = arith.constant dense<0.000000e+00> : vector<8x128xf32>
    %103 = tpu.matmul %101, %102, %cst_42 {dimension_numbers = #tpu.dot_dimension_numbers<[1], [0], [0], [1], [0, 0, 1, 1], [], []>} : vector<8x8xbf16>, vector<8x128xbf16>, vector<8x128xf32> -> vector<8x128xf32>
    %c8 = arith.constant 8 : index
    %c0_43 = arith.constant 0 : index
    %104 = vector.load %arg26[%c8, %c0_43] : memref<16x256xf32, #tpu.memory_space<vmem>>, vector<8x128xf32>
    tpu.vector_store %arg26[%c8, %c0_43], %103 {strides = array<i32>} : memref<16x256xf32, #tpu.memory_space<vmem>>, vector<8x128xf32>,
    %105 = vector.extract_strided_slice %37 {offsets = [8, 128], sizes = [8, 128], strides = [1, 1]} : vector<16x256xbf16> to vector<8x128xbf16>
    %106 = vector.extract_strided_slice %38 {offsets = [8, 128], sizes = [8, 128], strides = [1, 1]} : vector<16x256xbf16> to vector<8x128xbf16>
    %cst_44 = arith.constant dense<0.000000e+00> : vector<8x8xf32>
    %107 = tpu.matmul %105, %106, %cst_44 {dimension_numbers = #tpu.dot_dimension_numbers<[1], [1], [0], [0], [0, 0, 1, 0], [], []>} : vector<8x128xbf16>, vector<8x128xbf16>, vector<8x8xf32> -> vector<8x8xf32>
    %cst_45 = arith.constant -1.000000e+09 : f32
    %108 = vector.broadcast %cst_45 : f32 to vector<8x8xf32>
    %109 = arith.select %85, %108, %107 : vector<8x8xi1>, vector<8x8xf32>
    %cst_46 = arith.constant dense<0xFF800000> : vector<8xf32>
    %110 = vector.multi_reduction <maximumf>, %109, %cst_46 [1] : vector<8x8xf32> to vector<8xf32>
    %111 = vector.shape_cast %110 : vector<8xf32> to vector<8x1xf32>
    %112 = vector.broadcast %111 : vector<8x1xf32> to vector<8x8xf32>
    %113 = arith.subf %109, %112 : vector<8x8xf32>
    %114 = math.exp %113 : vector<8x8xf32>
    %cst_47 = arith.constant dense<0.000000e+00> : vector<8xf32>
    %115 = vector.multi_reduction <add>, %114, %cst_47 [1] : vector<8x8xf32> to vector<8xf32>
    %116 = vector.shape_cast %115 : vector<8xf32> to vector<8x1xf32>
    %117 = tpu.reciprocal %116 {approx = true} : vector<8x1xf32> -> vector<8x1xf32>
    %118 = vector.broadcast %117 : vector<8x1xf32> to vector<8x8xf32>
    %119 = arith.mulf %114, %118 : vector<8x8xf32>
    %120 = arith.truncf %119 : vector<8x8xf32> to vector<8x8xbf16>
    %121 = vector.extract_strided_slice %39 {offsets = [8, 128], sizes = [8, 128], strides = [1, 1]} : vector<16x256xbf16> to vector<8x128xbf16>
    %cst_48 = arith.constant dense<0.000000e+00> : vector<8x128xf32>
    %122 = tpu.matmul %120, %121, %cst_48 {dimension_numbers = #tpu.dot_dimension_numbers<[1], [0], [0], [1], [0, 0, 1, 1], [], []>} : vector<8x8xbf16>, vector<8x128xbf16>, vector<8x128xf32> -> vector<8x128xf32>
    %c8_49 = arith.constant 8 : index
    %c128_50 = arith.constant 128 : index
    %123 = vector.load %arg26[%c8_49, %c128_50] : memref<16x256xf32, #tpu.memory_space<vmem>>, vector<8x128xf32>
    tpu.vector_store %arg26[%c8_49, %c128_50], %122 {strides = array<i32>} : memref<16x256xf32, #tpu.memory_space<vmem>>, vector<8x128xf32>,
    %c0_51 = arith.constant 0 : index
    %c0_52 = arith.constant 0 : index
    %124 = vector.load %arg26[%c0_51, %c0_52] : memref<16x256xf32, #tpu.memory_space<vmem>>, vector<16x256xf32>
    %125 = arith.truncf %124 : vector<16x256xf32> to vector<16x256xbf16>
    %c0_53 = arith.constant 0 : index
    %c0_54 = arith.constant 0 : index
    %126 = vector.load %arg9[%c0_53, %c0_54] : memref<256x256xbf16, #tpu.memory_space<vmem>>, vector<256x256xbf16>
    %cst_55 = arith.constant dense<0.000000e+00> : vector<16x256xf32>
    %127 = tpu.matmul %125, %126, %cst_55 {dimension_numbers = #tpu.dot_dimension_numbers<[1], [0], [0], [1], [0, 0, 1, 1], [], []>} : vector<16x256xbf16>, vector<256x256xbf16>, vector<16x256xf32> -> vector<16x256xf32>
    %c0_56 = arith.constant 0 : index
    %c0_57 = arith.constant 0 : index
    %128 = vector.load %arg10[%c0_56, %c0_57] : memref<1x256xf32, #tpu.memory_space<vmem>>, vector<1x256xf32>
    %129 = vector.broadcast %128 : vector<1x256xf32> to vector<16x256xf32>
    %130 = arith.addf %127, %129 : vector<16x256xf32>
    %131 = arith.addf %1, %130 : vector<16x256xf32>
    %c0_58 = arith.constant 0 : index
    %c0_59 = arith.constant 0 : index
    %132 = vector.load %arg11[%c0_58, %c0_59] : memref<1x256xf32, #tpu.memory_space<vmem>>, vector<1x256xf32>
    %c0_60 = arith.constant 0 : index
    %c0_61 = arith.constant 0 : index
    %133 = vector.load %arg12[%c0_60, %c0_61] : memref<1x256xf32, #tpu.memory_space<vmem>>, vector<1x256xf32>
    %cst_62 = arith.constant dense<0.000000e+00> : vector<16xf32>
    %134 = vector.multi_reduction <add>, %131, %cst_62 [1] : vector<16x256xf32> to vector<16xf32>
    %135 = vector.shape_cast %134 : vector<16xf32> to vector<16x1xf32>
    %cst_63 = arith.constant 2.560000e+02 : f32
    %136 = vector.broadcast %cst_63 : f32 to vector<16x1xf32>
    %137 = arith.divf %135, %136 : vector<16x1xf32>
    %138 = vector.broadcast %137 : vector<16x1xf32> to vector<16x256xf32>
    %139 = arith.subf %131, %138 : vector<16x256xf32>
    %140 = arith.mulf %139, %139 : vector<16x256xf32>
    %cst_64 = arith.constant dense<0.000000e+00> : vector<16xf32>
    %141 = vector.multi_reduction <add>, %140, %cst_64 [1] : vector<16x256xf32> to vector<16xf32>
    %142 = vector.shape_cast %141 : vector<16xf32> to vector<16x1xf32>
    %cst_65 = arith.constant 2.550000e+02 : f32
    %143 = vector.broadcast %cst_65 : f32 to vector<16x1xf32>
    %144 = arith.divf %142, %143 : vector<16x1xf32>
    %145 = vector.broadcast %132 : vector<1x256xf32> to vector<16x256xf32>
    %146 = arith.mulf %145, %139 : vector<16x256xf32>
    %147 = math.sqrt %144 : vector<16x1xf32>
    %cst_66 = arith.constant 9.99999997E-7 : f32
    %148 = vector.broadcast %cst_66 : f32 to vector<16x1xf32>
    %149 = arith.addf %147, %148 : vector<16x1xf32>
    %150 = vector.broadcast %149 : vector<16x1xf32> to vector<16x256xf32>
    %151 = arith.divf %146, %150 : vector<16x256xf32>
    %152 = vector.broadcast %133 : vector<1x256xf32> to vector<16x256xf32>
    %153 = arith.addf %151, %152 : vector<16x256xf32>
    %154 = arith.truncf %153 : vector<16x256xf32> to vector<16x256xbf16>
    %c0_67 = arith.constant 0 : index
    %c0_68 = arith.constant 0 : index
    %155 = vector.load %arg13[%c0_67, %c0_68] : memref<256x256xbf16, #tpu.memory_space<vmem>>, vector<256x256xbf16>
    %cst_69 = arith.constant dense<0.000000e+00> : vector<16x256xf32>
    %156 = tpu.matmul %154, %155, %cst_69 {dimension_numbers = #tpu.dot_dimension_numbers<[1], [0], [0], [1], [0, 0, 1, 1], [], []>} : vector<16x256xbf16>, vector<256x256xbf16>, vector<16x256xf32> -> vector<16x256xf32>
    %c0_70 = arith.constant 0 : index
    %c0_71 = arith.constant 0 : index
    %157 = vector.load %arg14[%c0_70, %c0_71] : memref<1x256xf32, #tpu.memory_space<vmem>>, vector<1x256xf32>
    %158 = vector.broadcast %157 : vector<1x256xf32> to vector<16x256xf32>
    %159 = arith.addf %156, %158 : vector<16x256xf32>
    %cst_72 = arith.constant 0.0883883461 : f32
    %160 = vector.broadcast %cst_72 : f32 to vector<16x256xf32>
    %161 = arith.mulf %159, %160 : vector<16x256xf32>
    %162 = arith.truncf %3 : vector<16x256xf32> to vector<16x256xbf16>
    %c0_73 = arith.constant 0 : index
    %c0_74 = arith.constant 0 : index
    %163 = vector.load %arg15[%c0_73, %c0_74] : memref<256x512xbf16, #tpu.memory_space<vmem>>, vector<256x512xbf16>
    %cst_75 = arith.constant dense<0.000000e+00> : vector<16x512xf32>
    %164 = tpu.matmul %162, %163, %cst_75 {dimension_numbers = #tpu.dot_dimension_numbers<[1], [0], [0], [1], [0, 0, 1, 1], [], []>} : vector<16x256xbf16>, vector<256x512xbf16>, vector<16x512xf32> -> vector<16x512xf32>
    %c0_76 = arith.constant 0 : index
    %c0_77 = arith.constant 0 : index
    %165 = vector.load %arg16[%c0_76, %c0_77] : memref<1x512xf32, #tpu.memory_space<vmem>>, vector<1x512xf32>
    %166 = vector.broadcast %165 : vector<1x512xf32> to vector<16x512xf32>
    %167 = arith.addf %164, %166 : vector<16x512xf32>
    %168 = vector.extract_strided_slice %167 {offsets = [0, 0], sizes = [16, 256], strides = [1, 1]} : vector<16x512xf32> to vector<16x256xf32>
    %169 = vector.extract_strided_slice %167 {offsets = [0, 256], sizes = [16, 256], strides = [1, 1]} : vector<16x512xf32> to vector<16x256xf32>
    %170 = arith.truncf %161 : vector<16x256xf32> to vector<16x256xbf16>
    %171 = arith.truncf %168 : vector<16x256xf32> to vector<16x256xbf16>
    %172 = arith.truncf %169 : vector<16x256xf32> to vector<16x256xbf16>
    %c0_78 = arith.constant 0 : index
    %c0_79 = arith.constant 0 : index
    %c0_80 = arith.constant 0 : index
    %173 = vector.load %arg4[%c0_78, %c0_79, %c0_80] : memref<2x1x8xi32, #tpu.memory_space<vmem>>, vector<1x1x8xi32>
    %174 = vector.shape_cast %173 : vector<1x1x8xi32> to vector<1x8xi32>
    %175 = vector.shape_cast %174 : vector<1x8xi32> to vector<1x8xi32>
    %176 = vector.broadcast %175 : vector<1x8xi32> to vector<8x8xi32>
    %c0_i32_81 = arith.constant 0 : i32
    %177 = vector.broadcast %c0_i32_81 : i32 to vector<8x8xi32>
    %178 = arith.cmpi eq, %176, %177 : vector<8x8xi32>
    %179 = vector.extract_strided_slice %170 {offsets = [0, 0], sizes = [8, 128], strides = [1, 1]} : vector<16x256xbf16> to vector<8x128xbf16>
    %180 = vector.extract_strided_slice %171 {offsets = [0, 0], sizes = [8, 128], strides = [1, 1]} : vector<16x256xbf16> to vector<8x128xbf16>
    %cst_82 = arith.constant dense<0.000000e+00> : vector<8x8xf32>
    %181 = tpu.matmul %179, %180, %cst_82 {dimension_numbers = #tpu.dot_dimension_numbers<[1], [1], [0], [0], [0, 0, 1, 0], [], []>} : vector<8x128xbf16>, vector<8x128xbf16>, vector<8x8xf32> -> vector<8x8xf32>
    %cst_83 = arith.constant -1.000000e+09 : f32
    %182 = vector.broadcast %cst_83 : f32 to vector<8x8xf32>
    %183 = arith.select %178, %182, %181 : vector<8x8xi1>, vector<8x8xf32>
    %cst_84 = arith.constant dense<0xFF800000> : vector<8xf32>
    %184 = vector.multi_reduction <maximumf>, %183, %cst_84 [1] : vector<8x8xf32> to vector<8xf32>
    %185 = vector.shape_cast %184 : vector<8xf32> to vector<8x1xf32>
    %186 = vector.broadcast %185 : vector<8x1xf32> to vector<8x8xf32>
    %187 = arith.subf %183, %186 : vector<8x8xf32>
    %188 = math.exp %187 : vector<8x8xf32>
    %cst_85 = arith.constant dense<0.000000e+00> : vector<8xf32>
    %189 = vector.multi_reduction <add>, %188, %cst_85 [1] : vector<8x8xf32> to vector<8xf32>
    %190 = vector.shape_cast %189 : vector<8xf32> to vector<8x1xf32>
    %191 = tpu.reciprocal %190 {approx = true} : vector<8x1xf32> -> vector<8x1xf32>
    %192 = vector.broadcast %191 : vector<8x1xf32> to vector<8x8xf32>
    %193 = arith.mulf %188, %192 : vector<8x8xf32>
    %194 = arith.truncf %193 : vector<8x8xf32> to vector<8x8xbf16>
    %195 = vector.extract_strided_slice %172 {offsets = [0, 0], sizes = [8, 128], strides = [1, 1]} : vector<16x256xbf16> to vector<8x128xbf16>
    %cst_86 = arith.constant dense<0.000000e+00> : vector<8x128xf32>
    %196 = tpu.matmul %194, %195, %cst_86 {dimension_numbers = #tpu.dot_dimension_numbers<[1], [0], [0], [1], [0, 0, 1, 1], [], []>} : vector<8x8xbf16>, vector<8x128xbf16>, vector<8x128xf32> -> vector<8x128xf32>
    %c0_87 = arith.constant 0 : index
    %c0_88 = arith.constant 0 : index
    %197 = vector.load %arg26[%c0_87, %c0_88] : memref<16x256xf32, #tpu.memory_space<vmem>>, vector<8x128xf32>
    tpu.vector_store %arg26[%c0_87, %c0_88], %196 {strides = array<i32>} : memref<16x256xf32, #tpu.memory_space<vmem>>, vector<8x128xf32>,
    %198 = vector.extract_strided_slice %170 {offsets = [0, 128], sizes = [8, 128], strides = [1, 1]} : vector<16x256xbf16> to vector<8x128xbf16>
    %199 = vector.extract_strided_slice %171 {offsets = [0, 128], sizes = [8, 128], strides = [1, 1]} : vector<16x256xbf16> to vector<8x128xbf16>
    %cst_89 = arith.constant dense<0.000000e+00> : vector<8x8xf32>
    %200 = tpu.matmul %198, %199, %cst_89 {dimension_numbers = #tpu.dot_dimension_numbers<[1], [1], [0], [0], [0, 0, 1, 0], [], []>} : vector<8x128xbf16>, vector<8x128xbf16>, vector<8x8xf32> -> vector<8x8xf32>
    %cst_90 = arith.constant -1.000000e+09 : f32
    %201 = vector.broadcast %cst_90 : f32 to vector<8x8xf32>
    %202 = arith.select %178, %201, %200 : vector<8x8xi1>, vector<8x8xf32>
    %cst_91 = arith.constant dense<0xFF800000> : vector<8xf32>
    %203 = vector.multi_reduction <maximumf>, %202, %cst_91 [1] : vector<8x8xf32> to vector<8xf32>
    %204 = vector.shape_cast %203 : vector<8xf32> to vector<8x1xf32>
    %205 = vector.broadcast %204 : vector<8x1xf32> to vector<8x8xf32>
    %206 = arith.subf %202, %205 : vector<8x8xf32>
    %207 = math.exp %206 : vector<8x8xf32>
    %cst_92 = arith.constant dense<0.000000e+00> : vector<8xf32>
    %208 = vector.multi_reduction <add>, %207, %cst_92 [1] : vector<8x8xf32> to vector<8xf32>
    %209 = vector.shape_cast %208 : vector<8xf32> to vector<8x1xf32>
    %210 = tpu.reciprocal %209 {approx = true} : vector<8x1xf32> -> vector<8x1xf32>
    %211 = vector.broadcast %210 : vector<8x1xf32> to vector<8x8xf32>
    %212 = arith.mulf %207, %211 : vector<8x8xf32>
    %213 = arith.truncf %212 : vector<8x8xf32> to vector<8x8xbf16>
    %214 = vector.extract_strided_slice %172 {offsets = [0, 128], sizes = [8, 128], strides = [1, 1]} : vector<16x256xbf16> to vector<8x128xbf16>
    %cst_93 = arith.constant dense<0.000000e+00> : vector<8x128xf32>
    %215 = tpu.matmul %213, %214, %cst_93 {dimension_numbers = #tpu.dot_dimension_numbers<[1], [0], [0], [1], [0, 0, 1, 1], [], []>} : vector<8x8xbf16>, vector<8x128xbf16>, vector<8x128xf32> -> vector<8x128xf32>
    %c0_94 = arith.constant 0 : index
    %c128_95 = arith.constant 128 : index
    %216 = vector.load %arg26[%c0_94, %c128_95] : memref<16x256xf32, #tpu.memory_space<vmem>>, vector<8x128xf32>
    tpu.vector_store %arg26[%c0_94, %c128_95], %215 {strides = array<i32>} : memref<16x256xf32, #tpu.memory_space<vmem>>, vector<8x128xf32>,
    %c1_96 = arith.constant 1 : index
    %c0_97 = arith.constant 0 : index
    %c0_98 = arith.constant 0 : index
    %217 = vector.load %arg4[%c1_96, %c0_97, %c0_98] : memref<2x1x8xi32, #tpu.memory_space<vmem>>, vector<1x1x8xi32>
    %218 = vector.shape_cast %217 : vector<1x1x8xi32> to vector<1x8xi32>
    %219 = vector.shape_cast %218 : vector<1x8xi32> to vector<1x8xi32>
    %220 = vector.broadcast %219 : vector<1x8xi32> to vector<8x8xi32>
    %c0_i32_99 = arith.constant 0 : i32
    %221 = vector.broadcast %c0_i32_99 : i32 to vector<8x8xi32>
    %222 = arith.cmpi eq, %220, %221 : vector<8x8xi32>
    %223 = vector.extract_strided_slice %170 {offsets = [8, 0], sizes = [8, 128], strides = [1, 1]} : vector<16x256xbf16> to vector<8x128xbf16>
    %224 = vector.extract_strided_slice %171 {offsets = [8, 0], sizes = [8, 128], strides = [1, 1]} : vector<16x256xbf16> to vector<8x128xbf16>
    %cst_100 = arith.constant dense<0.000000e+00> : vector<8x8xf32>
    %225 = tpu.matmul %223, %224, %cst_100 {dimension_numbers = #tpu.dot_dimension_numbers<[1], [1], [0], [0], [0, 0, 1, 0], [], []>} : vector<8x128xbf16>, vector<8x128xbf16>, vector<8x8xf32> -> vector<8x8xf32>
    %cst_101 = arith.constant -1.000000e+09 : f32
    %226 = vector.broadcast %cst_101 : f32 to vector<8x8xf32>
    %227 = arith.select %222, %226, %225 : vector<8x8xi1>, vector<8x8xf32>
    %cst_102 = arith.constant dense<0xFF800000> : vector<8xf32>
    %228 = vector.multi_reduction <maximumf>, %227, %cst_102 [1] : vector<8x8xf32> to vector<8xf32>
    %229 = vector.shape_cast %228 : vector<8xf32> to vector<8x1xf32>
    %230 = vector.broadcast %229 : vector<8x1xf32> to vector<8x8xf32>
    %231 = arith.subf %227, %230 : vector<8x8xf32>
    %232 = math.exp %231 : vector<8x8xf32>
    %cst_103 = arith.constant dense<0.000000e+00> : vector<8xf32>
    %233 = vector.multi_reduction <add>, %232, %cst_103 [1] : vector<8x8xf32> to vector<8xf32>
    %234 = vector.shape_cast %233 : vector<8xf32> to vector<8x1xf32>
    %235 = tpu.reciprocal %234 {approx = true} : vector<8x1xf32> -> vector<8x1xf32>
    %236 = vector.broadcast %235 : vector<8x1xf32> to vector<8x8xf32>
    %237 = arith.mulf %232, %236 : vector<8x8xf32>
    %238 = arith.truncf %237 : vector<8x8xf32> to vector<8x8xbf16>
    %239 = vector.extract_strided_slice %172 {offsets = [8, 0], sizes = [8, 128], strides = [1, 1]} : vector<16x256xbf16> to vector<8x128xbf16>
    %cst_104 = arith.constant dense<0.000000e+00> : vector<8x128xf32>
    %240 = tpu.matmul %238, %239, %cst_104 {dimension_numbers = #tpu.dot_dimension_numbers<[1], [0], [0], [1], [0, 0, 1, 1], [], []>} : vector<8x8xbf16>, vector<8x128xbf16>, vector<8x128xf32> -> vector<8x128xf32>
    %c8_105 = arith.constant 8 : index
    %c0_106 = arith.constant 0 : index
    %241 = vector.load %arg26[%c8_105, %c0_106] : memref<16x256xf32, #tpu.memory_space<vmem>>, vector<8x128xf32>
    tpu.vector_store %arg26[%c8_105, %c0_106], %240 {strides = array<i32>} : memref<16x256xf32, #tpu.memory_space<vmem>>, vector<8x128xf32>,
    %242 = vector.extract_strided_slice %170 {offsets = [8, 128], sizes = [8, 128], strides = [1, 1]} : vector<16x256xbf16> to vector<8x128xbf16>
    %243 = vector.extract_strided_slice %171 {offsets = [8, 128], sizes = [8, 128], strides = [1, 1]} : vector<16x256xbf16> to vector<8x128xbf16>
    %cst_107 = arith.constant dense<0.000000e+00> : vector<8x8xf32>
    %244 = tpu.matmul %242, %243, %cst_107 {dimension_numbers = #tpu.dot_dimension_numbers<[1], [1], [0], [0], [0, 0, 1, 0], [], []>} : vector<8x128xbf16>, vector<8x128xbf16>, vector<8x8xf32> -> vector<8x8xf32>
    %cst_108 = arith.constant -1.000000e+09 : f32
    %245 = vector.broadcast %cst_108 : f32 to vector<8x8xf32>
    %246 = arith.select %222, %245, %244 : vector<8x8xi1>, vector<8x8xf32>
    %cst_109 = arith.constant dense<0xFF800000> : vector<8xf32>
    %247 = vector.multi_reduction <maximumf>, %246, %cst_109 [1] : vector<8x8xf32> to vector<8xf32>
    %248 = vector.shape_cast %247 : vector<8xf32> to vector<8x1xf32>
    %249 = vector.broadcast %248 : vector<8x1xf32> to vector<8x8xf32>
    %250 = arith.subf %246, %249 : vector<8x8xf32>
    %251 = math.exp %250 : vector<8x8xf32>
    %cst_110 = arith.constant dense<0.000000e+00> : vector<8xf32>
    %252 = vector.multi_reduction <add>, %251, %cst_110 [1] : vector<8x8xf32> to vector<8xf32>
    %253 = vector.shape_cast %252 : vector<8xf32> to vector<8x1xf32>
    %254 = tpu.reciprocal %253 {approx = true} : vector<8x1xf32> -> vector<8x1xf32>
    %255 = vector.broadcast %254 : vector<8x1xf32> to vector<8x8xf32>
    %256 = arith.mulf %251, %255 : vector<8x8xf32>
    %257 = arith.truncf %256 : vector<8x8xf32> to vector<8x8xbf16>
    %258 = vector.extract_strided_slice %172 {offsets = [8, 128], sizes = [8, 128], strides = [1, 1]} : vector<16x256xbf16> to vector<8x128xbf16>
    %cst_111 = arith.constant dense<0.000000e+00> : vector<8x128xf32>
    %259 = tpu.matmul %257, %258, %cst_111 {dimension_numbers = #tpu.dot_dimension_numbers<[1], [0], [0], [1], [0, 0, 1, 1], [], []>} : vector<8x8xbf16>, vector<8x128xbf16>, vector<8x128xf32> -> vector<8x128xf32>
    %c8_112 = arith.constant 8 : index
    %c128_113 = arith.constant 128 : index
    %260 = vector.load %arg26[%c8_112, %c128_113] : memref<16x256xf32, #tpu.memory_space<vmem>>, vector<8x128xf32>
    tpu.vector_store %arg26[%c8_112, %c128_113], %259 {strides = array<i32>} : memref<16x256xf32, #tpu.memory_space<vmem>>, vector<8x128xf32>,
    %c0_114 = arith.constant 0 : index
    %c0_115 = arith.constant 0 : index
    %261 = vector.load %arg26[%c0_114, %c0_115] : memref<16x256xf32, #tpu.memory_space<vmem>>, vector<16x256xf32>
    %262 = arith.truncf %261 : vector<16x256xf32> to vector<16x256xbf16>
    %c0_116 = arith.constant 0 : index
    %c0_117 = arith.constant 0 : index
    %263 = vector.load %arg17[%c0_116, %c0_117] : memref<256x256xbf16, #tpu.memory_space<vmem>>, vector<256x256xbf16>
    %cst_118 = arith.constant dense<0.000000e+00> : vector<16x256xf32>
    %264 = tpu.matmul %262, %263, %cst_118 {dimension_numbers = #tpu.dot_dimension_numbers<[1], [0], [0], [1], [0, 0, 1, 1], [], []>} : vector<16x256xbf16>, vector<256x256xbf16>, vector<16x256xf32> -> vector<16x256xf32>
    %c0_119 = arith.constant 0 : index
    %c0_120 = arith.constant 0 : index
    %265 = vector.load %arg18[%c0_119, %c0_120] : memref<1x256xf32, #tpu.memory_space<vmem>>, vector<1x256xf32>
    %266 = vector.broadcast %265 : vector<1x256xf32> to vector<16x256xf32>
    %267 = arith.addf %264, %266 : vector<16x256xf32>
    %268 = arith.addf %131, %267 : vector<16x256xf32>
    %c0_121 = arith.constant 0 : index
    %c0_122 = arith.constant 0 : index
    %269 = vector.load %arg19[%c0_121, %c0_122] : memref<1x256xf32, #tpu.memory_space<vmem>>, vector<1x256xf32>
    %c0_123 = arith.constant 0 : index
    %c0_124 = arith.constant 0 : index
    %270 = vector.load %arg20[%c0_123, %c0_124] : memref<1x256xf32, #tpu.memory_space<vmem>>, vector<1x256xf32>
    %cst_125 = arith.constant dense<0.000000e+00> : vector<16xf32>
    %271 = vector.multi_reduction <add>, %268, %cst_125 [1] : vector<16x256xf32> to vector<16xf32>
    %272 = vector.shape_cast %271 : vector<16xf32> to vector<16x1xf32>
    %cst_126 = arith.constant 2.560000e+02 : f32
    %273 = vector.broadcast %cst_126 : f32 to vector<16x1xf32>
    %274 = arith.divf %272, %273 : vector<16x1xf32>
    %275 = vector.broadcast %274 : vector<16x1xf32> to vector<16x256xf32>
    %276 = arith.subf %268, %275 : vector<16x256xf32>
    %277 = arith.mulf %276, %276 : vector<16x256xf32>
    %cst_127 = arith.constant dense<0.000000e+00> : vector<16xf32>
    %278 = vector.multi_reduction <add>, %277, %cst_127 [1] : vector<16x256xf32> to vector<16xf32>
    %279 = vector.shape_cast %278 : vector<16xf32> to vector<16x1xf32>
    %cst_128 = arith.constant 2.550000e+02 : f32
    %280 = vector.broadcast %cst_128 : f32 to vector<16x1xf32>
    %281 = arith.divf %279, %280 : vector<16x1xf32>
    %282 = vector.broadcast %269 : vector<1x256xf32> to vector<16x256xf32>
    %283 = arith.mulf %282, %276 : vector<16x256xf32>
    %284 = math.sqrt %281 : vector<16x1xf32>
    %cst_129 = arith.constant 9.99999997E-7 : f32
    %285 = vector.broadcast %cst_129 : f32 to vector<16x1xf32>
    %286 = arith.addf %284, %285 : vector<16x1xf32>
    %287 = vector.broadcast %286 : vector<16x1xf32> to vector<16x256xf32>
    %288 = arith.divf %283, %287 : vector<16x256xf32>
    %289 = vector.broadcast %270 : vector<1x256xf32> to vector<16x256xf32>
    %290 = arith.addf %288, %289 : vector<16x256xf32>
    %291 = arith.truncf %290 : vector<16x256xf32> to vector<16x256xbf16>
    %c0_130 = arith.constant 0 : index
    %c0_131 = arith.constant 0 : index
    %292 = vector.load %arg21[%c0_130, %c0_131] : memref<256x512xbf16, #tpu.memory_space<vmem>>, vector<256x512xbf16>
    %cst_132 = arith.constant dense<0.000000e+00> : vector<16x512xf32>
    %293 = tpu.matmul %291, %292, %cst_132 {dimension_numbers = #tpu.dot_dimension_numbers<[1], [0], [0], [1], [0, 0, 1, 1], [], []>} : vector<16x256xbf16>, vector<256x512xbf16>, vector<16x512xf32> -> vector<16x512xf32>
    %c0_133 = arith.constant 0 : index
    %c0_134 = arith.constant 0 : index
    %294 = vector.load %arg22[%c0_133, %c0_134] : memref<1x512xf32, #tpu.memory_space<vmem>>, vector<1x512xf32>
    %295 = vector.broadcast %294 : vector<1x512xf32> to vector<16x512xf32>
    %296 = arith.addf %293, %295 : vector<16x512xf32>
    %cst_135 = arith.constant 0.000000e+00 : f32
    %297 = vector.broadcast %cst_135 : f32 to vector<16x512xf32>
    %298 = arith.maximumf %296, %297 : vector<16x512xf32>
    %299 = arith.truncf %298 : vector<16x512xf32> to vector<16x512xbf16>
    %c0_136 = arith.constant 0 : index
    %c0_137 = arith.constant 0 : index
    %300 = vector.load %arg23[%c0_136, %c0_137] : memref<512x256xbf16, #tpu.memory_space<vmem>>, vector<512x256xbf16>
    %cst_138 = arith.constant dense<0.000000e+00> : vector<16x256xf32>
    %301 = tpu.matmul %299, %300, %cst_138 {dimension_numbers = #tpu.dot_dimension_numbers<[1], [0], [0], [1], [0, 0, 1, 1], [], []>} : vector<16x512xbf16>, vector<512x256xbf16>, vector<16x256xf32> -> vector<16x256xf32>
    %c0_139 = arith.constant 0 : index
    %c0_140 = arith.constant 0 : index
    %302 = vector.load %arg24[%c0_139, %c0_140] : memref<1x256xf32, #tpu.memory_space<vmem>>, vector<1x256xf32>
    %303 = vector.broadcast %302 : vector<1x256xf32> to vector<16x256xf32>
    %304 = arith.addf %301, %303 : vector<16x256xf32>
    %305 = arith.addf %268, %304 : vector<16x256xf32>
    %306 = vector.shape_cast %305 : vector<16x256xf32> to vector<2x8x256xf32>
    %c0_141 = arith.constant 0 : index
    %c0_142 = arith.constant 0 : index
    %c0_143 = arith.constant 0 : index
    %307 = vector.load %arg25[%c0_141, %c0_142, %c0_143] : memref<2x8x256xf32, #tpu.memory_space<vmem>>, vector<2x8x256xf32>
    tpu.vector_store %arg25[%c0_141, %c0_142, %c0_143], %306 {strides = array<i32>} : memref<2x8x256xf32, #tpu.memory_space<vmem>>, vector<2x8x256xf32>,
    return
  }
  func.func @transform_0(%arg0: i32) -> (i32, i32, i32) {
    %c0_i32 = arith.constant 0 : i32
    %c0_i32_0 = arith.constant 0 : i32
    %c0_i32_1 = arith.constant 0 : i32
    return %arg0, %c0_i32, %c0_i32_0 : i32, i32, i32
  }
  func.func @transform_1(%arg0: i32) -> (i32, i32, i32) {
    %c0_i32 = arith.constant 0 : i32
    %c0_i32_0 = arith.constant 0 : i32
    %c0_i32_1 = arith.constant 0 : i32
    return %arg0, %c0_i32, %c0_i32_0 : i32, i32, i32
  }
  func.func @transform_2(%arg0: i32) -> (i32, i32, i32) {
    %c0_i32 = arith.constant 0 : i32
    %c0_i32_0 = arith.constant 0 : i32
    %c0_i32_1 = arith.constant 0 : i32
    return %arg0, %c0_i32, %c0_i32_0 : i32, i32, i32
  }
  func.func @transform_3(%arg0: i32) -> (i32, i32, i32) {
    %c0_i32 = arith.constant 0 : i32
    %c0_i32_0 = arith.constant 0 : i32
    %c0_i32_1 = arith.constant 0 : i32
    return %arg0, %c0_i32, %c0_i32_0 : i32, i32, i32
  }
  func.func @transform_4(%arg0: i32) -> (i32, i32) {
    %c0_i32 = arith.constant 0 : i32
    %c0_i32_0 = arith.constant 0 : i32
    %c0_i32_1 = arith.constant 0 : i32
    return %c0_i32, %c0_i32_0 : i32, i32
  }
  func.func @transform_5(%arg0: i32) -> (i32, i32) {
    %c0_i32 = arith.constant 0 : i32
    %c0_i32_0 = arith.constant 0 : i32
    %c0_i32_1 = arith.constant 0 : i32
    return %c0_i32, %c0_i32_0 : i32, i32
  }
  func.func @transform_6(%arg0: i32) -> (i32, i32) {
    %c0_i32 = arith.constant 0 : i32
    %c0_i32_0 = arith.constant 0 : i32
    %c0_i32_1 = arith.constant 0 : i32
    return %c0_i32, %c0_i32_0 : i32, i32
  }
  func.func @transform_7(%arg0: i32) -> (i32, i32) {
    %c0_i32 = arith.constant 0 : i32
    %c0_i32_0 = arith.constant 0 : i32
    %c0_i32_1 = arith.constant 0 : i32
    return %c0_i32, %c0_i32_0 : i32, i32
  }
  func.func @transform_8(%arg0: i32) -> (i32, i32) {
    %c0_i32 = arith.constant 0 : i32
    %c0_i32_0 = arith.constant 0 : i32
    %c0_i32_1 = arith.constant 0 : i32
    return %c0_i32, %c0_i32_0 : i32, i32
  }
  func.func @transform_9(%arg0: i32) -> (i32, i32) {
    %c0_i32 = arith.constant 0 : i32
    %c0_i32_0 = arith.constant 0 : i32
    %c0_i32_1 = arith.constant 0 : i32
    return %c0_i32, %c0_i32_0 : i32, i32
  }
  func.func @transform_10(%arg0: i32) -> (i32, i32) {
    %c0_i32 = arith.constant 0 : i32
    %c0_i32_0 = arith.constant 0 : i32
    %c0_i32_1 = arith.constant 0 : i32
    return %c0_i32, %c0_i32_0 : i32, i32
  }
  func.func @transform_11(%arg0: i32) -> (i32, i32) {
    %c0_i32 = arith.constant 0 : i32
    %c0_i32_0 = arith.constant 0 : i32
    %c0_i32_1 = arith.constant 0 : i32
    return %c0_i32, %c0_i32_0 : i32, i32
  }
  func.func @transform_12(%arg0: i32) -> (i32, i32) {
    %c0_i32 = arith.constant 0 : i32
    %c0_i32_0 = arith.constant 0 : i32
    %c0_i32_1 = arith.constant 0 : i32
    return %c0_i32, %c0_i32_0 : i32, i32
  }
  func.func @transform_13(%arg0: i32) -> (i32, i32) {
    %c0_i32 = arith.constant 0 : i32
    %c0_i32_0 = arith.constant 0 : i32
    %c0_i32_1 = arith.constant 0 : i32
    return %c0_i32, %c0_i32_0 : i32, i32
  }
  func.func @transform_14(%arg0: i32) -> (i32, i32) {
    %c0_i32 = arith.constant 0 : i32
    %c0_i32_0 = arith.constant 0 : i32
    %c0_i32_1 = arith.constant 0 : i32
    return %c0_i32, %c0_i32_0 : i32, i32
  }
  func.func @transform_15(%arg0: i32) -> (i32, i32) {
    %c0_i32 = arith.constant 0 : i32
    %c0_i32_0 = arith.constant 0 : i32
    %c0_i32_1 = arith.constant 0 : i32
    return %c0_i32, %c0_i32_0 : i32, i32
  }
  func.func @transform_16(%arg0: i32) -> (i32, i32) {
    %c0_i32 = arith.constant 0 : i32
    %c0_i32_0 = arith.constant 0 : i32
    %c0_i32_1 = arith.constant 0 : i32
    return %c0_i32, %c0_i32_0 : i32, i32
  }
  func.func @transform_17(%arg0: i32) -> (i32, i32) {
    %c0_i32 = arith.constant 0 : i32
    %c0_i32_0 = arith.constant 0 : i32
    %c0_i32_1 = arith.constant 0 : i32
    return %c0_i32, %c0_i32_0 : i32, i32
  }
  func.func @transform_18(%arg0: i32) -> (i32, i32) {
    %c0_i32 = arith.constant 0 : i32
    %c0_i32_0 = arith.constant 0 : i32
    %c0_i32_1 = arith.constant 0 : i32
    return %c0_i32, %c0_i32_0 : i32, i32
  }
  func.func @transform_19(%arg0: i32) -> (i32, i32) {
    %c0_i32 = arith.constant 0 : i32
    %c0_i32_0 = arith.constant 0 : i32
    %c0_i32_1 = arith.constant 0 : i32
    return %c0_i32, %c0_i32_0 : i32, i32
  }
  func.func @transform_20(%arg0: i32) -> (i32, i32) {
    %c0_i32 = arith.constant 0 : i32
    %c0_i32_0 = arith.constant 0 : i32
    %c0_i32_1 = arith.constant 0 : i32
    return %c0_i32, %c0_i32_0 : i32, i32
  }
  func.func @transform_21(%arg0: i32) -> (i32, i32) {
    %c0_i32 = arith.constant 0 : i32
    %c0_i32_0 = arith.constant 0 : i32
    %c0_i32_1 = arith.constant 0 : i32
    return %c0_i32, %c0_i32_0 : i32, i32
  }
  func.func @transform_22(%arg0: i32) -> (i32, i32) {
    %c0_i32 = arith.constant 0 : i32
    %c0_i32_0 = arith.constant 0 : i32
    %c0_i32_1 = arith.constant 0 : i32
    return %c0_i32, %c0_i32_0 : i32, i32
  }
  func.func @transform_23(%arg0: i32) -> (i32, i32) {
    %c0_i32 = arith.constant 0 : i32
    %c0_i32_0 = arith.constant 0 : i32
    %c0_i32_1 = arith.constant 0 : i32
    return %c0_i32, %c0_i32_0 : i32, i32
  }
  func.func @transform_24(%arg0: i32) -> (i32, i32, i32) {
    %c0_i32 = arith.constant 0 : i32
    %c0_i32_0 = arith.constant 0 : i32
    %c0_i32_1 = arith.constant 0 : i32
    return %arg0, %c0_i32, %c0_i32_0 : i32, i32, i32
  }
}

</mosaic_0001>

<llo_original>
// kernel: decoder_layer_forward.1
$region0: #{decoder_layer_forward.1}
  #allocation0 [shape = 'u32[]', space=smem, size = 0x4, offset = 0x4, fixed_abs, tag = 'smem constant byte address 0x4 - core index']
  #allocation1 [shape = 'u32[144,128]{1,0:T(1,128)}', space=vmem, size = 0x12000, scoped, tag = 'internal scratch']
  #allocation2 [shape = 'f32[16,256]{1,0:T(8,128)}', space=vmem, size = 0x4000, scoped, tag = 'scratch operand']
  %s0 = inlined_call_operand.hbm [shape: f32[4,8,256], index: 0, kind: input, shape index: {}]
  %s1 = inlined_call_operand.hbm [shape: f32[4,8,256], index: 1, kind: input, shape index: {}]
  %s2 = inlined_call_operand.vmem [shape: s32[4,8,8], index: 2, kind: input, shape index: {}]
  %s3 = inlined_call_operand.vmem [shape: s32[4,1,8], index: 3, kind: input, shape index: {}]
  %s4 = inlined_call_operand.hbm [shape: f32[1,256], index: 4, kind: input, shape index: {}]
  %s5 = inlined_call_operand.hbm [shape: f32[1,256], index: 5, kind: input, shape index: {}]
  %s6 = inlined_call_operand.hbm [shape: bf16[256,768], index: 6, kind: input, shape index: {}]
  %s7 = inlined_call_operand.vmem [shape: f32[1,768], index: 7, kind: input, shape index: {}]
  %s8 = inlined_call_operand.hbm [shape: bf16[256,256], index: 8, kind: input, shape index: {}]
  %s9 = inlined_call_operand.hbm [shape: f32[1,256], index: 9, kind: input, shape index: {}]
  %s10 = inlined_call_operand.hbm [shape: f32[1,256], index: 10, kind: input, shape index: {}]
  %s11 = inlined_call_operand.hbm [shape: f32[1,256], index: 11, kind: input, shape index: {}]
  %s12 = inlined_call_operand.hbm [shape: bf16[256,256], index: 12, kind: input, shape index: {}]
  %s13 = inlined_call_operand.hbm [shape: f32[1,256], index: 13, kind: input, shape index: {}]
  %s14 = inlined_call_operand.hbm [shape: bf16[256,512], index: 14, kind: input, shape index: {}]
  %s15 = inlined_call_operand.hbm [shape: f32[1,512], index: 15, kind: input, shape index: {}]
  %s16 = inlined_call_operand.hbm [shape: bf16[256,256], index: 16, kind: input, shape index: {}]
  %s17 = inlined_call_operand.hbm [shape: f32[1,256], index: 17, kind: input, shape index: {}]
  %s18 = inlined_call_operand.hbm [shape: f32[1,256], index: 18, kind: input, shape index: {}]
  %s19 = inlined_call_operand.hbm [shape: f32[1,256], index: 19, kind: input, shape index: {}]
  %s20 = inlined_call_operand.hbm [shape: bf16[256,512], index: 20, kind: input, shape index: {}]
  %s21 = inlined_call_operand.hbm [shape: f32[1,512], index: 21, kind: input, shape index: {}]
  %s22 = inlined_call_operand.hbm [shape: bf16[512,256], index: 22, kind: input, shape index: {}]
  %s23 = inlined_call_operand.hbm [shape: f32[1,256], index: 23, kind: input, shape index: {}]
  %s24 = inlined_call_operand.hbm [shape: f32[4,8,256], index: 24, kind: output, shape index: {}]
  %s25 = sld [smem:[#allocation0]]
  $region213: #{decoder_layer_forward.1} parent=0
    _
  %s27 = ssub.s32 1, %s25
  %s28 = scalar_select 0, %s27, %s25
  $region1: #{decoder_layer_forward.1} parent=0
    #allocation3 [shape = 'u8[32768]{0}', space=vmem, size = 0x8000, scoped, tag = 'input window, operand 0']
    #allocation4 [shape = 's32[2]{0}', space=sflag, size = 0x8, scoped, tag = 'scoped memory for decoder_layer_forward.1']
    #allocation5 [shape = 's32[2]{0}', space=sflag, size = 0x8, scoped, tag = 'scoped memory for decoder_layer_forward.1']
    #allocation6 [shape = 'u8[32768]{0}', space=vmem, size = 0x8000, scoped, tag = 'input window, operand 1']
    #allocation7 [shape = 's32[2]{0}', space=sflag, size = 0x8, scoped, tag = 'scoped memory for decoder_layer_forward.1']
    #allocation8 [shape = 'u8[1024]{0}', space=vmem, size = 0x400, scoped, tag = 'input window, operand 4, single buffered']
    #allocation9 [shape = 'u8[1024]{0}', space=vmem, size = 0x400, scoped, tag = 'input window, operand 5, single buffered']
    #allocation10 [shape = 's32[1]{0}', space=sflag, size = 0x4, scoped, tag = 'scoped memory for decoder_layer_forward.1']
    #allocation11 [shape = 'u8[393216]{0}', space=vmem, size = 0x60000, scoped, tag = 'input window, operand 6, single buffered']
    #allocation12 [shape = 'u8[131072]{0}', space=vmem, size = 0x20000, scoped, tag = 'input window, operand 8, single buffered']
    #allocation13 [shape = 's32[1]{0}', space=sflag, size = 0x4, scoped, tag = 'scoped memory for decoder_layer_forward.1']
    #allocation14 [shape = 'u8[1024]{0}', space=vmem, size = 0x400, scoped, tag = 'input window, operand 9, single buffered']
    #allocation15 [shape = 'u8[1024]{0}', space=vmem, size = 0x400, scoped, tag = 'input window, operand 10, single buffered']
    #allocation16 [shape = 's32[1]{0}', space=sflag, size = 0x4, scoped, tag = 'scoped memory for decoder_layer_forward.1']
    #allocation17 [shape = 'u8[1024]{0}', space=vmem, size = 0x400, scoped, tag = 'input window, operand 11, single buffered']
    #allocation18 [shape = 'u8[131072]{0}', space=vmem, size = 0x20000, scoped, tag = 'input window, operand 12, single buffered']
    #allocation19 [shape = 's32[1]{0}', space=sflag, size = 0x4, scoped, tag = 'scoped memory for decoder_layer_forward.1']
    #allocation20 [shape = 'u8[1024]{0}', space=vmem, size = 0x400, scoped, tag = 'input window, operand 13, single buffered']
    #allocation21 [shape = 'u8[262144]{0}', space=vmem, size = 0x40000, scoped, tag = 'input window, operand 14, single buffered']
    #allocation22 [shape = 's32[1]{0}', space=sflag, size = 0x4, scoped, tag = 'scoped memory for decoder_layer_forward.1']
    #allocation23 [shape = 'u8[2048]{0}', space=vmem, size = 0x800, scoped, tag = 'input window, operand 15, single buffered']
    #allocation24 [shape = 'u8[131072]{0}', space=vmem, size = 0x20000, scoped, tag = 'input window, operand 16, single buffered']
    #allocation25 [shape = 's32[1]{0}', space=sflag, size = 0x4, scoped, tag = 'scoped memory for decoder_layer_forward.1']
    #allocation26 [shape = 'u8[1024]{0}', space=vmem, size = 0x400, scoped, tag = 'input window, operand 17, single buffered']
    #allocation27 [shape = 'u8[1024]{0}', space=vmem, size = 0x400, scoped, tag = 'input window, operand 18, single buffered']
    #allocation28 [shape = 's32[1]{0}', space=sflag, size = 0x4, scoped, tag = 'scoped memory for decoder_layer_forward.1']
    #allocation29 [shape = 'u8[1024]{0}', space=vmem, size = 0x400, scoped, tag = 'input window, operand 19, single buffered']
    #allocation30 [shape = 'u8[262144]{0}', space=vmem, size = 0x40000, scoped, tag = 'input window, operand 20, single buffered']
    #allocation31 [shape = 's32[1]{0}', space=sflag, size = 0x4, scoped, tag = 'scoped memory for decoder_layer_forward.1']
    #allocation32 [shape = 'u8[2048]{0}', space=vmem, size = 0x800, scoped, tag = 'input window, operand 21, single buffered']
    #allocation33 [shape = 'u8[262144]{0}', space=vmem, size = 0x40000, scoped, tag = 'input window, operand 22, single buffered']
    #allocation34 [shape = 's32[1]{0}', space=sflag, size = 0x4, scoped, tag = 'scoped memory for decoder_layer_forward.1']
    #allocation35 [shape = 'u8[1024]{0}', space=vmem, size = 0x400, scoped, tag = 'input window, operand 23, single buffered']
    #allocation36 [shape = 'u8[32768]{0}', space=vmem, size = 0x8000, scoped, tag = 'output window, operand 0']
    %29 = vsyncpa [#allocation4], 0
    %s30 = scalar_lea.sflag [#allocation4], 1
    %31 = vsyncpa %s30, 0
    %32 = vsyncpa [#allocation7], 0
    %s33 = scalar_lea.sflag [#allocation7], 1
    %34 = vsyncpa %s33, 0
    %35 = vsyncpa [#allocation10], 0
    %36 = vsyncpa [#allocation13], 0
    %37 = vsyncpa [#allocation16], 0
    %38 = vsyncpa [#allocation19], 0
    %39 = vsyncpa [#allocation22], 0
    %40 = vsyncpa [#allocation25], 0
    %41 = vsyncpa [#allocation28], 0
    %42 = vsyncpa [#allocation31], 0
    %43 = vsyncpa [#allocation34], 0
    %44 = vsyncpa [#allocation5], 0
    %s45 = scalar_lea.sflag [#allocation5], 1
    %46 = vsyncpa %s45, 0
    loop: start=0, step=1, limit=4
    $region2: #{decoder_layer_forward.1} parent=1 // loop_pre_header
      _
    $region3: #{decoder_layer_forward.1} parent=1 // loop_header
      %s48 = sphi 0, %s52
      %p49 = scmp.ge.s32.totalorder %s48, 4
      %s58 = sphi 0, %s60
      %s61 = sphi 0, %s58
      %s62 = sphi 0, %s61
      %s78 = sphi 0, %s62
      %s84 = sphi 0, %s86
      %s87 = sphi 0, %s84
      %s88 = sphi 0, %s87
      %s104 = sphi 0, %s88
      %s110 = sphi 0, %s112
      %s113 = sphi 0, %s110
      %s114 = sphi 0, %s113
      %s130 = sphi 0, %s114
      %s136 = sphi 0, %s138
      %s139 = sphi 0, %s136
      %s140 = sphi 0, %s139
      %s156 = sphi 0, %s140
      %s160 = sphi 0, %s160
      %s162 = sphi 0, %s160
      %s163 = sphi 0, %s162
      %s177 = sphi 0, %s163
      %s181 = sphi 0, %s181
      %s183 = sphi 0, %s181
      %s184 = sphi 0, %s183
      %s198 = sphi 0, %s184
      %s202 = sphi 0, %s202
      %s204 = sphi 0, %s202
      %s205 = sphi 0, %s204
      %s219 = sphi 0, %s205
      %s223 = sphi 0, %s223
      %s225 = sphi 0, %s223
      %s226 = sphi 0, %s225
      %s240 = sphi 0, %s226
      %s244 = sphi 0, %s244
      %s246 = sphi 0, %s244
      %s247 = sphi 0, %s246
      %s261 = sphi 0, %s247
      %s265 = sphi 0, %s265
      %s267 = sphi 0, %s265
      %s268 = sphi 0, %s267
      %s282 = sphi 0, %s268
      %s286 = sphi 0, %s286
      %s288 = sphi 0, %s286
      %s289 = sphi 0, %s288
      %s303 = sphi 0, %s289
      %s307 = sphi 0, %s307
      %s309 = sphi 0, %s307
      %s310 = sphi 0, %s309
      %s324 = sphi 0, %s310
      %s328 = sphi 0, %s328
      %s330 = sphi 0, %s328
      %s331 = sphi 0, %s330
      %s345 = sphi 0, %s331
      %s349 = sphi 0, %s349
      %s351 = sphi 0, %s349
      %s352 = sphi 0, %s351
      %s366 = sphi 0, %s352
      %s370 = sphi 0, %s370
      %s372 = sphi 0, %s370
      %s373 = sphi 0, %s372
      %s387 = sphi 0, %s373
      %s391 = sphi 0, %s391
      %s393 = sphi 0, %s391
      %s394 = sphi 0, %s393
      %s408 = sphi 0, %s394
      %s412 = sphi 0, %s412
      %s414 = sphi 0, %s412
      %s415 = sphi 0, %s414
      %s429 = sphi 0, %s415
      %s433 = sphi 0, %s433
      %s435 = sphi 0, %s433
      %s436 = sphi 0, %s435
      %s450 = sphi 0, %s436
      %s454 = sphi 0, %s454
      %s456 = sphi 0, %s454
      %s457 = sphi 0, %s456
      %s471 = sphi 0, %s457
      %s475 = sphi 0, %s475
      %s477 = sphi 0, %s475
      %s478 = sphi 0, %s477
      %s492 = sphi 0, %s478
      %s496 = sphi 0, %s496
      %s498 = sphi 0, %s496
      %s499 = sphi 0, %s498
      %s513 = sphi 0, %s499
      %s517 = sphi 0, %s517
      %s519 = sphi 0, %s517
      %s520 = sphi 0, %s519
      %s534 = sphi 0, %s520
      %s538 = sphi 0, %s538
      %s540 = sphi 0, %s538
      %s541 = sphi 0, %s540
      %s555 = sphi 0, %s541
      %s559 = sphi 0, %s559
      %s561 = sphi 0, %s559
      %s562 = sphi 0, %s561
      %s576 = sphi 0, %s562
      %s582 = sphi 0, %s584
      %s585 = sphi 0, %s582
      %s586 = sphi 0, %s585
      %s602 = sphi 0, %s586
    $region4: #{decoder_layer_forward.1} parent=1 // loop_header_branch
      %51 = sbr.rel (%p49) target = $region8
    $region5: #{decoder_layer_forward.1} parent=1 // loop_body
      %s53 = ssub.s32 %s48, 1
      %s54 = ssub.s32 %s48, 2
      %s55 = sadd.s32 %s48, 1
      %s56 = ssub.s32 %s48, %s55
      %p57 = scmp.eq.s32.totalorder %s56, 0
      %s59 = sadd.s32 %s58, 1
      %s60 = scalar_select %p57, %s58, %s59
      %p63 = pneg %p57
      %p64 = scmp.eq.s32.totalorder %s48, 1
      %p65 = por %p63, %p64
      %p66 = scmp.ne.s32.totalorder %s58, %s61
      %p67 = scmp.eq.s32.totalorder %s48, 0
      %p68 = por %p66, %p67
      %p69 = scmp.ne.s32.totalorder %s58, %s61
      %p70 = scmp.eq.s32.totalorder %s53, 1
      %p71 = por %p69, %p70
      %p72 = scmp.ne.s32.totalorder %s61, %s62
      %p73 = scmp.eq.s32.totalorder %s53, 0
      %p74 = por %p72, %p73
      %p75 = scmp.ne.s32.totalorder %s61, %s62
      %p76 = scmp.eq.s32.totalorder %s54, 1
      %p77 = por %p75, %p76
      %p79 = scmp.ne.s32.totalorder %s62, %s78
      %p80 = scmp.eq.s32.totalorder %s54, 0
      %p81 = por %p79, %p80
      %s82 = ssub.s32 %s48, %s55
      %p83 = scmp.eq.s32.totalorder %s82, 0
      %s85 = sadd.s32 %s84, 1
      %s86 = scalar_select %p83, %s84, %s85
      %p89 = pneg %p83
      %p90 = scmp.eq.s32.totalorder %s48, 1
      %p91 = por %p89, %p90
      %p92 = scmp.ne.s32.totalorder %s84, %s87
      %p93 = scmp.eq.s32.totalorder %s48, 0
      %p94 = por %p92, %p93
      %p95 = scmp.ne.s32.totalorder %s84, %s87
      %p96 = scmp.eq.s32.totalorder %s53, 1
      %p97 = por %p95, %p96
      %p98 = scmp.ne.s32.totalorder %s87, %s88
      %p99 = scmp.eq.s32.totalorder %s53, 0
      %p100 = por %p98, %p99
      %p101 = scmp.ne.s32.totalorder %s87, %s88
      %p102 = scmp.eq.s32.totalorder %s54, 1
      %p103 = por %p101, %p102
      %p105 = scmp.ne.s32.totalorder %s88, %s104
      %p106 = scmp.eq.s32.totalorder %s54, 0
      %p107 = por %p105, %p106
      %s108 = ssub.s32 %s48, %s55
      %p109 = scmp.eq.s32.totalorder %s108, 0
      %s111 = sadd.s32 %s110, 1
      %s112 = scalar_select %p109, %s110, %s111
      %p115 = pneg %p109
      %p116 = scmp.eq.s32.totalorder %s48, 1
      %p117 = por %p115, %p116
      %p118 = scmp.ne.s32.totalorder %s110, %s113
      %p119 = scmp.eq.s32.totalorder %s48, 0
      %p120 = por %p118, %p119
      %p121 = scmp.ne.s32.totalorder %s110, %s113
      %p122 = scmp.eq.s32.totalorder %s53, 1
      %p123 = por %p121, %p122
      %p124 = scmp.ne.s32.totalorder %s113, %s114
      %p125 = scmp.eq.s32.totalorder %s53, 0
      %p126 = por %p124, %p125
      %p127 = scmp.ne.s32.totalorder %s113, %s114
      %p128 = scmp.eq.s32.totalorder %s54, 1
      %p129 = por %p127, %p128
      %p131 = scmp.ne.s32.totalorder %s114, %s130
      %p132 = scmp.eq.s32.totalorder %s54, 0
      %p133 = por %p131, %p132
      %s134 = ssub.s32 %s48, %s55
      %p135 = scmp.eq.s32.totalorder %s134, 0
      %s137 = sadd.s32 %s136, 1
      %s138 = scalar_select %p135, %s136, %s137
      %p141 = pneg %p135
      %p142 = scmp.eq.s32.totalorder %s48, 1
      %p143 = por %p141, %p142
      %p144 = scmp.ne.s32.totalorder %s136, %s139
      %p145 = scmp.eq.s32.totalorder %s48, 0
      %p146 = por %p144, %p145
      %p147 = scmp.ne.s32.totalorder %s136, %s139
      %p148 = scmp.eq.s32.totalorder %s53, 1
      %p149 = por %p147, %p148
      %p150 = scmp.ne.s32.totalorder %s139, %s140
      %p151 = scmp.eq.s32.totalorder %s53, 0
      %p152 = por %p150, %p151
      %p153 = scmp.ne.s32.totalorder %s139, %s140
      %p154 = scmp.eq.s32.totalorder %s54, 1
      %p155 = por %p153, %p154
      %p157 = scmp.ne.s32.totalorder %s140, %s156
      %p158 = scmp.eq.s32.totalorder %s54, 0
      %p159 = por %p157, %p158
      %s161 = sadd.s32 %s160, 1
      %p164 = scmp.eq.s32.totalorder %s48, 1
      %p165 = scmp.ne.s32.totalorder %s160, %s162
      %p166 = scmp.eq.s32.totalorder %s48, 0
      %p167 = por %p165, %p166
      %p168 = scmp.ne.s32.totalorder %s160, %s162
      %p169 = scmp.eq.s32.totalorder %s53, 1
      %p170 = por %p168, %p169
      %p171 = scmp.ne.s32.totalorder %s162, %s163
      %p172 = scmp.eq.s32.totalorder %s53, 0
      %p173 = por %p171, %p172
      %p174 = scmp.ne.s32.totalorder %s162, %s163
      %p175 = scmp.eq.s32.totalorder %s54, 1
      %p176 = por %p174, %p175
      %p178 = scmp.ne.s32.totalorder %s163, %s177
      %p179 = scmp.eq.s32.totalorder %s54, 0
      %p180 = por %p178, %p179
      %s182 = sadd.s32 %s181, 1
      %p185 = scmp.eq.s32.totalorder %s48, 1
      %p186 = scmp.ne.s32.totalorder %s181, %s183
      %p187 = scmp.eq.s32.totalorder %s48, 0
      %p188 = por %p186, %p187
      %p189 = scmp.ne.s32.totalorder %s181, %s183
      %p190 = scmp.eq.s32.totalorder %s53, 1
      %p191 = por %p189, %p190
      %p192 = scmp.ne.s32.totalorder %s183, %s184
      %p193 = scmp.eq.s32.totalorder %s53, 0
      %p194 = por %p192, %p193
      %p195 = scmp.ne.s32.totalorder %s183, %s184
      %p196 = scmp.eq.s32.totalorder %s54, 1
      %p197 = por %p195, %p196
      %p199 = scmp.ne.s32.totalorder %s184, %s198
      %p200 = scmp.eq.s32.totalorder %s54, 0
      %p201 = por %p199, %p200
      %s203 = sadd.s32 %s202, 1
      %p206 = scmp.eq.s32.totalorder %s48, 1
      %p207 = scmp.ne.s32.totalorder %s202, %s204
      %p208 = scmp.eq.s32.totalorder %s48, 0
      %p209 = por %p207, %p208
      %p210 = scmp.ne.s32.totalorder %s202, %s204
      %p211 = scmp.eq.s32.totalorder %s53, 1
      %p212 = por %p210, %p211
      %p213 = scmp.ne.s32.totalorder %s204, %s205
      %p214 = scmp.eq.s32.totalorder %s53, 0
      %p215 = por %p213, %p214
      %p216 = scmp.ne.s32.totalorder %s204, %s205
      %p217 = scmp.eq.s32.totalorder %s54, 1
      %p218 = por %p216, %p217
      %p220 = scmp.ne.s32.totalorder %s205, %s219
      %p221 = scmp.eq.s32.totalorder %s54, 0
      %p222 = por %p220, %p221
      %s224 = sadd.s32 %s223, 1
      %p227 = scmp.eq.s32.totalorder %s48, 1
      %p228 = scmp.ne.s32.totalorder %s223, %s225
      %p229 = scmp.eq.s32.totalorder %s48, 0
      %p230 = por %p228, %p229
      %p231 = scmp.ne.s32.totalorder %s223, %s225
      %p232 = scmp.eq.s32.totalorder %s53, 1
      %p233 = por %p231, %p232
      %p234 = scmp.ne.s32.totalorder %s225, %s226
      %p235 = scmp.eq.s32.totalorder %s53, 0
      %p236 = por %p234, %p235
      %p237 = scmp.ne.s32.totalorder %s225, %s226
      %p238 = scmp.eq.s32.totalorder %s54, 1
      %p239 = por %p237, %p238
      %p241 = scmp.ne.s32.totalorder %s226, %s240
      %p242 = scmp.eq.s32.totalorder %s54, 0
      %p243 = por %p241, %p242
      %s245 = sadd.s32 %s244, 1
      %p248 = scmp.eq.s32.totalorder %s48, 1
      %p249 = scmp.ne.s32.totalorder %s244, %s246
      %p250 = scmp.eq.s32.totalorder %s48, 0
      %p251 = por %p249, %p250
      %p252 = scmp.ne.s32.totalorder %s244, %s246
      %p253 = scmp.eq.s32.totalorder %s53, 1
      %p254 = por %p252, %p253
      %p255 = scmp.ne.s32.totalorder %s246, %s247
      %p256 = scmp.eq.s32.totalorder %s53, 0
      %p257 = por %p255, %p256
      %p258 = scmp.ne.s32.totalorder %s246, %s247
      %p259 = scmp.eq.s32.totalorder %s54, 1
      %p260 = por %p258, %p259
      %p262 = scmp.ne.s32.totalorder %s247, %s261
      %p263 = scmp.eq.s32.totalorder %s54, 0
      %p264 = por %p262, %p263
      %s266 = sadd.s32 %s265, 1
      %p269 = scmp.eq.s32.totalorder %s48, 1
      %p270 = scmp.ne.s32.totalorder %s265, %s267
      %p271 = scmp.eq.s32.totalorder %s48, 0
      %p272 = por %p270, %p271
      %p273 = scmp.ne.s32.totalorder %s265, %s267
      %p274 = scmp.eq.s32.totalorder %s53, 1
      %p275 = por %p273, %p274
      %p276 = scmp.ne.s32.totalorder %s267, %s268
      %p277 = scmp.eq.s32.totalorder %s53, 0
      %p278 = por %p276, %p277
      %p279 = scmp.ne.s32.totalorder %s267, %s268
      %p280 = scmp.eq.s32.totalorder %s54, 1
      %p281 = por %p279, %p280
      %p283 = scmp.ne.s32.totalorder %s268, %s282
      %p284 = scmp.eq.s32.totalorder %s54, 0
      %p285 = por %p283, %p284
      %s287 = sadd.s32 %s286, 1
      %p290 = scmp.eq.s32.totalorder %s48, 1
      %p291 = scmp.ne.s32.totalorder %s286, %s288
      %p292 = scmp.eq.s32.totalorder %s48, 0
      %p293 = por %p291, %p292
      %p294 = scmp.ne.s32.totalorder %s286, %s288
      %p295 = scmp.eq.s32.totalorder %s53, 1
      %p296 = por %p294, %p295
      %p297 = scmp.ne.s32.totalorder %s288, %s289
      %p298 = scmp.eq.s32.totalorder %s53, 0
      %p299 = por %p297, %p298
      %p300 = scmp.ne.s32.totalorder %s288, %s289
      %p301 = scmp.eq.s32.totalorder %s54, 1
      %p302 = por %p300, %p301
      %p304 = scmp.ne.s32.totalorder %s289, %s303
      %p305 = scmp.eq.s32.totalorder %s54, 0
      %p306 = por %p304, %p305
      %s308 = sadd.s32 %s307, 1
      %p311 = scmp.eq.s32.totalorder %s48, 1
      %p312 = scmp.ne.s32.totalorder %s307, %s309
      %p313 = scmp.eq.s32.totalorder %s48, 0
      %p314 = por %p312, %p313
      %p315 = scmp.ne.s32.totalorder %s307, %s309
      %p316 = scmp.eq.s32.totalorder %s53, 1
      %p317 = por %p315, %p316
      %p318 = scmp.ne.s32.totalorder %s309, %s310
      %p319 = scmp.eq.s32.totalorder %s53, 0
      %p320 = por %p318, %p319
      %p321 = scmp.ne.s32.totalorder %s309, %s310
      %p322 = scmp.eq.s32.totalorder %s54, 1
      %p323 = por %p321, %p322
      %p325 = scmp.ne.s32.totalorder %s310, %s324
      %p326 = scmp.eq.s32.totalorder %s54, 0
      %p327 = por %p325, %p326
      %s329 = sadd.s32 %s328, 1
      %p332 = scmp.eq.s32.totalorder %s48, 1
      %p333 = scmp.ne.s32.totalorder %s328, %s330
      %p334 = scmp.eq.s32.totalorder %s48, 0
      %p335 = por %p333, %p334
      %p336 = scmp.ne.s32.totalorder %s328, %s330
      %p337 = scmp.eq.s32.totalorder %s53, 1
      %p338 = por %p336, %p337
      %p339 = scmp.ne.s32.totalorder %s330, %s331
      %p340 = scmp.eq.s32.totalorder %s53, 0
      %p341 = por %p339, %p340
      %p342 = scmp.ne.s32.totalorder %s330, %s331
      %p343 = scmp.eq.s32.totalorder %s54, 1
      %p344 = por %p342, %p343
      %p346 = scmp.ne.s32.totalorder %s331, %s345
      %p347 = scmp.eq.s32.totalorder %s54, 0
      %p348 = por %p346, %p347
      %s350 = sadd.s32 %s349, 1
      %p353 = scmp.eq.s32.totalorder %s48, 1
      %p354 = scmp.ne.s32.totalorder %s349, %s351
      %p355 = scmp.eq.s32.totalorder %s48, 0
      %p356 = por %p354, %p355
      %p357 = scmp.ne.s32.totalorder %s349, %s351
      %p358 = scmp.eq.s32.totalorder %s53, 1
      %p359 = por %p357, %p358
      %p360 = scmp.ne.s32.totalorder %s351, %s352
      %p361 = scmp.eq.s32.totalorder %s53, 0
      %p362 = por %p360, %p361
      %p363 = scmp.ne.s32.totalorder %s351, %s352
      %p364 = scmp.eq.s32.totalorder %s54, 1
      %p365 = por %p363, %p364
      %p367 = scmp.ne.s32.totalorder %s352, %s366
      %p368 = scmp.eq.s32.totalorder %s54, 0
      %p369 = por %p367, %p368
      %s371 = sadd.s32 %s370, 1
      %p374 = scmp.eq.s32.totalorder %s48, 1
      %p375 = scmp.ne.s32.totalorder %s370, %s372
      %p376 = scmp.eq.s32.totalorder %s48, 0
      %p377 = por %p375, %p376
      %p378 = scmp.ne.s32.totalorder %s370, %s372
      %p379 = scmp.eq.s32.totalorder %s53, 1
      %p380 = por %p378, %p379
      %p381 = scmp.ne.s32.totalorder %s372, %s373
      %p382 = scmp.eq.s32.totalorder %s53, 0
      %p383 = por %p381, %p382
      %p384 = scmp.ne.s32.totalorder %s372, %s373
      %p385 = scmp.eq.s32.totalorder %s54, 1
      %p386 = por %p384, %p385
      %p388 = scmp.ne.s32.totalorder %s373, %s387
      %p389 = scmp.eq.s32.totalorder %s54, 0
      %p390 = por %p388, %p389
      %s392 = sadd.s32 %s391, 1
      %p395 = scmp.eq.s32.totalorder %s48, 1
      %p396 = scmp.ne.s32.totalorder %s391, %s393
      %p397 = scmp.eq.s32.totalorder %s48, 0
      %p398 = por %p396, %p397
      %p399 = scmp.ne.s32.totalorder %s391, %s393
      %p400 = scmp.eq.s32.totalorder %s53, 1
      %p401 = por %p399, %p400
      %p402 = scmp.ne.s32.totalorder %s393, %s394
      %p403 = scmp.eq.s32.totalorder %s53, 0
      %p404 = por %p402, %p403
      %p405 = scmp.ne.s32.totalorder %s393, %s394
      %p406 = scmp.eq.s32.totalorder %s54, 1
      %p407 = por %p405, %p406
      %p409 = scmp.ne.s32.totalorder %s394, %s408
      %p410 = scmp.eq.s32.totalorder %s54, 0
      %p411 = por %p409, %p410
      %s413 = sadd.s32 %s412, 1
      %p416 = scmp.eq.s32.totalorder %s48, 1
      %p417 = scmp.ne.s32.totalorder %s412, %s414
      %p418 = scmp.eq.s32.totalorder %s48, 0
      %p419 = por %p417, %p418
      %p420 = scmp.ne.s32.totalorder %s412, %s414
      %p421 = scmp.eq.s32.totalorder %s53, 1
      %p422 = por %p420, %p421
      %p423 = scmp.ne.s32.totalorder %s414, %s415
      %p424 = scmp.eq.s32.totalorder %s53, 0
      %p425 = por %p423, %p424
      %p426 = scmp.ne.s32.totalorder %s414, %s415
      %p427 = scmp.eq.s32.totalorder %s54, 1
      %p428 = por %p426, %p427
      %p430 = scmp.ne.s32.totalorder %s415, %s429
      %p431 = scmp.eq.s32.totalorder %s54, 0
      %p432 = por %p430, %p431
      %s434 = sadd.s32 %s433, 1
      %p437 = scmp.eq.s32.totalorder %s48, 1
      %p438 = scmp.ne.s32.totalorder %s433, %s435
      %p439 = scmp.eq.s32.totalorder %s48, 0
      %p440 = por %p438, %p439
      %p441 = scmp.ne.s32.totalorder %s433, %s435
      %p442 = scmp.eq.s32.totalorder %s53, 1
      %p443 = por %p441, %p442
      %p444 = scmp.ne.s32.totalorder %s435, %s436
      %p445 = scmp.eq.s32.totalorder %s53, 0
      %p446 = por %p444, %p445
      %p447 = scmp.ne.s32.totalorder %s435, %s436
      %p448 = scmp.eq.s32.totalorder %s54, 1
      %p449 = por %p447, %p448
      %p451 = scmp.ne.s32.totalorder %s436, %s450
      %p452 = scmp.eq.s32.totalorder %s54, 0
      %p453 = por %p451, %p452
      %s455 = sadd.s32 %s454, 1
      %p458 = scmp.eq.s32.totalorder %s48, 1
      %p459 = scmp.ne.s32.totalorder %s454, %s456
      %p460 = scmp.eq.s32.totalorder %s48, 0
      %p461 = por %p459, %p460
      %p462 = scmp.ne.s32.totalorder %s454, %s456
      %p463 = scmp.eq.s32.totalorder %s53, 1
      %p464 = por %p462, %p463
      %p465 = scmp.ne.s32.totalorder %s456, %s457
      %p466 = scmp.eq.s32.totalorder %s53, 0
      %p467 = por %p465, %p466
      %p468 = scmp.ne.s32.totalorder %s456, %s457
      %p469 = scmp.eq.s32.totalorder %s54, 1
      %p470 = por %p468, %p469
      %p472 = scmp.ne.s32.totalorder %s457, %s471
      %p473 = scmp.eq.s32.totalorder %s54, 0
      %p474 = por %p472, %p473
      %s476 = sadd.s32 %s475, 1
      %p479 = scmp.eq.s32.totalorder %s48, 1
      %p480 = scmp.ne.s32.totalorder %s475, %s477
      %p481 = scmp.eq.s32.totalorder %s48, 0
      %p482 = por %p480, %p481
      %p483 = scmp.ne.s32.totalorder %s475, %s477
      %p484 = scmp.eq.s32.totalorder %s53, 1
      %p485 = por %p483, %p484
      %p486 = scmp.ne.s32.totalorder %s477, %s478
      %p487 = scmp.eq.s32.totalorder %s53, 0
      %p488 = por %p486, %p487
      %p489 = scmp.ne.s32.totalorder %s477, %s478
      %p490 = scmp.eq.s32.totalorder %s54, 1
      %p491 = por %p489, %p490
      %p493 = scmp.ne.s32.totalorder %s478, %s492
      %p494 = scmp.eq.s32.totalorder %s54, 0
      %p495 = por %p493, %p494
      %s497 = sadd.s32 %s496, 1
      %p500 = scmp.eq.s32.totalorder %s48, 1
      %p501 = scmp.ne.s32.totalorder %s496, %s498
      %p502 = scmp.eq.s32.totalorder %s48, 0
      %p503 = por %p501, %p502
      %p504 = scmp.ne.s32.totalorder %s496, %s498
      %p505 = scmp.eq.s32.totalorder %s53, 1
      %p506 = por %p504, %p505
      %p507 = scmp.ne.s32.totalorder %s498, %s499
      %p508 = scmp.eq.s32.totalorder %s53, 0
      %p509 = por %p507, %p508
      %p510 = scmp.ne.s32.totalorder %s498, %s499
      %p511 = scmp.eq.s32.totalorder %s54, 1
      %p512 = por %p510, %p511
      %p514 = scmp.ne.s32.totalorder %s499, %s513
      %p515 = scmp.eq.s32.totalorder %s54, 0
      %p516 = por %p514, %p515
      %s518 = sadd.s32 %s517, 1
      %p521 = scmp.eq.s32.totalorder %s48, 1
      %p522 = scmp.ne.s32.totalorder %s517, %s519
      %p523 = scmp.eq.s32.totalorder %s48, 0
      %p524 = por %p522, %p523
      %p525 = scmp.ne.s32.totalorder %s517, %s519
      %p526 = scmp.eq.s32.totalorder %s53, 1
      %p527 = por %p525, %p526
      %p528 = scmp.ne.s32.totalorder %s519, %s520
      %p529 = scmp.eq.s32.totalorder %s53, 0
      %p530 = por %p528, %p529
      %p531 = scmp.ne.s32.totalorder %s519, %s520
      %p532 = scmp.eq.s32.totalorder %s54, 1
      %p533 = por %p531, %p532
      %p535 = scmp.ne.s32.totalorder %s520, %s534
      %p536 = scmp.eq.s32.totalorder %s54, 0
      %p537 = por %p535, %p536
      %s539 = sadd.s32 %s538, 1
      %p542 = scmp.eq.s32.totalorder %s48, 1
      %p543 = scmp.ne.s32.totalorder %s538, %s540
      %p544 = scmp.eq.s32.totalorder %s48, 0
      %p545 = por %p543, %p544
      %p546 = scmp.ne.s32.totalorder %s538, %s540
      %p547 = scmp.eq.s32.totalorder %s53, 1
      %p548 = por %p546, %p547
      %p549 = scmp.ne.s32.totalorder %s540, %s541
      %p550 = scmp.eq.s32.totalorder %s53, 0
      %p551 = por %p549, %p550
      %p552 = scmp.ne.s32.totalorder %s540, %s541
      %p553 = scmp.eq.s32.totalorder %s54, 1
      %p554 = por %p552, %p553
      %p556 = scmp.ne.s32.totalorder %s541, %s555
      %p557 = scmp.eq.s32.totalorder %s54, 0
      %p558 = por %p556, %p557
      %s560 = sadd.s32 %s559, 1
      %p563 = scmp.eq.s32.totalorder %s48, 1
      %p564 = scmp.ne.s32.totalorder %s559, %s561
      %p565 = scmp.eq.s32.totalorder %s48, 0
      %p566 = por %p564, %p565
      %p567 = scmp.ne.s32.totalorder %s559, %s561
      %p568 = scmp.eq.s32.totalorder %s53, 1
      %p569 = por %p567, %p568
      %p570 = scmp.ne.s32.totalorder %s561, %s562
      %p571 = scmp.eq.s32.totalorder %s53, 0
      %p572 = por %p570, %p571
      %p573 = scmp.ne.s32.totalorder %s561, %s562
      %p574 = scmp.eq.s32.totalorder %s54, 1
      %p575 = por %p573, %p574
      %p577 = scmp.ne.s32.totalorder %s562, %s576
      %p578 = scmp.eq.s32.totalorder %s54, 0
      %p579 = por %p577, %p578
      %s580 = ssub.s32 %s48, %s55
      %p581 = scmp.eq.s32.totalorder %s580, 0
      %s583 = sadd.s32 %s582, 1
      %s584 = scalar_select %p581, %s582, %s583
      %p587 = pneg %p581
      %p588 = scmp.eq.s32.totalorder %s48, 1
      %p589 = por %p587, %p588
      %p590 = scmp.ne.s32.totalorder %s582, %s585
      %p591 = scmp.eq.s32.totalorder %s48, 0
      %p592 = por %p590, %p591
      %p593 = scmp.ne.s32.totalorder %s582, %s585
      %p594 = scmp.eq.s32.totalorder %s53, 1
      %p595 = por %p593, %p594
      %p596 = scmp.ne.s32.totalorder %s585, %s586
      %p597 = scmp.eq.s32.totalorder %s53, 0
      %p598 = por %p596, %p597
      %p599 = scmp.ne.s32.totalorder %s585, %s586
      %p600 = scmp.eq.s32.totalorder %s54, 1
      %p601 = por %p599, %p600
      %p603 = scmp.ne.s32.totalorder %s586, %s602
      %p604 = scmp.eq.s32.totalorder %s54, 0
      %p605 = por %p603, %p604
      %p606 = scmp.le.s32.totalorder 1, %s48
      %p607 = scmp.lt.s32.totalorder %s48, 3
      %p608 = pnand %p606, %p607
      %p609 = pneg %p608
      // Predicated region
      $region9: #{decoder_layer_forward.1} parent=5 // pred_check
        _
      $region10: #{decoder_layer_forward.1} parent=5 // pred_check_branch
        %611 = sbr.rel (%p608) target = $region12
      $region11: #{decoder_layer_forward.1} parent=5 // pred_region
        %s612 = ssub.s32 %s48, 1
        // Predicated region
        $region13: #{decoder_layer_forward.1} parent=11 // pred_check
          %p613 = pneg %p173
        $region14: #{decoder_layer_forward.1} parent=11 // pred_check_branch
          %615 = sbr.rel (%p613) target = $region16
        $region15: #{decoder_layer_forward.1} parent=11 // pred_region
          %s617 = ssub.s32 32, 32
          %618 = vsyncadd [#allocation7], %s617
          %s620 = sshll.u32 [#allocation8], 4
          %s621 = int_to_ptr.vmem [resolvable:$true] %s620
          %623 = dma.hbm_to_vmem [thread:$0]  %s4, 32, %s621, [#allocation7]
        $region16: #{decoder_layer_forward.1} parent=11 // pred_fallthru
          _
        // Predicated region
        $region17: #{decoder_layer_forward.1} parent=11 // pred_check
          %p624 = pneg %p194
        $region18: #{decoder_layer_forward.1} parent=11 // pred_check_branch
          %626 = sbr.rel (%p624) target = $region20
        $region19: #{decoder_layer_forward.1} parent=11 // pred_region
          %s628 = ssub.s32 32, 32
          %629 = vsyncadd [#allocation10], %s628
          %s631 = sshll.u32 [#allocation9], 4
          %s632 = int_to_ptr.vmem [resolvable:$true] %s631
          %634 = dma.hbm_to_vmem [thread:$0]  %s5, 32, %s632, [#allocation10]
        $region20: #{decoder_layer_forward.1} parent=11 // pred_fallthru
          _
        // Predicated region
        $region21: #{decoder_layer_forward.1} parent=11 // pred_check
          %p635 = pneg %p215
        $region22: #{decoder_layer_forward.1} parent=11 // pred_check_branch
          %637 = sbr.rel (%p635) target = $region24
        $region23: #{decoder_layer_forward.1} parent=11 // pred_region
          %s639 = ssub.s32 12288, 12288
          %640 = vsyncadd [#allocation10], %s639
          %s641 = sshll.u32 [#allocation11], 4
          %s642 = int_to_ptr.vmem [resolvable:$true] %s641
          %647 = dma.hbm_to_vmem [thread:$0]  %s6, 12288, %s642, [#allocation10], 384, 384, 24
        $region24: #{decoder_layer_forward.1} parent=11 // pred_fallthru
          _
        // Predicated region
        $region25: #{decoder_layer_forward.1} parent=11 // pred_check
          %p648 = pneg %p236
        $region26: #{decoder_layer_forward.1} parent=11 // pred_check_branch
          %650 = sbr.rel (%p648) target = $region28
        $region27: #{decoder_layer_forward.1} parent=11 // pred_region
          _
        $region28: #{decoder_layer_forward.1} parent=11 // pred_fallthru
          _
        // Predicated region
        $region29: #{decoder_layer_forward.1} parent=11 // pred_check
          %p651 = pneg %p257
        $region30: #{decoder_layer_forward.1} parent=11 // pred_check_branch
          %653 = sbr.rel (%p651) target = $region32
        $region31: #{decoder_layer_forward.1} parent=11 // pred_region
          %s655 = ssub.s32 4096, 4096
          %656 = vsyncadd [#allocation13], %s655
          %s657 = sshll.u32 [#allocation12], 4
          %s658 = int_to_ptr.vmem [resolvable:$true] %s657
          %663 = dma.hbm_to_vmem [thread:$0]  %s8, 4096, %s658, [#allocation13], 128, 128, 8
        $region32: #{decoder_layer_forward.1} parent=11 // pred_fallthru
          _
        // Predicated region
        $region33: #{decoder_layer_forward.1} parent=11 // pred_check
          %p664 = pneg %p278
        $region34: #{decoder_layer_forward.1} parent=11 // pred_check_branch
          %666 = sbr.rel (%p664) target = $region36
        $region35: #{decoder_layer_forward.1} parent=11 // pred_region
          %s668 = ssub.s32 32, 32
          %669 = vsyncadd [#allocation13], %s668
          %s671 = sshll.u32 [#allocation14], 4
          %s672 = int_to_ptr.vmem [resolvable:$true] %s671
          %674 = dma.hbm_to_vmem [thread:$0]  %s9, 32, %s672, [#allocation13]
        $region36: #{decoder_layer_forward.1} parent=11 // pred_fallthru
          _
        // Predicated region
        $region37: #{decoder_layer_forward.1} parent=11 // pred_check
          %p675 = pneg %p299
        $region38: #{decoder_layer_forward.1} parent=11 // pred_check_branch
          %677 = sbr.rel (%p675) target = $region40
        $region39: #{decoder_layer_forward.1} parent=11 // pred_region
          %s679 = ssub.s32 32, 32
          %680 = vsyncadd [#allocation16], %s679
          %s682 = sshll.u32 [#allocation15], 4
          %s683 = int_to_ptr.vmem [resolvable:$true] %s682
          %685 = dma.hbm_to_vmem [thread:$0]  %s10, 32, %s683, [#allocation16]
        $region40: #{decoder_layer_forward.1} parent=11 // pred_fallthru
          _
        // Predicated region
        $region41: #{decoder_layer_forward.1} parent=11 // pred_check
          %p686 = pneg %p320
        $region42: #{decoder_layer_forward.1} parent=11 // pred_check_branch
          %688 = sbr.rel (%p686) target = $region44
        $region43: #{decoder_layer_forward.1} parent=11 // pred_region
          %s690 = ssub.s32 32, 32
          %691 = vsyncadd [#allocation16], %s690
          %s693 = sshll.u32 [#allocation17], 4
          %s694 = int_to_ptr.vmem [resolvable:$true] %s693
          %696 = dma.hbm_to_vmem [thread:$0]  %s11, 32, %s694, [#allocation16]
        $region44: #{decoder_layer_forward.1} parent=11 // pred_fallthru
          _
        // Predicated region
        $region45: #{decoder_layer_forward.1} parent=11 // pred_check
          %p697 = pneg %p341
        $region46: #{decoder_layer_forward.1} parent=11 // pred_check_branch
          %699 = sbr.rel (%p697) target = $region48
        $region47: #{decoder_layer_forward.1} parent=11 // pred_region
          %s701 = ssub.s32 4096, 4096
          %702 = vsyncadd [#allocation19], %s701
          %s703 = sshll.u32 [#allocation18], 4
          %s704 = int_to_ptr.vmem [resolvable:$true] %s703
          %709 = dma.hbm_to_vmem [thread:$0]  %s12, 4096, %s704, [#allocation19], 128, 128, 8
        $region48: #{decoder_layer_forward.1} parent=11 // pred_fallthru
          _
        // Predicated region
        $region49: #{decoder_layer_forward.1} parent=11 // pred_check
          %p710 = pneg %p362
        $region50: #{decoder_layer_forward.1} parent=11 // pred_check_branch
          %712 = sbr.rel (%p710) target = $region52
        $region51: #{decoder_layer_forward.1} parent=11 // pred_region
          %s714 = ssub.s32 32, 32
          %715 = vsyncadd [#allocation19], %s714
          %s717 = sshll.u32 [#allocation20], 4
          %s718 = int_to_ptr.vmem [resolvable:$true] %s717
          %720 = dma.hbm_to_vmem [thread:$0]  %s13, 32, %s718, [#allocation19]
        $region52: #{decoder_layer_forward.1} parent=11 // pred_fallthru
          _
        // Predicated region
        $region53: #{decoder_layer_forward.1} parent=11 // pred_check
          %p721 = pneg %p383
        $region54: #{decoder_layer_forward.1} parent=11 // pred_check_branch
          %723 = sbr.rel (%p721) target = $region56
        $region55: #{decoder_layer_forward.1} parent=11 // pred_region
          %s725 = ssub.s32 8192, 8192
          %726 = vsyncadd [#allocation22], %s725
          %s727 = sshll.u32 [#allocation21], 4
          %s728 = int_to_ptr.vmem [resolvable:$true] %s727
          %733 = dma.hbm_to_vmem [thread:$0]  %s14, 8192, %s728, [#allocation22], 256, 256, 16
        $region56: #{decoder_layer_forward.1} parent=11 // pred_fallthru
          _
        // Predicated region
        $region57: #{decoder_layer_forward.1} parent=11 // pred_check
          %p734 = pneg %p404
        $region58: #{decoder_layer_forward.1} parent=11 // pred_check_branch
          %736 = sbr.rel (%p734) target = $region60
        $region59: #{decoder_layer_forward.1} parent=11 // pred_region
          %s738 = ssub.s32 64, 64
          %739 = vsyncadd [#allocation22], %s738
          %s741 = sshll.u32 [#allocation23], 4
          %s742 = int_to_ptr.vmem [resolvable:$true] %s741
          %744 = dma.hbm_to_vmem [thread:$0]  %s15, 64, %s742, [#allocation22]
        $region60: #{decoder_layer_forward.1} parent=11 // pred_fallthru
          _
        // Predicated region
        $region61: #{decoder_layer_forward.1} parent=11 // pred_check
          %p745 = pneg %p425
        $region62: #{decoder_layer_forward.1} parent=11 // pred_check_branch
          %747 = sbr.rel (%p745) target = $region64
        $region63: #{decoder_layer_forward.1} parent=11 // pred_region
          %s749 = ssub.s32 4096, 4096
          %750 = vsyncadd [#allocation25], %s749
          %s751 = sshll.u32 [#allocation24], 4
          %s752 = int_to_ptr.vmem [resolvable:$true] %s751
          %757 = dma.hbm_to_vmem [thread:$0]  %s16, 4096, %s752, [#allocation25], 128, 128, 8
        $region64: #{decoder_layer_forward.1} parent=11 // pred_fallthru
          _
        // Predicated region
        $region65: #{decoder_layer_forward.1} parent=11 // pred_check
          %p758 = pneg %p446
        $region66: #{decoder_layer_forward.1} parent=11 // pred_check_branch
          %760 = sbr.rel (%p758) target = $region68
        $region67: #{decoder_layer_forward.1} parent=11 // pred_region
          %s762 = ssub.s32 32, 32
          %763 = vsyncadd [#allocation25], %s762
          %s765 = sshll.u32 [#allocation26], 4
          %s766 = int_to_ptr.vmem [resolvable:$true] %s765
          %768 = dma.hbm_to_vmem [thread:$0]  %s17, 32, %s766, [#allocation25]
        $region68: #{decoder_layer_forward.1} parent=11 // pred_fallthru
          _
        // Predicated region
        $region69: #{decoder_layer_forward.1} parent=11 // pred_check
          %p769 = pneg %p467
        $region70: #{decoder_layer_forward.1} parent=11 // pred_check_branch
          %771 = sbr.rel (%p769) target = $region72
        $region71: #{decoder_layer_forward.1} parent=11 // pred_region
          %s773 = ssub.s32 32, 32
          %774 = vsyncadd [#allocation28], %s773
          %s776 = sshll.u32 [#allocation27], 4
          %s777 = int_to_ptr.vmem [resolvable:$true] %s776
          %779 = dma.hbm_to_vmem [thread:$0]  %s18, 32, %s777, [#allocation28]
        $region72: #{decoder_layer_forward.1} parent=11 // pred_fallthru
          _
        // Predicated region
        $region73: #{decoder_layer_forward.1} parent=11 // pred_check
          %p780 = pneg %p488
        $region74: #{decoder_layer_forward.1} parent=11 // pred_check_branch
          %782 = sbr.rel (%p780) target = $region76
        $region75: #{decoder_layer_forward.1} parent=11 // pred_region
          %s784 = ssub.s32 32, 32
          %785 = vsyncadd [#allocation28], %s784
          %s787 = sshll.u32 [#allocation29], 4
          %s788 = int_to_ptr.vmem [resolvable:$true] %s787
          %790 = dma.hbm_to_vmem [thread:$0]  %s19, 32, %s788, [#allocation28]
        $region76: #{decoder_layer_forward.1} parent=11 // pred_fallthru
          _
        // Predicated region
        $region77: #{decoder_layer_forward.1} parent=11 // pred_check
          %p791 = pneg %p509
        $region78: #{decoder_layer_forward.1} parent=11 // pred_check_branch
          %793 = sbr.rel (%p791) target = $region80
        $region79: #{decoder_layer_forward.1} parent=11 // pred_region
          %s795 = ssub.s32 8192, 8192
          %796 = vsyncadd [#allocation31], %s795
          %s797 = sshll.u32 [#allocation30], 4
          %s798 = int_to_ptr.vmem [resolvable:$true] %s797
          %803 = dma.hbm_to_vmem [thread:$0]  %s20, 8192, %s798, [#allocation31], 256, 256, 16
        $region80: #{decoder_layer_forward.1} parent=11 // pred_fallthru
          _
        // Predicated region
        $region81: #{decoder_layer_forward.1} parent=11 // pred_check
          %p804 = pneg %p530
        $region82: #{decoder_layer_forward.1} parent=11 // pred_check_branch
          %806 = sbr.rel (%p804) target = $region84
        $region83: #{decoder_layer_forward.1} parent=11 // pred_region
          %s808 = ssub.s32 64, 64
          %809 = vsyncadd [#allocation31], %s808
          %s811 = sshll.u32 [#allocation32], 4
          %s812 = int_to_ptr.vmem [resolvable:$true] %s811
          %814 = dma.hbm_to_vmem [thread:$0]  %s21, 64, %s812, [#allocation31]
        $region84: #{decoder_layer_forward.1} parent=11 // pred_fallthru
          _
        // Predicated region
        $region85: #{decoder_layer_forward.1} parent=11 // pred_check
          %p815 = pneg %p551
        $region86: #{decoder_layer_forward.1} parent=11 // pred_check_branch
          %817 = sbr.rel (%p815) target = $region88
        $region87: #{decoder_layer_forward.1} parent=11 // pred_region
          %s819 = ssub.s32 8192, 8192
          %820 = vsyncadd [#allocation34], %s819
          %s821 = sshll.u32 [#allocation33], 4
          %s822 = int_to_ptr.vmem [resolvable:$true] %s821
          %827 = dma.hbm_to_vmem [thread:$0]  %s22, 8192, %s822, [#allocation34], 128, 128, 8
        $region88: #{decoder_layer_forward.1} parent=11 // pred_fallthru
          _
        // Predicated region
        $region89: #{decoder_layer_forward.1} parent=11 // pred_check
          %p828 = pneg %p572
        $region90: #{decoder_layer_forward.1} parent=11 // pred_check_branch
          %830 = sbr.rel (%p828) target = $region92
        $region91: #{decoder_layer_forward.1} parent=11 // pred_region
          %s832 = ssub.s32 32, 32
          %833 = vsyncadd [#allocation34], %s832
          %s835 = sshll.u32 [#allocation35], 4
          %s836 = int_to_ptr.vmem [resolvable:$true] %s835
          %838 = dma.hbm_to_vmem [thread:$0]  %s23, 32, %s836, [#allocation34]
        $region92: #{decoder_layer_forward.1} parent=11 // pred_fallthru
          _
      $region12: #{decoder_layer_forward.1} parent=5 // pred_fallthru
        _
      %p839 = scmp.lt.s32.totalorder %s48, 2
      // Predicated region
      $region93: #{decoder_layer_forward.1} parent=5 // pred_check
        %p840 = pneg %p839
      $region94: #{decoder_layer_forward.1} parent=5 // pred_check_branch
        %842 = sbr.rel (%p840) target = $region96
      $region95: #{decoder_layer_forward.1} parent=5 // pred_region
        // Predicated region
        $region97: #{decoder_layer_forward.1} parent=95 // pred_check
          %p843 = pneg %p68
        $region98: #{decoder_layer_forward.1} parent=95 // pred_check_branch
          %845 = sbr.rel (%p843) target = $region100
        $region99: #{decoder_layer_forward.1} parent=95 // pred_region
          %s846 = sand.u32 %s58, 1
          %s847 = scalar_lea.sflag [#allocation4], %s846
          %s848 = sand.u32 %s58, 1
          %s849 = smul.addr %s848, 32
          %s850 = scalar_lea.vmem [#allocation3], %s849
          %s851 = smul.u32 2, %s48
          %s853 = ssub.s32 512, 512
          %854 = vsyncadd %s847, %s853
          %s855 = smul.addr %s851, 2
          %s856 = smul.addr %s855, 128
          %s857 = scalar_lea.hbm %s0, %s856
          %s858 = sshll.u32 %s850, 4
          %s859 = int_to_ptr.vmem [resolvable:$true] %s858
          %864 = dma.hbm_to_vmem [thread:$0]  %s857, 512, %s859, %s847, 256, 256, 16
        $region100: #{decoder_layer_forward.1} parent=95 // pred_fallthru
          _
        // Predicated region
        $region101: #{decoder_layer_forward.1} parent=95 // pred_check
          %p865 = pneg %p94
        $region102: #{decoder_layer_forward.1} parent=95 // pred_check_branch
          %867 = sbr.rel (%p865) target = $region104
        $region103: #{decoder_layer_forward.1} parent=95 // pred_region
          %s868 = sand.u32 %s48, 1
          %s869 = scalar_lea.sflag [#allocation7], %s868
          %s870 = sand.u32 %s84, 1
          %s871 = smul.addr %s870, 32
          %s872 = scalar_lea.vmem [#allocation6], %s871
          %s873 = smul.u32 2, %s48
          %s875 = ssub.s32 512, 512
          %876 = vsyncadd %s869, %s875
          %s877 = smul.addr %s873, 2
          %s878 = smul.addr %s877, 128
          %s879 = scalar_lea.hbm %s1, %s878
          %s880 = sshll.u32 %s872, 4
          %s881 = int_to_ptr.vmem [resolvable:$true] %s880
          %886 = dma.hbm_to_vmem [thread:$0]  %s879, 512, %s881, %s869, 256, 256, 16
        $region104: #{decoder_layer_forward.1} parent=95 // pred_fallthru
          _
        // Predicated region
        $region105: #{decoder_layer_forward.1} parent=95 // pred_check
          %p887 = pneg %p120
        $region106: #{decoder_layer_forward.1} parent=95 // pred_check_branch
          %889 = sbr.rel (%p887) target = $region108
        $region107: #{decoder_layer_forward.1} parent=95 // pred_region
          %s890 = smul.u32 2, %s48
          %p891 = scmp.lt.s32.totalorder %s890, 3
          %s892 = scalar_select %p891, %s890, 3
          %s893 = smul.addr %s892, 8
          %s894 = scalar_lea.vmem %s2, %s893
          %s895 = smul.u32 2, %s48
        $region108: #{decoder_layer_forward.1} parent=95 // pred_fallthru
          _
        // Predicated region
        $region109: #{decoder_layer_forward.1} parent=95 // pred_check
          %p896 = pneg %p146
        $region110: #{decoder_layer_forward.1} parent=95 // pred_check_branch
          %898 = sbr.rel (%p896) target = $region112
        $region111: #{decoder_layer_forward.1} parent=95 // pred_region
          %s899 = smul.u32 2, %s48
          %p900 = scmp.lt.s32.totalorder %s899, 3
          %s901 = scalar_select %p900, %s899, 3
          %s902 = scalar_lea.vmem %s3, %s901
          %s903 = smul.u32 2, %s48
        $region112: #{decoder_layer_forward.1} parent=95 // pred_fallthru
          _
      $region96: #{decoder_layer_forward.1} parent=5 // pred_fallthru
        _
      %p904 = scmp.le.s32.totalorder 1, %s48
      %p905 = scmp.lt.s32.totalorder %s48, 3
      %p906 = pnand %p904, %p905
      %p907 = pneg %p906
      // Predicated region
      $region113: #{decoder_layer_forward.1} parent=5 // pred_check
        _
      $region114: #{decoder_layer_forward.1} parent=5 // pred_check_branch
        %909 = sbr.rel (%p906) target = $region116
      $region115: #{decoder_layer_forward.1} parent=5 // pred_region
        %s910 = ssub.s32 %s48, 1
        %s911 = sand.u32 %s61, 1
        %s912 = scalar_lea.sflag [#allocation4], %s911
        %s913 = sand.u32 %s61, 1
        %s914 = smul.addr %s913, 32
        %s915 = scalar_lea.vmem [#allocation3], %s914
        // Predicated region
        $region117: #{decoder_layer_forward.1} parent=115 // pred_check
          %p916 = pneg %p74
        $region118: #{decoder_layer_forward.1} parent=115 // pred_check_branch
          %918 = sbr.rel (%p916) target = $region120
        $region119: #{decoder_layer_forward.1} parent=115 // pred_region
          %919 = dma.done %s912, 512
        $region120: #{decoder_layer_forward.1} parent=115 // pred_fallthru
          _
        %s920 = sand.u32 %s53, 1
        %s921 = scalar_lea.sflag [#allocation7], %s920
        %s922 = sand.u32 %s87, 1
        %s923 = smul.addr %s922, 32
        %s924 = scalar_lea.vmem [#allocation6], %s923
        // Predicated region
        $region121: #{decoder_layer_forward.1} parent=115 // pred_check
          %p925 = pneg %p100
        $region122: #{decoder_layer_forward.1} parent=115 // pred_check_branch
          %927 = sbr.rel (%p925) target = $region124
        $region123: #{decoder_layer_forward.1} parent=115 // pred_region
          %928 = dma.done %s921, 512
        $region124: #{decoder_layer_forward.1} parent=115 // pred_fallthru
          _
        // Predicated region
        $region125: #{decoder_layer_forward.1} parent=115 // pred_check
          %p929 = pneg %p173
        $region126: #{decoder_layer_forward.1} parent=115 // pred_check_branch
          %931 = sbr.rel (%p929) target = $region128
        $region127: #{decoder_layer_forward.1} parent=115 // pred_region
          %932 = dma.done [#allocation7], 32
        $region128: #{decoder_layer_forward.1} parent=115 // pred_fallthru
          _
        // Predicated region
        $region129: #{decoder_layer_forward.1} parent=115 // pred_check
          %p933 = pneg %p194
        $region130: #{decoder_layer_forward.1} parent=115 // pred_check_branch
          %935 = sbr.rel (%p933) target = $region132
        $region131: #{decoder_layer_forward.1} parent=115 // pred_region
          %936 = dma.done [#allocation10], 32
        $region132: #{decoder_layer_forward.1} parent=115 // pred_fallthru
          _
        // Predicated region
        $region133: #{decoder_layer_forward.1} parent=115 // pred_check
          %p937 = pneg %p215
        $region134: #{decoder_layer_forward.1} parent=115 // pred_check_branch
          %939 = sbr.rel (%p937) target = $region136
        $region135: #{decoder_layer_forward.1} parent=115 // pred_region
          %940 = dma.done [#allocation10], 12288
        $region136: #{decoder_layer_forward.1} parent=115 // pred_fallthru
          _
        // Predicated region
        $region137: #{decoder_layer_forward.1} parent=115 // pred_check
          %p941 = pneg %p257
        $region138: #{decoder_layer_forward.1} parent=115 // pred_check_branch
          %943 = sbr.rel (%p941) target = $region140
        $region139: #{decoder_layer_forward.1} parent=115 // pred_region
          %944 = dma.done [#allocation13], 4096
        $region140: #{decoder_layer_forward.1} parent=115 // pred_fallthru
          _
        // Predicated region
        $region141: #{decoder_layer_forward.1} parent=115 // pred_check
          %p945 = pneg %p278
        $region142: #{decoder_layer_forward.1} parent=115 // pred_check_branch
          %947 = sbr.rel (%p945) target = $region144
        $region143: #{decoder_layer_forward.1} parent=115 // pred_region
          %948 = dma.done [#allocation13], 32
        $region144: #{decoder_layer_forward.1} parent=115 // pred_fallthru
          _
        // Predicated region
        $region145: #{decoder_layer_forward.1} parent=115 // pred_check
          %p949 = pneg %p299
        $region146: #{decoder_layer_forward.1} parent=115 // pred_check_branch
          %951 = sbr.rel (%p949) target = $region148
        $region147: #{decoder_layer_forward.1} parent=115 // pred_region
          %952 = dma.done [#allocation16], 32
        $region148: #{decoder_layer_forward.1} parent=115 // pred_fallthru
          _
        // Predicated region
        $region149: #{decoder_layer_forward.1} parent=115 // pred_check
          %p953 = pneg %p320
        $region150: #{decoder_layer_forward.1} parent=115 // pred_check_branch
          %955 = sbr.rel (%p953) target = $region152
        $region151: #{decoder_layer_forward.1} parent=115 // pred_region
          %956 = dma.done [#allocation16], 32
        $region152: #{decoder_layer_forward.1} parent=115 // pred_fallthru
          _
        // Predicated region
        $region153: #{decoder_layer_forward.1} parent=115 // pred_check
          %p957 = pneg %p341
        $region154: #{decoder_layer_forward.1} parent=115 // pred_check_branch
          %959 = sbr.rel (%p957) target = $region156
        $region155: #{decoder_layer_forward.1} parent=115 // pred_region
          %960 = dma.done [#allocation19], 4096
        $region156: #{decoder_layer_forward.1} parent=115 // pred_fallthru
          _
        // Predicated region
        $region157: #{decoder_layer_forward.1} parent=115 // pred_check
          %p961 = pneg %p362
        $region158: #{decoder_layer_forward.1} parent=115 // pred_check_branch
          %963 = sbr.rel (%p961) target = $region160
        $region159: #{decoder_layer_forward.1} parent=115 // pred_region
          %964 = dma.done [#allocation19], 32
        $region160: #{decoder_layer_forward.1} parent=115 // pred_fallthru
          _
        // Predicated region
        $region161: #{decoder_layer_forward.1} parent=115 // pred_check
          %p965 = pneg %p383
        $region162: #{decoder_layer_forward.1} parent=115 // pred_check_branch
          %967 = sbr.rel (%p965) target = $region164
        $region163: #{decoder_layer_forward.1} parent=115 // pred_region
          %968 = dma.done [#allocation22], 8192
        $region164: #{decoder_layer_forward.1} parent=115 // pred_fallthru
          _
        // Predicated region
        $region165: #{decoder_layer_forward.1} parent=115 // pred_check
          %p969 = pneg %p404
        $region166: #{decoder_layer_forward.1} parent=115 // pred_check_branch
          %971 = sbr.rel (%p969) target = $region168
        $region167: #{decoder_layer_forward.1} parent=115 // pred_region
          %972 = dma.done [#allocation22], 64
        $region168: #{decoder_layer_forward.1} parent=115 // pred_fallthru
          _
        // Predicated region
        $region169: #{decoder_layer_forward.1} parent=115 // pred_check
          %p973 = pneg %p425
        $region170: #{decoder_layer_forward.1} parent=115 // pred_check_branch
          %975 = sbr.rel (%p973) target = $region172
        $region171: #{decoder_layer_forward.1} parent=115 // pred_region
          %976 = dma.done [#allocation25], 4096
        $region172: #{decoder_layer_forward.1} parent=115 // pred_fallthru
          _
        // Predicated region
        $region173: #{decoder_layer_forward.1} parent=115 // pred_check
          %p977 = pneg %p446
        $region174: #{decoder_layer_forward.1} parent=115 // pred_check_branch
          %979 = sbr.rel (%p977) target = $region176
        $region175: #{decoder_layer_forward.1} parent=115 // pred_region
          %980 = dma.done [#allocation25], 32
        $region176: #{decoder_layer_forward.1} parent=115 // pred_fallthru
          _
        // Predicated region
        $region177: #{decoder_layer_forward.1} parent=115 // pred_check
          %p981 = pneg %p467
        $region178: #{decoder_layer_forward.1} parent=115 // pred_check_branch
          %983 = sbr.rel (%p981) target = $region180
        $region179: #{decoder_layer_forward.1} parent=115 // pred_region
          %984 = dma.done [#allocation28], 32
        $region180: #{decoder_layer_forward.1} parent=115 // pred_fallthru
          _
        // Predicated region
        $region181: #{decoder_layer_forward.1} parent=115 // pred_check
          %p985 = pneg %p488
        $region182: #{decoder_layer_forward.1} parent=115 // pred_check_branch
          %987 = sbr.rel (%p985) target = $region184
        $region183: #{decoder_layer_forward.1} parent=115 // pred_region
          %988 = dma.done [#allocation28], 32
        $region184: #{decoder_layer_forward.1} parent=115 // pred_fallthru
          _
        // Predicated region
        $region185: #{decoder_layer_forward.1} parent=115 // pred_check
          %p989 = pneg %p509
        $region186: #{decoder_layer_forward.1} parent=115 // pred_check_branch
          %991 = sbr.rel (%p989) target = $region188
        $region187: #{decoder_layer_forward.1} parent=115 // pred_region
          %992 = dma.done [#allocation31], 8192
        $region188: #{decoder_layer_forward.1} parent=115 // pred_fallthru
          _
        // Predicated region
        $region189: #{decoder_layer_forward.1} parent=115 // pred_check
          %p993 = pneg %p530
        $region190: #{decoder_layer_forward.1} parent=115 // pred_check_branch
          %995 = sbr.rel (%p993) target = $region192
        $region191: #{decoder_layer_forward.1} parent=115 // pred_region
          %996 = dma.done [#allocation31], 64
        $region192: #{decoder_layer_forward.1} parent=115 // pred_fallthru
          _
        // Predicated region
        $region193: #{decoder_layer_forward.1} parent=115 // pred_check
          %p997 = pneg %p551
        $region194: #{decoder_layer_forward.1} parent=115 // pred_check_branch
          %999 = sbr.rel (%p997) target = $region196
        $region195: #{decoder_layer_forward.1} parent=115 // pred_region
          %1000 = dma.done [#allocation34], 8192
        $region196: #{decoder_layer_forward.1} parent=115 // pred_fallthru
          _
        // Predicated region
        $region197: #{decoder_layer_forward.1} parent=115 // pred_check
          %p1001 = pneg %p572
        $region198: #{decoder_layer_forward.1} parent=115 // pred_check_branch
          %1003 = sbr.rel (%p1001) target = $region200
        $region199: #{decoder_layer_forward.1} parent=115 // pred_region
          %1004 = dma.done [#allocation34], 32
        $region200: #{decoder_layer_forward.1} parent=115 // pred_fallthru
          _
        %s1005 = sand.u32 %s61, 1
        %s1006 = scalar_lea.sflag [#allocation4], %s1005
        %s1007 = sand.u32 %s61, 1
        %s1008 = smul.addr %s1007, 32
        %s1009 = scalar_lea.vmem [#allocation3], %s1008
        %p1010 = pneg %p74
        %p1011 = pneg %p71
        %s1012 = sand.u32 %s53, 1
        %s1013 = scalar_lea.sflag [#allocation7], %s1012
        %s1014 = sand.u32 %s87, 1
        %s1015 = smul.addr %s1014, 32
        %s1016 = scalar_lea.vmem [#allocation6], %s1015
        %p1017 = pneg %p100
        %p1018 = pneg %p97
        %s1019 = smul.u32 2, %s53
        %p1020 = scmp.lt.s32.totalorder %s1019, 3
        %s1021 = scalar_select %p1020, %s1019, 3
        %s1022 = smul.addr %s1021, 8
        %s1023 = scalar_lea.vmem %s2, %s1022
        %p1024 = pneg %p126
        %p1025 = pneg %p123
        %s1026 = smul.u32 2, %s53
        %p1027 = scmp.lt.s32.totalorder %s1026, 3
        %s1028 = scalar_select %p1027, %s1026, 3
        %s1029 = scalar_lea.vmem %s3, %s1028
        %p1030 = pneg %p152
        %p1031 = pneg %p149
        %p1032 = pneg %p173
        %p1033 = pneg %p170
        %p1034 = pneg %p194
        %p1035 = pneg %p191
        %p1036 = pneg %p215
        %p1037 = pneg %p212
        %p1038 = pneg %p236
        %p1039 = pneg %p233
        %p1040 = pneg %p257
        %p1041 = pneg %p254
        %p1042 = pneg %p278
        %p1043 = pneg %p275
        %p1044 = pneg %p299
        %p1045 = pneg %p296
        %p1046 = pneg %p320
        %p1047 = pneg %p317
        %p1048 = pneg %p341
        %p1049 = pneg %p338
        %p1050 = pneg %p362
        %p1051 = pneg %p359
        %p1052 = pneg %p383
        %p1053 = pneg %p380
        %p1054 = pneg %p404
        %p1055 = pneg %p401
        %p1056 = pneg %p425
        %p1057 = pneg %p422
        %p1058 = pneg %p446
        %p1059 = pneg %p443
        %p1060 = pneg %p467
        %p1061 = pneg %p464
        %p1062 = pneg %p488
        %p1063 = pneg %p485
        %p1064 = pneg %p509
        %p1065 = pneg %p506
        %p1066 = pneg %p530
        %p1067 = pneg %p527
        %p1068 = pneg %p551
        %p1069 = pneg %p548
        %p1070 = pneg %p572
        %p1071 = pneg %p569
        %p1072 = pneg %p598
        %p1073 = pneg %p595
        %s1074 = sand.u32 %s585, 1
        %s1075 = scalar_lea.sflag [#allocation5], %s1074
        %s1076 = sand.u32 %s585, 1
        %s1077 = smul.addr %s1076, 32
        %s1078 = scalar_lea.vmem [#allocation36], %s1077
        %s1079 = smul.u32 2, %s53
        %s1080 = smul.u32 2, %s53
        %s1081 = smul.u32 2, %s53
        %p1082 = scmp.lt.s32.totalorder %s1081, 3
        %s1083 = scalar_select %p1082, %s1081, 3
        %s1084 = smul.addr %s1083, 8
        %s1085 = scalar_lea.vmem %s2, %s1084
        %s1086 = smul.u32 2, %s53
        %s1087 = smul.u32 2, %s53
        %p1088 = scmp.lt.s32.totalorder %s1087, 3
        %s1089 = scalar_select %p1088, %s1087, 3
        %s1090 = scalar_lea.vmem %s3, %s1089
        %s1091 = smul.u32 2, %s53
        %s1092 = smul.u32 2, %s53
        %v1094 = vld [vmem:[%s915] sm:$0xff]
        %v1095 = vld [vmem:[%s915 + $0x8] sm:$0xff]
        %v1096 = vld [vmem:[%s915 + $0x10] sm:$0xff]
        %v1097 = vld [vmem:[%s915 + $0x18] sm:$0xff]
        %v1098 = vld [vmem:[%s924] sm:$0xff]
        %v1099 = vld [vmem:[%s924 + $0x8] sm:$0xff]
        %v1100 = vld [vmem:[%s924 + $0x10] sm:$0xff]
        %v1101 = vld [vmem:[%s924 + $0x18] sm:$0xff]
        %v1102 = vld [vmem:[#allocation8] sm:$0x3]
        %v1103 = vld [vmem:[#allocation9] sm:$0x3]
        %v1104 = vadd.f32 %v1094, %v1095
        %1105 = vadd.xlane.f32.xlu0 %v1104
        %v1106 = vpop.xlane.xlu0 %1105
        %v1107 = vadd.f32 %v1096, %v1097
        %1108 = vadd.xlane.f32.xlu0 %v1107
        %v1109 = vpop.xlane.xlu0 %1108
        %v1110 = vrcp.pop 256.0
        %v1111 = vmul.f32 %v1106, %v1110
        %v1112 = vmul.f32 %v1109, %v1110
        %v1113 = vsub.f32 %v1094, %v1111
        %v1114 = vsub.f32 %v1095, %v1111
        %v1115 = vsub.f32 %v1096, %v1112
        %v1116 = vsub.f32 %v1097, %v1112
        %v1117 = vmul.f32 %v1113, %v1113
        %v1118 = vmul.f32 %v1114, %v1114
        %v1119 = vmul.f32 %v1115, %v1115
        %v1120 = vmul.f32 %v1116, %v1116
        %v1121 = vadd.f32 %v1117, %v1118
        %1122 = vadd.xlane.f32.xlu0 %v1121
        %v1123 = vpop.xlane.xlu0 %1122
        %v1124 = vadd.f32 %v1119, %v1120
        %1125 = vadd.xlane.f32.xlu0 %v1124
        %v1126 = vpop.xlane.xlu0 %1125
        %v1127 = vrcp.pop 255.0
        %v1128 = vmul.f32 %v1123, %v1127
        %v1129 = vmul.f32 %v1126, %v1127
        %v1131 = vlaneseq
        %v1132 = vshrl.u32 %v1131, 7
        %v1133 = vsub.s32 0, %v1132
        %v1134 = vrot.slane %v1102, %v1133
        %v1135 = vlaneseq
        %v1136 = vshrl.u32 %v1135, 7
        %v1137 = vsub.s32 1, %v1136
        %v1138 = vrot.slane %v1102, %v1137
        %v1141 = vmul.f32 %v1134, %v1113
        %v1142 = vmul.f32 %v1138, %v1114
        %v1143 = vmul.f32 %v1134, %v1115
        %v1144 = vmul.f32 %v1138, %v1116
        %v1145 = vrsqrt.pop %v1128
        %v1146 = vmul.f32 %v1128, %v1145
        %vm1147 = vcmp.eq.f32.partialorder %v1128, inf
        %v1148 = vsel %vm1147, %v1128, %v1146
        %vm1149 = vcmp.eq.f32.partialorder %v1128, 0.0
        %v1150 = vand.u32 %v1128, 2147483648
        %v1151 = vsel %vm1149, %v1150, %v1148
        %v1152 = vrsqrt.pop %v1129
        %v1153 = vmul.f32 %v1129, %v1152
        %vm1154 = vcmp.eq.f32.partialorder %v1129, inf
        %v1155 = vsel %vm1154, %v1129, %v1153
        %vm1156 = vcmp.eq.f32.partialorder %v1129, 0.0
        %v1157 = vand.u32 %v1129, 2147483648
        %v1158 = vsel %vm1156, %v1157, %v1155
        %v1159 = vadd.f32 %v1151, 1e-06
        %v1160 = vadd.f32 %v1158, 1e-06
        %v1161 = vrcp.pop %v1159
        %v1162 = vmul.f32 %v1141, %v1161
        %v1163 = vmul.f32 %v1142, %v1161
        %v1164 = vrcp.pop %v1160
        %v1165 = vmul.f32 %v1143, %v1164
        %v1166 = vmul.f32 %v1144, %v1164
        %v1168 = vlaneseq
        %v1169 = vshrl.u32 %v1168, 7
        %v1170 = vsub.s32 0, %v1169
        %v1171 = vrot.slane %v1103, %v1170
        %v1172 = vlaneseq
        %v1173 = vshrl.u32 %v1172, 7
        %v1174 = vsub.s32 1, %v1173
        %v1175 = vrot.slane %v1103, %v1174
        %v1178 = vadd.f32 %v1162, %v1171
        %v1179 = vadd.f32 %v1163, %v1175
        %v1180 = vadd.f32 %v1165, %v1171
        %v1181 = vadd.f32 %v1166, %v1175
        %v1182 = vpack.c.bf16 %v1180, %v1178
        %v1183 = vpack.c.bf16 %v1181, %v1179
        %v1184 = vld [vmem:[#allocation11] sm:$0xff]
        %v1185 = vld [vmem:[#allocation11 + $0x8] sm:$0xff]
        %v1186 = vld [vmem:[#allocation11 + $0x10] sm:$0xff]
        %v1187 = vld [vmem:[#allocation11 + $0x18] sm:$0xff]
        %v1188 = vld [vmem:[#allocation11 + $0x20] sm:$0xff]
        %v1189 = vld [vmem:[#allocation11 + $0x28] sm:$0xff]
        %v1190 = vld [vmem:[#allocation11 + $0x30] sm:$0xff]
        %v1191 = vld [vmem:[#allocation11 + $0x38] sm:$0xff]
        %v1192 = vld [vmem:[#allocation11 + $0x40] sm:$0xff]
        %v1193 = vld [vmem:[#allocation11 + $0x48] sm:$0xff]
        %v1194 = vld [vmem:[#allocation11 + $0x50] sm:$0xff]
        %v1195 = vld [vmem:[#allocation11 + $0x58] sm:$0xff]
        %v1196 = vld [vmem:[#allocation11 + $0x60] sm:$0xff]
        %v1197 = vld [vmem:[#allocation11 + $0x68] sm:$0xff]
        %v1198 = vld [vmem:[#allocation11 + $0x70] sm:$0xff]
        %v1199 = vld [vmem:[#allocation11 + $0x78] sm:$0xff]
        %v1200 = vld [vmem:[#allocation11 + $0x80] sm:$0xff]
        %v1201 = vld [vmem:[#allocation11 + $0x88] sm:$0xff]
        %v1202 = vld [vmem:[#allocation11 + $0x90] sm:$0xff]
        %v1203 = vld [vmem:[#allocation11 + $0x98] sm:$0xff]
        %v1204 = vld [vmem:[#allocation11 + $0xa0] sm:$0xff]
        %v1205 = vld [vmem:[#allocation11 + $0xa8] sm:$0xff]
        %v1206 = vld [vmem:[#allocation11 + $0xb0] sm:$0xff]
        %v1207 = vld [vmem:[#allocation11 + $0xb8] sm:$0xff]
        %v1208 = vld [vmem:[#allocation11 + $0xc0] sm:$0xff]
        %v1209 = vld [vmem:[#allocation11 + $0xc8] sm:$0xff]
        %v1210 = vld [vmem:[#allocation11 + $0xd0] sm:$0xff]
        %v1211 = vld [vmem:[#allocation11 + $0xd8] sm:$0xff]
        %v1212 = vld [vmem:[#allocation11 + $0xe0] sm:$0xff]
        %v1213 = vld [vmem:[#allocation11 + $0xe8] sm:$0xff]
        %v1214 = vld [vmem:[#allocation11 + $0xf0] sm:$0xff]
        %v1215 = vld [vmem:[#allocation11 + $0xf8] sm:$0xff]
        %v1216 = vld [vmem:[#allocation11 + $0x100] sm:$0xff]
        %v1217 = vld [vmem:[#allocation11 + $0x108] sm:$0xff]
        %v1218 = vld [vmem:[#allocation11 + $0x110] sm:$0xff]
        %v1219 = vld [vmem:[#allocation11 + $0x118] sm:$0xff]
        %v1220 = vld [vmem:[#allocation11 + $0x120] sm:$0xff]
        %v1221 = vld [vmem:[#allocation11 + $0x128] sm:$0xff]
        %v1222 = vld [vmem:[#allocation11 + $0x130] sm:$0xff]
        %v1223 = vld [vmem:[#allocation11 + $0x138] sm:$0xff]
        %v1224 = vld [vmem:[#allocation11 + $0x140] sm:$0xff]
        %v1225 = vld [vmem:[#allocation11 + $0x148] sm:$0xff]
        %v1226 = vld [vmem:[#allocation11 + $0x150] sm:$0xff]
        %v1227 = vld [vmem:[#allocation11 + $0x158] sm:$0xff]
        %v1228 = vld [vmem:[#allocation11 + $0x160] sm:$0xff]
        %v1229 = vld [vmem:[#allocation11 + $0x168] sm:$0xff]
        %v1230 = vld [vmem:[#allocation11 + $0x170] sm:$0xff]
        %v1231 = vld [vmem:[#allocation11 + $0x178] sm:$0xff]
        %v1232 = vld [vmem:[#allocation11 + $0x180] sm:$0xff]
        %v1233 = vld [vmem:[#allocation11 + $0x188] sm:$0xff]
        %v1234 = vld [vmem:[#allocation11 + $0x190] sm:$0xff]
        %v1235 = vld [vmem:[#allocation11 + $0x198] sm:$0xff]
        %v1236 = vld [vmem:[#allocation11 + $0x1a0] sm:$0xff]
        %v1237 = vld [vmem:[#allocation11 + $0x1a8] sm:$0xff]
        %v1238 = vld [vmem:[#allocation11 + $0x1b0] sm:$0xff]
        %v1239 = vld [vmem:[#allocation11 + $0x1b8] sm:$0xff]
        %v1240 = vld [vmem:[#allocation11 + $0x1c0] sm:$0xff]
        %v1241 = vld [vmem:[#allocation11 + $0x1c8] sm:$0xff]
        %v1242 = vld [vmem:[#allocation11 + $0x1d0] sm:$0xff]
        %v1243 = vld [vmem:[#allocation11 + $0x1d8] sm:$0xff]
        %v1244 = vld [vmem:[#allocation11 + $0x1e0] sm:$0xff]
        %v1245 = vld [vmem:[#allocation11 + $0x1e8] sm:$0xff]
        %v1246 = vld [vmem:[#allocation11 + $0x1f0] sm:$0xff]
        %v1247 = vld [vmem:[#allocation11 + $0x1f8] sm:$0xff]
        %v1248 = vld [vmem:[#allocation11 + $0x200] sm:$0xff]
        %v1249 = vld [vmem:[#allocation11 + $0x208] sm:$0xff]
        %v1250 = vld [vmem:[#allocation11 + $0x210] sm:$0xff]
        %v1251 = vld [vmem:[#allocation11 + $0x218] sm:$0xff]
        %v1252 = vld [vmem:[#allocation11 + $0x220] sm:$0xff]
        %v1253 = vld [vmem:[#allocation11 + $0x228] sm:$0xff]
        %v1254 = vld [vmem:[#allocation11 + $0x230] sm:$0xff]
        %v1255 = vld [vmem:[#allocation11 + $0x238] sm:$0xff]
        %v1256 = vld [vmem:[#allocation11 + $0x240] sm:$0xff]
        %v1257 = vld [vmem:[#allocation11 + $0x248] sm:$0xff]
        %v1258 = vld [vmem:[#allocation11 + $0x250] sm:$0xff]
        %v1259 = vld [vmem:[#allocation11 + $0x258] sm:$0xff]
        %v1260 = vld [vmem:[#allocation11 + $0x260] sm:$0xff]
        %v1261 = vld [vmem:[#allocation11 + $0x268] sm:$0xff]
        %v1262 = vld [vmem:[#allocation11 + $0x270] sm:$0xff]
        %v1263 = vld [vmem:[#allocation11 + $0x278] sm:$0xff]
        %v1264 = vld [vmem:[#allocation11 + $0x280] sm:$0xff]
        %v1265 = vld [vmem:[#allocation11 + $0x288] sm:$0xff]
        %v1266 = vld [vmem:[#allocation11 + $0x290] sm:$0xff]
        %v1267 = vld [vmem:[#allocation11 + $0x298] sm:$0xff]
        %v1268 = vld [vmem:[#allocation11 + $0x2a0] sm:$0xff]
        %v1269 = vld [vmem:[#allocation11 + $0x2a8] sm:$0xff]
        %v1270 = vld [vmem:[#allocation11 + $0x2b0] sm:$0xff]
        %v1271 = vld [vmem:[#allocation11 + $0x2b8] sm:$0xff]
        %v1272 = vld [vmem:[#allocation11 + $0x2c0] sm:$0xff]
        %v1273 = vld [vmem:[#allocation11 + $0x2c8] sm:$0xff]
        %v1274 = vld [vmem:[#allocation11 + $0x2d0] sm:$0xff]
        %v1275 = vld [vmem:[#allocation11 + $0x2d8] sm:$0xff]
        %v1276 = vld [vmem:[#allocation11 + $0x2e0] sm:$0xff]
        %v1277 = vld [vmem:[#allocation11 + $0x2e8] sm:$0xff]
        %v1278 = vld [vmem:[#allocation11 + $0x2f0] sm:$0xff]
        %v1279 = vld [vmem:[#allocation11 + $0x2f8] sm:$0xff]
        %v1280 = vld [vmem:[%s7] sm:$0x3f]
        %v1282 = vlaneseq
        %v1283 = vshrl.u32 %v1282, 7
        %v1284 = vsub.s32 0, %v1283
        %v1285 = vrot.slane %v1280, %v1284
        %v1286 = vlaneseq
        %v1287 = vshrl.u32 %v1286, 7
        %v1288 = vsub.s32 1, %v1287
        %v1289 = vrot.slane %v1280, %v1288
        %v1290 = vlaneseq
        %v1291 = vshrl.u32 %v1290, 7
        %v1292 = vsub.s32 2, %v1291
        %v1293 = vrot.slane %v1280, %v1292
        %v1294 = vlaneseq
        %v1295 = vshrl.u32 %v1294, 7
        %v1296 = vsub.s32 3, %v1295
        %v1297 = vrot.slane %v1280, %v1296
        %v1298 = vlaneseq
        %v1299 = vshrl.u32 %v1298, 7
        %v1300 = vsub.s32 4, %v1299
        %v1301 = vrot.slane %v1280, %v1300
        %v1302 = vlaneseq
        %v1303 = vshrl.u32 %v1302, 7
        %v1304 = vsub.s32 5, %v1303
        %v1305 = vrot.slane %v1280, %v1304
        %v1408 = vunpack.c.l.b16 %v1184
        %v1409 = vunpack.c.h.b16 %v1184
        %v1410 = vunpack.c.l.b16 %v1185
        %v1411 = vunpack.c.h.b16 %v1185
        %v1412 = vunpack.c.l.b16 %v1186
        %v1413 = vunpack.c.h.b16 %v1186
        %v1414 = vunpack.c.l.b16 %v1187
        %v1415 = vunpack.c.h.b16 %v1187
        %v1416 = vunpack.c.l.b16 %v1188
        %v1417 = vunpack.c.h.b16 %v1188
        %v1418 = vunpack.c.l.b16 %v1189
        %v1419 = vunpack.c.h.b16 %v1189
        %v1420 = vunpack.c.l.b16 %v1190
        %v1421 = vunpack.c.h.b16 %v1190
        %v1422 = vunpack.c.l.b16 %v1191
        %v1423 = vunpack.c.h.b16 %v1191
        %v1424 = vunpack.c.l.b16 %v1192
        %v1425 = vunpack.c.h.b16 %v1192
        %v1426 = vunpack.c.l.b16 %v1193
        %v1427 = vunpack.c.h.b16 %v1193
        %v1428 = vunpack.c.l.b16 %v1194
        %v1429 = vunpack.c.h.b16 %v1194
        %v1430 = vunpack.c.l.b16 %v1195
        %v1431 = vunpack.c.h.b16 %v1195
        %v1432 = vunpack.c.l.b16 %v1196
        %v1433 = vunpack.c.h.b16 %v1196
        %v1434 = vunpack.c.l.b16 %v1197
        %v1435 = vunpack.c.h.b16 %v1197
        %v1436 = vunpack.c.l.b16 %v1198
        %v1437 = vunpack.c.h.b16 %v1198
        %v1438 = vunpack.c.l.b16 %v1199
        %v1439 = vunpack.c.h.b16 %v1199
        %v1440 = vunpack.c.l.b16 %v1200
        %v1441 = vunpack.c.h.b16 %v1200
        %v1442 = vunpack.c.l.b16 %v1201
        %v1443 = vunpack.c.h.b16 %v1201
        %v1444 = vunpack.c.l.b16 %v1202
        %v1445 = vunpack.c.h.b16 %v1202
        %v1446 = vunpack.c.l.b16 %v1203
        %v1447 = vunpack.c.h.b16 %v1203
        %v1448 = vunpack.c.l.b16 %v1204
        %v1449 = vunpack.c.h.b16 %v1204
        %v1450 = vunpack.c.l.b16 %v1205
        %v1451 = vunpack.c.h.b16 %v1205
        %v1452 = vunpack.c.l.b16 %v1206
        %v1453 = vunpack.c.h.b16 %v1206
        %v1454 = vunpack.c.l.b16 %v1207
        %v1455 = vunpack.c.h.b16 %v1207
        %v1456 = vunpack.c.l.b16 %v1208
        %v1457 = vunpack.c.h.b16 %v1208
        %v1458 = vunpack.c.l.b16 %v1209
        %v1459 = vunpack.c.h.b16 %v1209
        %v1460 = vunpack.c.l.b16 %v1210
        %v1461 = vunpack.c.h.b16 %v1210
        %v1462 = vunpack.c.l.b16 %v1211
        %v1463 = vunpack.c.h.b16 %v1211
        %v1464 = vunpack.c.l.b16 %v1212
        %v1465 = vunpack.c.h.b16 %v1212
        %v1466 = vunpack.c.l.b16 %v1213
        %v1467 = vunpack.c.h.b16 %v1213
        %v1468 = vunpack.c.l.b16 %v1214
        %v1469 = vunpack.c.h.b16 %v1214
        %v1470 = vunpack.c.l.b16 %v1215
        %v1471 = vunpack.c.h.b16 %v1215
        %v1472 = vunpack.c.l.b16 %v1216
        %v1473 = vunpack.c.h.b16 %v1216
        %v1474 = vunpack.c.l.b16 %v1217
        %v1475 = vunpack.c.h.b16 %v1217
        %v1476 = vunpack.c.l.b16 %v1218
        %v1477 = vunpack.c.h.b16 %v1218
        %v1478 = vunpack.c.l.b16 %v1219
        %v1479 = vunpack.c.h.b16 %v1219
        %v1480 = vunpack.c.l.b16 %v1220
        %v1481 = vunpack.c.h.b16 %v1220
        %v1482 = vunpack.c.l.b16 %v1221
        %v1483 = vunpack.c.h.b16 %v1221
        %v1484 = vunpack.c.l.b16 %v1222
        %v1485 = vunpack.c.h.b16 %v1222
        %v1486 = vunpack.c.l.b16 %v1223
        %v1487 = vunpack.c.h.b16 %v1223
        %v1488 = vunpack.c.l.b16 %v1224
        %v1489 = vunpack.c.h.b16 %v1224
        %v1490 = vunpack.c.l.b16 %v1225
        %v1491 = vunpack.c.h.b16 %v1225
        %v1492 = vunpack.c.l.b16 %v1226
        %v1493 = vunpack.c.h.b16 %v1226
        %v1494 = vunpack.c.l.b16 %v1227
        %v1495 = vunpack.c.h.b16 %v1227
        %v1496 = vunpack.c.l.b16 %v1228
        %v1497 = vunpack.c.h.b16 %v1228
        %v1498 = vunpack.c.l.b16 %v1229
        %v1499 = vunpack.c.h.b16 %v1229
        %v1500 = vunpack.c.l.b16 %v1230
        %v1501 = vunpack.c.h.b16 %v1230
        %v1502 = vunpack.c.l.b16 %v1231
        %v1503 = vunpack.c.h.b16 %v1231
        %v1504 = vunpack.c.l.b16 %v1232
        %v1505 = vunpack.c.h.b16 %v1232
        %v1506 = vunpack.c.l.b16 %v1233
        %v1507 = vunpack.c.h.b16 %v1233
        %v1508 = vunpack.c.l.b16 %v1234
        %v1509 = vunpack.c.h.b16 %v1234
        %v1510 = vunpack.c.l.b16 %v1235
        %v1511 = vunpack.c.h.b16 %v1235
        %v1512 = vunpack.c.l.b16 %v1236
        %v1513 = vunpack.c.h.b16 %v1236
        %v1514 = vunpack.c.l.b16 %v1237
        %v1515 = vunpack.c.h.b16 %v1237
        %v1516 = vunpack.c.l.b16 %v1238
        %v1517 = vunpack.c.h.b16 %v1238
        %v1518 = vunpack.c.l.b16 %v1239
        %v1519 = vunpack.c.h.b16 %v1239
        %v1520 = vunpack.c.l.b16 %v1240
        %v1521 = vunpack.c.h.b16 %v1240
        %v1522 = vunpack.c.l.b16 %v1241
        %v1523 = vunpack.c.h.b16 %v1241
        %v1524 = vunpack.c.l.b16 %v1242
        %v1525 = vunpack.c.h.b16 %v1242
        %v1526 = vunpack.c.l.b16 %v1243
        %v1527 = vunpack.c.h.b16 %v1243
        %v1528 = vunpack.c.l.b16 %v1244
        %v1529 = vunpack.c.h.b16 %v1244
        %v1530 = vunpack.c.l.b16 %v1245
        %v1531 = vunpack.c.h.b16 %v1245
        %v1532 = vunpack.c.l.b16 %v1246
        %v1533 = vunpack.c.h.b16 %v1246
        %v1534 = vunpack.c.l.b16 %v1247
        %v1535 = vunpack.c.h.b16 %v1247
        %v1536 = vunpack.c.l.b16 %v1248
        %v1537 = vunpack.c.h.b16 %v1248
        %v1538 = vunpack.c.l.b16 %v1249
        %v1539 = vunpack.c.h.b16 %v1249
        %v1540 = vunpack.c.l.b16 %v1250
        %v1541 = vunpack.c.h.b16 %v1250
        %v1542 = vunpack.c.l.b16 %v1251
        %v1543 = vunpack.c.h.b16 %v1251
        %v1544 = vunpack.c.l.b16 %v1252
        %v1545 = vunpack.c.h.b16 %v1252
        %v1546 = vunpack.c.l.b16 %v1253
        %v1547 = vunpack.c.h.b16 %v1253
        %v1548 = vunpack.c.l.b16 %v1254
        %v1549 = vunpack.c.h.b16 %v1254
        %v1550 = vunpack.c.l.b16 %v1255
        %v1551 = vunpack.c.h.b16 %v1255
        %v1552 = vunpack.c.l.b16 %v1256
        %v1553 = vunpack.c.h.b16 %v1256
        %v1554 = vunpack.c.l.b16 %v1257
        %v1555 = vunpack.c.h.b16 %v1257
        %v1556 = vunpack.c.l.b16 %v1258
        %v1557 = vunpack.c.h.b16 %v1258
        %v1558 = vunpack.c.l.b16 %v1259
        %v1559 = vunpack.c.h.b16 %v1259
        %v1560 = vunpack.c.l.b16 %v1260
        %v1561 = vunpack.c.h.b16 %v1260
        %v1562 = vunpack.c.l.b16 %v1261
        %v1563 = vunpack.c.h.b16 %v1261
        %v1564 = vunpack.c.l.b16 %v1262
        %v1565 = vunpack.c.h.b16 %v1262
        %v1566 = vunpack.c.l.b16 %v1263
        %v1567 = vunpack.c.h.b16 %v1263
        %v1568 = vunpack.c.l.b16 %v1264
        %v1569 = vunpack.c.h.b16 %v1264
        %v1570 = vunpack.c.l.b16 %v1265
        %v1571 = vunpack.c.h.b16 %v1265
        %v1572 = vunpack.c.l.b16 %v1266
        %v1573 = vunpack.c.h.b16 %v1266
        %v1574 = vunpack.c.l.b16 %v1267
        %v1575 = vunpack.c.h.b16 %v1267
        %v1576 = vunpack.c.l.b16 %v1268
        %v1577 = vunpack.c.h.b16 %v1268
        %v1578 = vunpack.c.l.b16 %v1269
        %v1579 = vunpack.c.h.b16 %v1269
        %v1580 = vunpack.c.l.b16 %v1270
        %v1581 = vunpack.c.h.b16 %v1270
        %v1582 = vunpack.c.l.b16 %v1271
        %v1583 = vunpack.c.h.b16 %v1271
        %v1584 = vunpack.c.l.b16 %v1272
        %v1585 = vunpack.c.h.b16 %v1272
        %v1586 = vunpack.c.l.b16 %v1273
        %v1587 = vunpack.c.h.b16 %v1273
        %v1588 = vunpack.c.l.b16 %v1274
        %v1589 = vunpack.c.h.b16 %v1274
        %v1590 = vunpack.c.l.b16 %v1275
        %v1591 = vunpack.c.h.b16 %v1275
        %v1592 = vunpack.c.l.b16 %v1276
        %v1593 = vunpack.c.h.b16 %v1276
        %v1594 = vunpack.c.l.b16 %v1277
        %v1595 = vunpack.c.h.b16 %v1277
        %v1596 = vunpack.c.l.b16 %v1278
        %v1597 = vunpack.c.h.b16 %v1278
        %v1598 = vunpack.c.l.b16 %v1279
        %v1599 = vunpack.c.h.b16 %v1279
        %v1600 = vpack.c.b16 %v1414, %v1408
        %v1601 = vpack.c.b16 %v1415, %v1409
        %v1602 = vpack.c.b16 %v1416, %v1410
        %v1603 = vpack.c.b16 %v1417, %v1411
        %v1604 = vpack.c.b16 %v1418, %v1412
        %v1605 = vpack.c.b16 %v1419, %v1413
        %v1606 = vpack.c.b16 %v1426, %v1420
        %v1607 = vpack.c.b16 %v1427, %v1421
        %v1608 = vpack.c.b16 %v1428, %v1422
        %v1609 = vpack.c.b16 %v1429, %v1423
        %v1610 = vpack.c.b16 %v1430, %v1424
        %v1611 = vpack.c.b16 %v1431, %v1425
        %v1612 = vpack.c.b16 %v1438, %v1432
        %v1613 = vpack.c.b16 %v1439, %v1433
        %v1614 = vpack.c.b16 %v1440, %v1434
        %v1615 = vpack.c.b16 %v1441, %v1435
        %v1616 = vpack.c.b16 %v1442, %v1436
        %v1617 = vpack.c.b16 %v1443, %v1437
        %v1618 = vpack.c.b16 %v1450, %v1444
        %v1619 = vpack.c.b16 %v1451, %v1445
        %v1620 = vpack.c.b16 %v1452, %v1446
        %v1621 = vpack.c.b16 %v1453, %v1447
        %v1622 = vpack.c.b16 %v1454, %v1448
        %v1623 = vpack.c.b16 %v1455, %v1449
        %v1624 = vpack.c.b16 %v1462, %v1456
        %v1625 = vpack.c.b16 %v1463, %v1457
        %v1626 = vpack.c.b16 %v1464, %v1458
        %v1627 = vpack.c.b16 %v1465, %v1459
        %v1628 = vpack.c.b16 %v1466, %v1460
        %v1629 = vpack.c.b16 %v1467, %v1461
        %v1630 = vpack.c.b16 %v1474, %v1468
        %v1631 = vpack.c.b16 %v1475, %v1469
        %v1632 = vpack.c.b16 %v1476, %v1470
        %v1633 = vpack.c.b16 %v1477, %v1471
        %v1634 = vpack.c.b16 %v1478, %v1472
        %v1635 = vpack.c.b16 %v1479, %v1473
        %v1636 = vpack.c.b16 %v1486, %v1480
        %v1637 = vpack.c.b16 %v1487, %v1481
        %v1638 = vpack.c.b16 %v1488, %v1482
        %v1639 = vpack.c.b16 %v1489, %v1483
        %v1640 = vpack.c.b16 %v1490, %v1484
        %v1641 = vpack.c.b16 %v1491, %v1485
        %v1642 = vpack.c.b16 %v1498, %v1492
        %v1643 = vpack.c.b16 %v1499, %v1493
        %v1644 = vpack.c.b16 %v1500, %v1494
        %v1645 = vpack.c.b16 %v1501, %v1495
        %v1646 = vpack.c.b16 %v1502, %v1496
        %v1647 = vpack.c.b16 %v1503, %v1497
        %v1648 = vpack.c.b16 %v1510, %v1504
        %v1649 = vpack.c.b16 %v1511, %v1505
        %v1650 = vpack.c.b16 %v1512, %v1506
        %v1651 = vpack.c.b16 %v1513, %v1507
        %v1652 = vpack.c.b16 %v1514, %v1508
        %v1653 = vpack.c.b16 %v1515, %v1509
        %v1654 = vpack.c.b16 %v1522, %v1516
        %v1655 = vpack.c.b16 %v1523, %v1517
        %v1656 = vpack.c.b16 %v1524, %v1518
        %v1657 = vpack.c.b16 %v1525, %v1519
        %v1658 = vpack.c.b16 %v1526, %v1520
        %v1659 = vpack.c.b16 %v1527, %v1521
        %v1660 = vpack.c.b16 %v1534, %v1528
        %v1661 = vpack.c.b16 %v1535, %v1529
        %v1662 = vpack.c.b16 %v1536, %v1530
        %v1663 = vpack.c.b16 %v1537, %v1531
        %v1664 = vpack.c.b16 %v1538, %v1532
        %v1665 = vpack.c.b16 %v1539, %v1533
        %v1666 = vpack.c.b16 %v1546, %v1540
        %v1667 = vpack.c.b16 %v1547, %v1541
        %v1668 = vpack.c.b16 %v1548, %v1542
        %v1669 = vpack.c.b16 %v1549, %v1543
        %v1670 = vpack.c.b16 %v1550, %v1544
        %v1671 = vpack.c.b16 %v1551, %v1545
        %v1672 = vpack.c.b16 %v1558, %v1552
        %v1673 = vpack.c.b16 %v1559, %v1553
        %v1674 = vpack.c.b16 %v1560, %v1554
        %v1675 = vpack.c.b16 %v1561, %v1555
        %v1676 = vpack.c.b16 %v1562, %v1556
        %v1677 = vpack.c.b16 %v1563, %v1557
        %v1678 = vpack.c.b16 %v1570, %v1564
        %v1679 = vpack.c.b16 %v1571, %v1565
        %v1680 = vpack.c.b16 %v1572, %v1566
        %v1681 = vpack.c.b16 %v1573, %v1567
        %v1682 = vpack.c.b16 %v1574, %v1568
        %v1683 = vpack.c.b16 %v1575, %v1569
        %v1684 = vpack.c.b16 %v1582, %v1576
        %v1685 = vpack.c.b16 %v1583, %v1577
        %v1686 = vpack.c.b16 %v1584, %v1578
        %v1687 = vpack.c.b16 %v1585, %v1579
        %v1688 = vpack.c.b16 %v1586, %v1580
        %v1689 = vpack.c.b16 %v1587, %v1581
        %v1690 = vpack.c.b16 %v1594, %v1588
        %v1691 = vpack.c.b16 %v1595, %v1589
        %v1692 = vpack.c.b16 %v1596, %v1590
        %v1693 = vpack.c.b16 %v1597, %v1591
        %v1694 = vpack.c.b16 %v1598, %v1592
        %v1695 = vpack.c.b16 %v1599, %v1593
        %1792 = vmatprep.subr.bf16.mxu0 %v1643
        %1793 = vmatpush1.bf16.msra.mxu0 %v1642
        %1794 = vmatprep.subr.bf16.mxu0 %v1637
        %1795 = vmatpush1.bf16.msra.mxu0 %v1636
        %1796 = vmatprep.subr.bf16.mxu0 %v1631
        %1797 = vmatpush1.bf16.msra.mxu0 %v1630
        %1798 = vmatprep.subr.bf16.mxu0 %v1625
        %1799 = vmatpush1.bf16.msra.mxu0 %v1624
        %1800 = vmatprep.subr.bf16.mxu0 %v1619
        %1801 = vmatpush1.bf16.msra.mxu0 %v1618
        %1802 = vmatprep.subr.bf16.mxu0 %v1613
        %1803 = vmatpush1.bf16.msra.mxu0 %v1612
        %1804 = vmatprep.subr.bf16.mxu0 %v1607
        %1805 = vmatpush1.bf16.msra.mxu0 %v1606
        %1806 = vmatprep.subr.bf16.mxu0 %v1601
        %1807 = vmatpush1.bf16.msra.mxu0 %v1600
        %1808 = vmatprep.subr.bf16.mxu0 %v1691
        %1809 = vmatpush2.bf16.msra.mxu0 %v1690
        %1810 = vmatprep.subr.bf16.mxu0 %v1685
        %1811 = vmatpush2.bf16.msra.mxu0 %v1684
        %1812 = vmatprep.subr.bf16.mxu0 %v1679
        %1813 = vmatpush2.bf16.msra.mxu0 %v1678
        %1814 = vmatprep.subr.bf16.mxu0 %v1673
        %1815 = vmatpush2.bf16.msra.mxu0 %v1672
        %1816 = vmatprep.subr.bf16.mxu0 %v1667
        %1817 = vmatpush2.bf16.msra.mxu0 %v1666
        %1818 = vmatprep.subr.bf16.mxu0 %v1661
        %1819 = vmatpush2.bf16.msra.mxu0 %v1660
        %1820 = vmatprep.subr.bf16.mxu0 %v1655
        %1821 = vmatpush2.bf16.msra.mxu0 %v1654
        %1822 = vmatprep.subr.bf16.mxu0 %v1649
        %1823 = vmatpush2.bf16.msra.mxu0 %v1648
        %1824 = vmatprep.mubr.bf16.mxu0 %v1183
        %1825 = vmatmul.mubr.bf16.gmra.mxu0 %v1182
        %v1826 = vpop.f32.mrf.mxu0
        %v1827 = vadd.f32 %v1285, %v1826
        %v1828 = vpop.f32.mrf.mxu0
        %v1829 = vadd.f32 %v1289, %v1828
        %v1830 = vpop.f32.mrf.mxu0
        %v1831 = vadd.f32 %v1285, %v1830
        %v1832 = vpop.f32.mrf.mxu0
        %v1833 = vadd.f32 %v1289, %v1832
        %1834 = vdwg.mxu0
        %1835 = vmatprep.subr.bf16.mxu0 %v1645
        %1836 = vmatpush1.bf16.msra.mxu0 %v1644
        %1837 = vmatprep.subr.bf16.mxu0 %v1639
        %1838 = vmatpush1.bf16.msra.mxu0 %v1638
        %1839 = vmatprep.subr.bf16.mxu0 %v1633
        %1840 = vmatpush1.bf16.msra.mxu0 %v1632
        %1841 = vmatprep.subr.bf16.mxu0 %v1627
        %1842 = vmatpush1.bf16.msra.mxu0 %v1626
        %1843 = vmatprep.subr.bf16.mxu0 %v1621
        %1844 = vmatpush1.bf16.msra.mxu0 %v1620
        %1845 = vmatprep.subr.bf16.mxu0 %v1615
        %1846 = vmatpush1.bf16.msra.mxu0 %v1614
        %1847 = vmatprep.subr.bf16.mxu0 %v1609
        %1848 = vmatpush1.bf16.msra.mxu0 %v1608
        %1849 = vmatprep.subr.bf16.mxu0 %v1603
        %1850 = vmatpush1.bf16.msra.mxu0 %v1602
        %1851 = vmatprep.subr.bf16.mxu0 %v1693
        %1852 = vmatpush2.bf16.msra.mxu0 %v1692
        %1853 = vmatprep.subr.bf16.mxu0 %v1687
        %1854 = vmatpush2.bf16.msra.mxu0 %v1686
        %1855 = vmatprep.subr.bf16.mxu0 %v1681
        %1856 = vmatpush2.bf16.msra.mxu0 %v1680
        %1857 = vmatprep.subr.bf16.mxu0 %v1675
        %1858 = vmatpush2.bf16.msra.mxu0 %v1674
        %1859 = vmatprep.subr.bf16.mxu0 %v1669
        %1860 = vmatpush2.bf16.msra.mxu0 %v1668
        %1861 = vmatprep.subr.bf16.mxu0 %v1663
        %1862 = vmatpush2.bf16.msra.mxu0 %v1662
        %1863 = vmatprep.subr.bf16.mxu0 %v1657
        %1864 = vmatpush2.bf16.msra.mxu0 %v1656
        %1865 = vmatprep.subr.bf16.mxu0 %v1651
        %1866 = vmatpush2.bf16.msra.mxu0 %v1650
        %1867 = vmatprep.mubr.bf16.mxu0 %v1183
        %1868 = vmatmul.mubr.bf16.gmra.mxu0 %v1182
        %v1869 = vpop.f32.mrf.mxu0
        %v1870 = vadd.f32 %v1293, %v1869
        %v1871 = vpop.f32.mrf.mxu0
        %v1872 = vadd.f32 %v1297, %v1871
        %v1873 = vpop.f32.mrf.mxu0
        %v1874 = vadd.f32 %v1293, %v1873
        %v1875 = vpop.f32.mrf.mxu0
        %v1876 = vadd.f32 %v1297, %v1875
        %1877 = vdwg.mxu0
        %1878 = vmatprep.subr.bf16.mxu0 %v1647
        %1879 = vmatpush1.bf16.msra.mxu0 %v1646
        %1880 = vmatprep.subr.bf16.mxu0 %v1641
        %1881 = vmatpush1.bf16.msra.mxu0 %v1640
        %1882 = vmatprep.subr.bf16.mxu0 %v1635
        %1883 = vmatpush1.bf16.msra.mxu0 %v1634
        %1884 = vmatprep.subr.bf16.mxu0 %v1629
        %1885 = vmatpush1.bf16.msra.mxu0 %v1628
        %1886 = vmatprep.subr.bf16.mxu0 %v1623
        %1887 = vmatpush1.bf16.msra.mxu0 %v1622
        %1888 = vmatprep.subr.bf16.mxu0 %v1617
        %1889 = vmatpush1.bf16.msra.mxu0 %v1616
        %1890 = vmatprep.subr.bf16.mxu0 %v1611
        %1891 = vmatpush1.bf16.msra.mxu0 %v1610
        %1892 = vmatprep.subr.bf16.mxu0 %v1605
        %1893 = vmatpush1.bf16.msra.mxu0 %v1604
        %1894 = vmatprep.subr.bf16.mxu0 %v1695
        %1895 = vmatpush2.bf16.msra.mxu0 %v1694
        %1896 = vmatprep.subr.bf16.mxu0 %v1689
        %1897 = vmatpush2.bf16.msra.mxu0 %v1688
        %1898 = vmatprep.subr.bf16.mxu0 %v1683
        %1899 = vmatpush2.bf16.msra.mxu0 %v1682
        %1900 = vmatprep.subr.bf16.mxu0 %v1677
        %1901 = vmatpush2.bf16.msra.mxu0 %v1676
        %1902 = vmatprep.subr.bf16.mxu0 %v1671
        %1903 = vmatpush2.bf16.msra.mxu0 %v1670
        %1904 = vmatprep.subr.bf16.mxu0 %v1665
        %1905 = vmatpush2.bf16.msra.mxu0 %v1664
        %1906 = vmatprep.subr.bf16.mxu0 %v1659
        %1907 = vmatpush2.bf16.msra.mxu0 %v1658
        %1908 = vmatprep.subr.bf16.mxu0 %v1653
        %1909 = vmatpush2.bf16.msra.mxu0 %v1652
        %1910 = vmatprep.mubr.bf16.mxu0 %v1183
        %1911 = vmatmul.mubr.bf16.gmra.mxu0 %v1182
        %v1912 = vpop.f32.mrf.mxu0
        %v1913 = vadd.f32 %v1301, %v1912
        %v1914 = vpop.f32.mrf.mxu0
        %v1915 = vadd.f32 %v1305, %v1914
        %v1916 = vpop.f32.mrf.mxu0
        %v1917 = vadd.f32 %v1301, %v1916
        %v1918 = vpop.f32.mrf.mxu0
        %v1919 = vadd.f32 %v1305, %v1918
        %1920 = vdwg.mxu0
        %v1921 = vmul.f32 %v1827, 0.088388346
        %v1922 = vmul.f32 %v1829, 0.088388346
        %v1923 = vmul.f32 %v1831, 0.088388346
        %v1924 = vmul.f32 %v1833, 0.088388346
        %v1925 = vpack.c.bf16 %v1923, %v1921
        %v1926 = vpack.c.bf16 %v1924, %v1922
        %v1927 = vpack.c.bf16 %v1874, %v1870
        %v1928 = vpack.c.bf16 %v1876, %v1872
        %v1929 = vpack.c.bf16 %v1917, %v1913
        %v1930 = vpack.c.bf16 %v1919, %v1915
        %v1931 = vld [vmem:[%s1085] sm:$0xff]
        %vm1932 = vcmp.eq.s32.totalorder %v1931, 0
        %1933 = vmatprep.subr.bf16.mxu0 0
        %1934 = vmatpush1.bf16.xpose.msra.mxu0 0
        %1935 = vmatprep.subr.bf16.mxu0 0
        %1936 = vmatpush1.bf16.xpose.msra.mxu0 0
        %1937 = vmatprep.subr.bf16.mxu0 0
        %1938 = vmatpush1.bf16.xpose.msra.mxu0 0
        %1939 = vmatprep.subr.bf16.mxu0 0
        %1940 = vmatpush1.bf16.xpose.msra.mxu0 0
        %1941 = vmatprep.subr.bf16.mxu0 0
        %1942 = vmatpush1.bf16.xpose.msra.mxu0 0
        %1943 = vmatprep.subr.bf16.mxu0 0
        %1944 = vmatpush1.bf16.xpose.msra.mxu0 0
        %1945 = vmatprep.subr.bf16.mxu0 0
        %1946 = vmatpush1.bf16.xpose.msra.mxu0 0
        %1947 = vmatprep.subr.bf16.mxu0 0
        %1948 = vmatpush1.bf16.xpose.msra.mxu0 %v1927
        %1949 = vmatprep.subr.bf16.mxu0 0
        %1950 = vmatpush2.bf16.xpose.msra.mxu0 0
        %1951 = vmatprep.subr.bf16.mxu0 0
        %1952 = vmatpush2.bf16.xpose.msra.mxu0 0
        %1953 = vmatprep.subr.bf16.mxu0 0
        %1954 = vmatpush2.bf16.xpose.msra.mxu0 0
        %1955 = vmatprep.subr.bf16.mxu0 0
        %1956 = vmatpush2.bf16.xpose.msra.mxu0 0
        %1957 = vmatprep.subr.bf16.mxu0 0
        %1958 = vmatpush2.bf16.xpose.msra.mxu0 0
        %1959 = vmatprep.subr.bf16.mxu0 0
        %1960 = vmatpush2.bf16.xpose.msra.mxu0 0
        %1961 = vmatprep.subr.bf16.mxu0 0
        %1962 = vmatpush2.bf16.xpose.msra.mxu0 0
        %1963 = vmatprep.subr.bf16.mxu0 0
        %1964 = vmatpush2.bf16.xpose.msra.mxu0 0
        %1965 = vmatprep.mubr.bf16.mxu0 0
        %1966 = vmatmul.mubr.bf16.gmra.mxu0 %v1925
        %v1967 = vpop.f32.mrf.mxu0
        %v1968 = vadd.f32 0.0, %v1967
        %v1969 = vpop.f32.mrf.mxu0
        %v1970 = vpop.f32.mrf.mxu0
        %v1971 = vpop.f32.mrf.mxu0
        %1972 = vdwg.mxu0
        %v1973 = vsel %vm1932, -1e+09, %v1968
        %vm1974 = vcmask 64512
        %v1975 = vsel %vm1974, %v1973, -inf
        %1976 = vmax.xlane.f32.xlu0 %v1975
        %v1977 = vpop.xlane.xlu0 %1976
        %v1978 = vsub.f32 %v1973, %v1977
        %v1979 = vmul.f32 %v1978, 1.442695
        %v1980 = vpow.pop %v1979
        %v1981 = vsel %vm1974, %v1980, 0.0
        %1982 = vadd.xlane.f32.xlu0 %v1981
        %v1983 = vpop.xlane.xlu0 %1982
        %v1984 = vrcp.pop %v1983
        %v1985 = vmul.f32 %v1980, %v1984
        %v1986 = vpack.c.bf16 %v1985, %v1985
        %v1988 = vsel %vm1974, %v1986, 0
        %vm1990 = vcmask 1043456
        %v1992 = vsel %vm1990, %v1929, 0
        %1994 = vmatprep.subr.bf16.mxu0 0
        %1995 = vmatpush1.bf16.msra.mxu0 0
        %1996 = vmatprep.subr.bf16.mxu0 0
        %1997 = vmatpush1.bf16.msra.mxu0 0
        %1998 = vmatprep.subr.bf16.mxu0 0
        %1999 = vmatpush1.bf16.msra.mxu0 0
        %2000 = vmatprep.subr.bf16.mxu0 0
        %2001 = vmatpush1.bf16.msra.mxu0 0
        %2002 = vmatprep.subr.bf16.mxu0 0
        %2003 = vmatpush1.bf16.msra.mxu0 0
        %2004 = vmatprep.subr.bf16.mxu0 0
        %2005 = vmatpush1.bf16.msra.mxu0 0
        %2006 = vmatprep.subr.bf16.mxu0 0
        %2007 = vmatpush1.bf16.msra.mxu0 0
        %2008 = vmatprep.subr.bf16.mxu0 0
        %2009 = vmatpush1.bf16.msra.mxu0 %v1992
        %2010 = vmatprep.subr.bf16.mxu0 0
        %2011 = vmatpush2.bf16.msra.mxu0 0
        %2012 = vmatprep.subr.bf16.mxu0 0
        %2013 = vmatpush2.bf16.msra.mxu0 0
        %2014 = vmatprep.subr.bf16.mxu0 0
        %2015 = vmatpush2.bf16.msra.mxu0 0
        %2016 = vmatprep.subr.bf16.mxu0 0
        %2017 = vmatpush2.bf16.msra.mxu0 0
        %2018 = vmatprep.subr.bf16.mxu0 0
        %2019 = vmatpush2.bf16.msra.mxu0 0
        %2020 = vmatprep.subr.bf16.mxu0 0
        %2021 = vmatpush2.bf16.msra.mxu0 0
        %2022 = vmatprep.subr.bf16.mxu0 0
        %2023 = vmatpush2.bf16.msra.mxu0 0
        %2024 = vmatprep.subr.bf16.mxu0 0
        %2025 = vmatpush2.bf16.msra.mxu0 0
        %2026 = vmatprep.mubr.bf16.mxu0 0
        %2027 = vmatmul.mubr.bf16.gmra.mxu0 %v1988
        %v2028 = vpop.f32.mrf.mxu0
        %v2029 = vadd.f32 0.0, %v2028
        %v2030 = vpop.f32.mrf.mxu0
        %v2031 = vpop.f32.mrf.mxu0
        %v2032 = vpop.f32.mrf.mxu0
        %2033 = vdwg.mxu0
        %2034 = vst [vmem:[#allocation2] sm:$0xff] %v2029
        %2035 = vmatprep.subr.bf16.mxu0 0
        %2036 = vmatpush1.bf16.xpose.msra.mxu0 0
        %2037 = vmatprep.subr.bf16.mxu0 0
        %2038 = vmatpush1.bf16.xpose.msra.mxu0 0
        %2039 = vmatprep.subr.bf16.mxu0 0
        %2040 = vmatpush1.bf16.xpose.msra.mxu0 0
        %2041 = vmatprep.subr.bf16.mxu0 0
        %2042 = vmatpush1.bf16.xpose.msra.mxu0 0
        %2043 = vmatprep.subr.bf16.mxu0 0
        %2044 = vmatpush1.bf16.xpose.msra.mxu0 0
        %2045 = vmatprep.subr.bf16.mxu0 0
        %2046 = vmatpush1.bf16.xpose.msra.mxu0 0
        %2047 = vmatprep.subr.bf16.mxu0 0
        %2048 = vmatpush1.bf16.xpose.msra.mxu0 0
        %2049 = vmatprep.subr.bf16.mxu0 0
        %2050 = vmatpush1.bf16.xpose.msra.mxu0 %v1928
        %2051 = vmatprep.subr.bf16.mxu0 0
        %2052 = vmatpush2.bf16.xpose.msra.mxu0 0
        %2053 = vmatprep.subr.bf16.mxu0 0
        %2054 = vmatpush2.bf16.xpose.msra.mxu0 0
        %2055 = vmatprep.subr.bf16.mxu0 0
        %2056 = vmatpush2.bf16.xpose.msra.mxu0 0
        %2057 = vmatprep.subr.bf16.mxu0 0
        %2058 = vmatpush2.bf16.xpose.msra.mxu0 0
        %2059 = vmatprep.subr.bf16.mxu0 0
        %2060 = vmatpush2.bf16.xpose.msra.mxu0 0
        %2061 = vmatprep.subr.bf16.mxu0 0
        %2062 = vmatpush2.bf16.xpose.msra.mxu0 0
        %2063 = vmatprep.subr.bf16.mxu0 0
        %2064 = vmatpush2.bf16.xpose.msra.mxu0 0
        %2065 = vmatprep.subr.bf16.mxu0 0
        %2066 = vmatpush2.bf16.xpose.msra.mxu0 0
        %2067 = vmatprep.mubr.bf16.mxu0 0
        %2068 = vmatmul.mubr.bf16.gmra.mxu0 %v1926
        %v2069 = vpop.f32.mrf.mxu0
        %v2070 = vadd.f32 0.0, %v2069
        %v2071 = vpop.f32.mrf.mxu0
        %v2072 = vpop.f32.mrf.mxu0
        %v2073 = vpop.f32.mrf.mxu0
        %2074 = vdwg.mxu0
        %v2075 = vsel %vm1932, -1e+09, %v2070
        %v2076 = vsel %vm1974, %v2075, -inf
        %2077 = vmax.xlane.f32.xlu0 %v2076
        %v2078 = vpop.xlane.xlu0 %2077
        %v2079 = vsub.f32 %v2075, %v2078
        %v2080 = vmul.f32 %v2079, 1.442695
        %v2081 = vpow.pop %v2080
        %v2082 = vsel %vm1974, %v2081, 0.0
        %2083 = vadd.xlane.f32.xlu0 %v2082
        %v2084 = vpop.xlane.xlu0 %2083
        %v2085 = vrcp.pop %v2084
        %v2086 = vmul.f32 %v2081, %v2085
        %v2087 = vpack.c.bf16 %v2086, %v2086
        %v2089 = vsel %vm1974, %v2087, 0
        %v2092 = vsel %vm1990, %v1930, 0
        %2094 = vmatprep.subr.bf16.mxu0 0
        %2095 = vmatpush1.bf16.msra.mxu0 0
        %2096 = vmatprep.subr.bf16.mxu0 0
        %2097 = vmatpush1.bf16.msra.mxu0 0
        %2098 = vmatprep.subr.bf16.mxu0 0
        %2099 = vmatpush1.bf16.msra.mxu0 0
        %2100 = vmatprep.subr.bf16.mxu0 0
        %2101 = vmatpush1.bf16.msra.mxu0 0
        %2102 = vmatprep.subr.bf16.mxu0 0
        %2103 = vmatpush1.bf16.msra.mxu0 0
        %2104 = vmatprep.subr.bf16.mxu0 0
        %2105 = vmatpush1.bf16.msra.mxu0 0
        %2106 = vmatprep.subr.bf16.mxu0 0
        %2107 = vmatpush1.bf16.msra.mxu0 0
        %2108 = vmatprep.subr.bf16.mxu0 0
        %2109 = vmatpush1.bf16.msra.mxu0 %v2092
        %2110 = vmatprep.subr.bf16.mxu0 0
        %2111 = vmatpush2.bf16.msra.mxu0 0
        %2112 = vmatprep.subr.bf16.mxu0 0
        %2113 = vmatpush2.bf16.msra.mxu0 0
        %2114 = vmatprep.subr.bf16.mxu0 0
        %2115 = vmatpush2.bf16.msra.mxu0 0
        %2116 = vmatprep.subr.bf16.mxu0 0
        %2117 = vmatpush2.bf16.msra.mxu0 0
        %2118 = vmatprep.subr.bf16.mxu0 0
        %2119 = vmatpush2.bf16.msra.mxu0 0
        %2120 = vmatprep.subr.bf16.mxu0 0
        %2121 = vmatpush2.bf16.msra.mxu0 0
        %2122 = vmatprep.subr.bf16.mxu0 0
        %2123 = vmatpush2.bf16.msra.mxu0 0
        %2124 = vmatprep.subr.bf16.mxu0 0
        %2125 = vmatpush2.bf16.msra.mxu0 0
        %2126 = vmatprep.mubr.bf16.mxu0 0
        %2127 = vmatmul.mubr.bf16.gmra.mxu0 %v2089
        %v2128 = vpop.f32.mrf.mxu0
        %v2129 = vadd.f32 0.0, %v2128
        %v2130 = vpop.f32.mrf.mxu0
        %v2131 = vpop.f32.mrf.mxu0
        %v2132 = vpop.f32.mrf.mxu0
        %2133 = vdwg.mxu0
        %2134 = vst [vmem:[#allocation2 + $0x8] sm:$0xff] %v2129
        %s2135 = scalar_lea.vmem %s1085, 8
        %v2136 = vld [vmem:[%s2135] sm:$0xff]
        %vm2137 = vcmp.eq.s32.totalorder %v2136, 0
        %v2139 = vrot.slane %v1925, 4
        %v2142 = vrot.slane %v1927, 4
        %2144 = vmatprep.subr.bf16.mxu0 0
        %2145 = vmatpush1.bf16.xpose.msra.mxu0 0
        %2146 = vmatprep.subr.bf16.mxu0 0
        %2147 = vmatpush1.bf16.xpose.msra.mxu0 0
        %2148 = vmatprep.subr.bf16.mxu0 0
        %2149 = vmatpush1.bf16.xpose.msra.mxu0 0
        %2150 = vmatprep.subr.bf16.mxu0 0
        %2151 = vmatpush1.bf16.xpose.msra.mxu0 0
        %2152 = vmatprep.subr.bf16.mxu0 0
        %2153 = vmatpush1.bf16.xpose.msra.mxu0 0
        %2154 = vmatprep.subr.bf16.mxu0 0
        %2155 = vmatpush1.bf16.xpose.msra.mxu0 0
        %2156 = vmatprep.subr.bf16.mxu0 0
        %2157 = vmatpush1.bf16.xpose.msra.mxu0 0
        %2158 = vmatprep.subr.bf16.mxu0 0
        %2159 = vmatpush1.bf16.xpose.msra.mxu0 %v2142
        %2160 = vmatprep.subr.bf16.mxu0 0
        %2161 = vmatpush2.bf16.xpose.msra.mxu0 0
        %2162 = vmatprep.subr.bf16.mxu0 0
        %2163 = vmatpush2.bf16.xpose.msra.mxu0 0
        %2164 = vmatprep.subr.bf16.mxu0 0
        %2165 = vmatpush2.bf16.xpose.msra.mxu0 0
        %2166 = vmatprep.subr.bf16.mxu0 0
        %2167 = vmatpush2.bf16.xpose.msra.mxu0 0
        %2168 = vmatprep.subr.bf16.mxu0 0
        %2169 = vmatpush2.bf16.xpose.msra.mxu0 0
        %2170 = vmatprep.subr.bf16.mxu0 0
        %2171 = vmatpush2.bf16.xpose.msra.mxu0 0
        %2172 = vmatprep.subr.bf16.mxu0 0
        %2173 = vmatpush2.bf16.xpose.msra.mxu0 0
        %2174 = vmatprep.subr.bf16.mxu0 0
        %2175 = vmatpush2.bf16.xpose.msra.mxu0 0
        %2176 = vmatprep.mubr.bf16.mxu0 0
        %2177 = vmatmul.mubr.bf16.gmra.mxu0 %v2139
        %v2178 = vpop.f32.mrf.mxu0
        %v2179 = vadd.f32 0.0, %v2178
        %v2180 = vpop.f32.mrf.mxu0
        %v2181 = vpop.f32.mrf.mxu0
        %v2182 = vpop.f32.mrf.mxu0
        %2183 = vdwg.mxu0
        %v2184 = vsel %vm2137, -1e+09, %v2179
        %v2185 = vsel %vm1974, %v2184, -inf
        %2186 = vmax.xlane.f32.xlu0 %v2185
        %v2187 = vpop.xlane.xlu0 %2186
        %v2188 = vsub.f32 %v2184, %v2187
        %v2189 = vmul.f32 %v2188, 1.442695
        %v2190 = vpow.pop %v2189
        %v2191 = vsel %vm1974, %v2190, 0.0
        %2192 = vadd.xlane.f32.xlu0 %v2191
        %v2193 = vpop.xlane.xlu0 %2192
        %v2194 = vrcp.pop %v2193
        %v2195 = vmul.f32 %v2190, %v2194
        %v2196 = vpack.c.bf16 %v2195, %v2195
        %v2198 = vrot.slane %v1929, 4
        %v2200 = vsel %vm1974, %v2196, 0
        %v2203 = vsel %vm1990, %v2198, 0
        %2205 = vmatprep.subr.bf16.mxu0 0
        %2206 = vmatpush1.bf16.msra.mxu0 0
        %2207 = vmatprep.subr.bf16.mxu0 0
        %2208 = vmatpush1.bf16.msra.mxu0 0
        %2209 = vmatprep.subr.bf16.mxu0 0
        %2210 = vmatpush1.bf16.msra.mxu0 0
        %2211 = vmatprep.subr.bf16.mxu0 0
        %2212 = vmatpush1.bf16.msra.mxu0 0
        %2213 = vmatprep.subr.bf16.mxu0 0
        %2214 = vmatpush1.bf16.msra.mxu0 0
        %2215 = vmatprep.subr.bf16.mxu0 0
        %2216 = vmatpush1.bf16.msra.mxu0 0
        %2217 = vmatprep.subr.bf16.mxu0 0
        %2218 = vmatpush1.bf16.msra.mxu0 0
        %2219 = vmatprep.subr.bf16.mxu0 0
        %2220 = vmatpush1.bf16.msra.mxu0 %v2203
        %2221 = vmatprep.subr.bf16.mxu0 0
        %2222 = vmatpush2.bf16.msra.mxu0 0
        %2223 = vmatprep.subr.bf16.mxu0 0
        %2224 = vmatpush2.bf16.msra.mxu0 0
        %2225 = vmatprep.subr.bf16.mxu0 0
        %2226 = vmatpush2.bf16.msra.mxu0 0
        %2227 = vmatprep.subr.bf16.mxu0 0
        %2228 = vmatpush2.bf16.msra.mxu0 0
        %2229 = vmatprep.subr.bf16.mxu0 0
        %2230 = vmatpush2.bf16.msra.mxu0 0
        %2231 = vmatprep.subr.bf16.mxu0 0
        %2232 = vmatpush2.bf16.msra.mxu0 0
        %2233 = vmatprep.subr.bf16.mxu0 0
        %2234 = vmatpush2.bf16.msra.mxu0 0
        %2235 = vmatprep.subr.bf16.mxu0 0
        %2236 = vmatpush2.bf16.msra.mxu0 0
        %2237 = vmatprep.mubr.bf16.mxu0 0
        %2238 = vmatmul.mubr.bf16.gmra.mxu0 %v2200
        %v2239 = vpop.f32.mrf.mxu0
        %v2240 = vadd.f32 0.0, %v2239
        %v2241 = vpop.f32.mrf.mxu0
        %v2242 = vpop.f32.mrf.mxu0
        %v2243 = vpop.f32.mrf.mxu0
        %2244 = vdwg.mxu0
        %2245 = vst [vmem:[#allocation2 + $0x10] sm:$0xff] %v2240
        %v2247 = vrot.slane %v1926, 4
        %v2250 = vrot.slane %v1928, 4
        %2252 = vmatprep.subr.bf16.mxu0 0
        %2253 = vmatpush1.bf16.xpose.msra.mxu0 0
        %2254 = vmatprep.subr.bf16.mxu0 0
        %2255 = vmatpush1.bf16.xpose.msra.mxu0 0
        %2256 = vmatprep.subr.bf16.mxu0 0
        %2257 = vmatpush1.bf16.xpose.msra.mxu0 0
        %2258 = vmatprep.subr.bf16.mxu0 0
        %2259 = vmatpush1.bf16.xpose.msra.mxu0 0
        %2260 = vmatprep.subr.bf16.mxu0 0
        %2261 = vmatpush1.bf16.xpose.msra.mxu0 0
        %2262 = vmatprep.subr.bf16.mxu0 0
        %2263 = vmatpush1.bf16.xpose.msra.mxu0 0
        %2264 = vmatprep.subr.bf16.mxu0 0
        %2265 = vmatpush1.bf16.xpose.msra.mxu0 0
        %2266 = vmatprep.subr.bf16.mxu0 0
        %2267 = vmatpush1.bf16.xpose.msra.mxu0 %v2250
        %2268 = vmatprep.subr.bf16.mxu0 0
        %2269 = vmatpush2.bf16.xpose.msra.mxu0 0
        %2270 = vmatprep.subr.bf16.mxu0 0
        %2271 = vmatpush2.bf16.xpose.msra.mxu0 0
        %2272 = vmatprep.subr.bf16.mxu0 0
        %2273 = vmatpush2.bf16.xpose.msra.mxu0 0
        %2274 = vmatprep.subr.bf16.mxu0 0
        %2275 = vmatpush2.bf16.xpose.msra.mxu0 0
        %2276 = vmatprep.subr.bf16.mxu0 0
        %2277 = vmatpush2.bf16.xpose.msra.mxu0 0
        %2278 = vmatprep.subr.bf16.mxu0 0
        %2279 = vmatpush2.bf16.xpose.msra.mxu0 0
        %2280 = vmatprep.subr.bf16.mxu0 0
        %2281 = vmatpush2.bf16.xpose.msra.mxu0 0
        %2282 = vmatprep.subr.bf16.mxu0 0
        %2283 = vmatpush2.bf16.xpose.msra.mxu0 0
        %2284 = vmatprep.mubr.bf16.mxu0 0
        %2285 = vmatmul.mubr.bf16.gmra.mxu0 %v2247
        %v2286 = vpop.f32.mrf.mxu0
        %v2287 = vadd.f32 0.0, %v2286
        %v2288 = vpop.f32.mrf.mxu0
        %v2289 = vpop.f32.mrf.mxu0
        %v2290 = vpop.f32.mrf.mxu0
        %2291 = vdwg.mxu0
        %v2292 = vsel %vm2137, -1e+09, %v2287
        %v2293 = vsel %vm1974, %v2292, -inf
        %2294 = vmax.xlane.f32.xlu0 %v2293
        %v2295 = vpop.xlane.xlu0 %2294
        %v2296 = vsub.f32 %v2292, %v2295
        %v2297 = vmul.f32 %v2296, 1.442695
        %v2298 = vpow.pop %v2297
        %v2299 = vsel %vm1974, %v2298, 0.0
        %2300 = vadd.xlane.f32.xlu0 %v2299
        %v2301 = vpop.xlane.xlu0 %2300
        %v2302 = vrcp.pop %v2301
        %v2303 = vmul.f32 %v2298, %v2302
        %v2304 = vpack.c.bf16 %v2303, %v2303
        %v2306 = vrot.slane %v1930, 4
        %v2308 = vsel %vm1974, %v2304, 0
        %v2311 = vsel %vm1990, %v2306, 0
        %2313 = vmatprep.subr.bf16.mxu0 0
        %2314 = vmatpush1.bf16.msra.mxu0 0
        %2315 = vmatprep.subr.bf16.mxu0 0
        %2316 = vmatpush1.bf16.msra.mxu0 0
        %2317 = vmatprep.subr.bf16.mxu0 0
        %2318 = vmatpush1.bf16.msra.mxu0 0
        %2319 = vmatprep.subr.bf16.mxu0 0
        %2320 = vmatpush1.bf16.msra.mxu0 0
        %2321 = vmatprep.subr.bf16.mxu0 0
        %2322 = vmatpush1.bf16.msra.mxu0 0
        %2323 = vmatprep.subr.bf16.mxu0 0
        %2324 = vmatpush1.bf16.msra.mxu0 0
        %2325 = vmatprep.subr.bf16.mxu0 0
        %2326 = vmatpush1.bf16.msra.mxu0 0
        %2327 = vmatprep.subr.bf16.mxu0 0
        %2328 = vmatpush1.bf16.msra.mxu0 %v2311
        %2329 = vmatprep.subr.bf16.mxu0 0
        %2330 = vmatpush2.bf16.msra.mxu0 0
        %2331 = vmatprep.subr.bf16.mxu0 0
        %2332 = vmatpush2.bf16.msra.mxu0 0
        %2333 = vmatprep.subr.bf16.mxu0 0
        %2334 = vmatpush2.bf16.msra.mxu0 0
        %2335 = vmatprep.subr.bf16.mxu0 0
        %2336 = vmatpush2.bf16.msra.mxu0 0
        %2337 = vmatprep.subr.bf16.mxu0 0
        %2338 = vmatpush2.bf16.msra.mxu0 0
        %2339 = vmatprep.subr.bf16.mxu0 0
        %2340 = vmatpush2.bf16.msra.mxu0 0
        %2341 = vmatprep.subr.bf16.mxu0 0
        %2342 = vmatpush2.bf16.msra.mxu0 0
        %2343 = vmatprep.subr.bf16.mxu0 0
        %2344 = vmatpush2.bf16.msra.mxu0 0
        %2345 = vmatprep.mubr.bf16.mxu0 0
        %2346 = vmatmul.mubr.bf16.gmra.mxu0 %v2308
        %v2347 = vpop.f32.mrf.mxu0
        %v2348 = vadd.f32 0.0, %v2347
        %v2349 = vpop.f32.mrf.mxu0
        %v2350 = vpop.f32.mrf.mxu0
        %v2351 = vpop.f32.mrf.mxu0
        %2352 = vdwg.mxu0
        %2353 = vst [vmem:[#allocation2 + $0x18] sm:$0xff] %v2348
        %v2354 = vld [vmem:[#allocation2] sm:$0xff]
        %v2355 = vld [vmem:[#allocation2 + $0x8] sm:$0xff]
        %v2356 = vld [vmem:[#allocation2 + $0x10] sm:$0xff]
        %v2357 = vld [vmem:[#allocation2 + $0x18] sm:$0xff]
        %v2358 = vpack.c.bf16 %v2356, %v2354
        %v2359 = vpack.c.bf16 %v2357, %v2355
        %v2360 = vld [vmem:[#allocation12] sm:$0xff]
        %v2361 = vld [vmem:[#allocation12 + $0x8] sm:$0xff]
        %v2362 = vld [vmem:[#allocation12 + $0x10] sm:$0xff]
        %v2363 = vld [vmem:[#allocation12 + $0x18] sm:$0xff]
        %v2364 = vld [vmem:[#allocation12 + $0x20] sm:$0xff]
        %v2365 = vld [vmem:[#allocation12 + $0x28] sm:$0xff]
        %v2366 = vld [vmem:[#allocation12 + $0x30] sm:$0xff]
        %v2367 = vld [vmem:[#allocation12 + $0x38] sm:$0xff]
        %v2368 = vld [vmem:[#allocation12 + $0x40] sm:$0xff]
        %v2369 = vld [vmem:[#allocation12 + $0x48] sm:$0xff]
        %v2370 = vld [vmem:[#allocation12 + $0x50] sm:$0xff]
        %v2371 = vld [vmem:[#allocation12 + $0x58] sm:$0xff]
        %v2372 = vld [vmem:[#allocation12 + $0x60] sm:$0xff]
        %v2373 = vld [vmem:[#allocation12 + $0x68] sm:$0xff]
        %v2374 = vld [vmem:[#allocation12 + $0x70] sm:$0xff]
        %v2375 = vld [vmem:[#allocation12 + $0x78] sm:$0xff]
        %v2376 = vld [vmem:[#allocation12 + $0x80] sm:$0xff]
        %v2377 = vld [vmem:[#allocation12 + $0x88] sm:$0xff]
        %v2378 = vld [vmem:[#allocation12 + $0x90] sm:$0xff]
        %v2379 = vld [vmem:[#allocation12 + $0x98] sm:$0xff]
        %v2380 = vld [vmem:[#allocation12 + $0xa0] sm:$0xff]
        %v2381 = vld [vmem:[#allocation12 + $0xa8] sm:$0xff]
        %v2382 = vld [vmem:[#allocation12 + $0xb0] sm:$0xff]
        %v2383 = vld [vmem:[#allocation12 + $0xb8] sm:$0xff]
        %v2384 = vld [vmem:[#allocation12 + $0xc0] sm:$0xff]
        %v2385 = vld [vmem:[#allocation12 + $0xc8] sm:$0xff]
        %v2386 = vld [vmem:[#allocation12 + $0xd0] sm:$0xff]
        %v2387 = vld [vmem:[#allocation12 + $0xd8] sm:$0xff]
        %v2388 = vld [vmem:[#allocation12 + $0xe0] sm:$0xff]
        %v2389 = vld [vmem:[#allocation12 + $0xe8] sm:$0xff]
        %v2390 = vld [vmem:[#allocation12 + $0xf0] sm:$0xff]
        %v2391 = vld [vmem:[#allocation12 + $0xf8] sm:$0xff]
        %v2392 = vld [vmem:[#allocation14] sm:$0x3]
        %v2394 = vlaneseq
        %v2395 = vshrl.u32 %v2394, 7
        %v2396 = vsub.s32 0, %v2395
        %v2397 = vrot.slane %v2392, %v2396
        %v2398 = vlaneseq
        %v2399 = vshrl.u32 %v2398, 7
        %v2400 = vsub.s32 1, %v2399
        %v2401 = vrot.slane %v2392, %v2400
        %v2436 = vunpack.c.l.b16 %v2360
        %v2437 = vunpack.c.h.b16 %v2360
        %v2438 = vunpack.c.l.b16 %v2361
        %v2439 = vunpack.c.h.b16 %v2361
        %v2440 = vunpack.c.l.b16 %v2362
        %v2441 = vunpack.c.h.b16 %v2362
        %v2442 = vunpack.c.l.b16 %v2363
        %v2443 = vunpack.c.h.b16 %v2363
        %v2444 = vunpack.c.l.b16 %v2364
        %v2445 = vunpack.c.h.b16 %v2364
        %v2446 = vunpack.c.l.b16 %v2365
        %v2447 = vunpack.c.h.b16 %v2365
        %v2448 = vunpack.c.l.b16 %v2366
        %v2449 = vunpack.c.h.b16 %v2366
        %v2450 = vunpack.c.l.b16 %v2367
        %v2451 = vunpack.c.h.b16 %v2367
        %v2452 = vunpack.c.l.b16 %v2368
        %v2453 = vunpack.c.h.b16 %v2368
        %v2454 = vunpack.c.l.b16 %v2369
        %v2455 = vunpack.c.h.b16 %v2369
        %v2456 = vunpack.c.l.b16 %v2370
        %v2457 = vunpack.c.h.b16 %v2370
        %v2458 = vunpack.c.l.b16 %v2371
        %v2459 = vunpack.c.h.b16 %v2371
        %v2460 = vunpack.c.l.b16 %v2372
        %v2461 = vunpack.c.h.b16 %v2372
        %v2462 = vunpack.c.l.b16 %v2373
        %v2463 = vunpack.c.h.b16 %v2373
        %v2464 = vunpack.c.l.b16 %v2374
        %v2465 = vunpack.c.h.b16 %v2374
        %v2466 = vunpack.c.l.b16 %v2375
        %v2467 = vunpack.c.h.b16 %v2375
        %v2468 = vunpack.c.l.b16 %v2376
        %v2469 = vunpack.c.h.b16 %v2376
        %v2470 = vunpack.c.l.b16 %v2377
        %v2471 = vunpack.c.h.b16 %v2377
        %v2472 = vunpack.c.l.b16 %v2378
        %v2473 = vunpack.c.h.b16 %v2378
        %v2474 = vunpack.c.l.b16 %v2379
        %v2475 = vunpack.c.h.b16 %v2379
        %v2476 = vunpack.c.l.b16 %v2380
        %v2477 = vunpack.c.h.b16 %v2380
        %v2478 = vunpack.c.l.b16 %v2381
        %v2479 = vunpack.c.h.b16 %v2381
        %v2480 = vunpack.c.l.b16 %v2382
        %v2481 = vunpack.c.h.b16 %v2382
        %v2482 = vunpack.c.l.b16 %v2383
        %v2483 = vunpack.c.h.b16 %v2383
        %v2484 = vunpack.c.l.b16 %v2384
        %v2485 = vunpack.c.h.b16 %v2384
        %v2486 = vunpack.c.l.b16 %v2385
        %v2487 = vunpack.c.h.b16 %v2385
        %v2488 = vunpack.c.l.b16 %v2386
        %v2489 = vunpack.c.h.b16 %v2386
        %v2490 = vunpack.c.l.b16 %v2387
        %v2491 = vunpack.c.h.b16 %v2387
        %v2492 = vunpack.c.l.b16 %v2388
        %v2493 = vunpack.c.h.b16 %v2388
        %v2494 = vunpack.c.l.b16 %v2389
        %v2495 = vunpack.c.h.b16 %v2389
        %v2496 = vunpack.c.l.b16 %v2390
        %v2497 = vunpack.c.h.b16 %v2390
        %v2498 = vunpack.c.l.b16 %v2391
        %v2499 = vunpack.c.h.b16 %v2391
        %v2500 = vpack.c.b16 %v2438, %v2436
        %v2501 = vpack.c.b16 %v2439, %v2437
        %v2502 = vpack.c.b16 %v2442, %v2440
        %v2503 = vpack.c.b16 %v2443, %v2441
        %v2504 = vpack.c.b16 %v2446, %v2444
        %v2505 = vpack.c.b16 %v2447, %v2445
        %v2506 = vpack.c.b16 %v2450, %v2448
        %v2507 = vpack.c.b16 %v2451, %v2449
        %v2508 = vpack.c.b16 %v2454, %v2452
        %v2509 = vpack.c.b16 %v2455, %v2453
        %v2510 = vpack.c.b16 %v2458, %v2456
        %v2511 = vpack.c.b16 %v2459, %v2457
        %v2512 = vpack.c.b16 %v2462, %v2460
        %v2513 = vpack.c.b16 %v2463, %v2461
        %v2514 = vpack.c.b16 %v2466, %v2464
        %v2515 = vpack.c.b16 %v2467, %v2465
        %v2516 = vpack.c.b16 %v2470, %v2468
        %v2517 = vpack.c.b16 %v2471, %v2469
        %v2518 = vpack.c.b16 %v2474, %v2472
        %v2519 = vpack.c.b16 %v2475, %v2473
        %v2520 = vpack.c.b16 %v2478, %v2476
        %v2521 = vpack.c.b16 %v2479, %v2477
        %v2522 = vpack.c.b16 %v2482, %v2480
        %v2523 = vpack.c.b16 %v2483, %v2481
        %v2524 = vpack.c.b16 %v2486, %v2484
        %v2525 = vpack.c.b16 %v2487, %v2485
        %v2526 = vpack.c.b16 %v2490, %v2488
        %v2527 = vpack.c.b16 %v2491, %v2489
        %v2528 = vpack.c.b16 %v2494, %v2492
        %v2529 = vpack.c.b16 %v2495, %v2493
        %v2530 = vpack.c.b16 %v2498, %v2496
        %v2531 = vpack.c.b16 %v2499, %v2497
        %2564 = vmatprep.subr.bf16.mxu0 %v2515
        %2565 = vmatpush1.bf16.msra.mxu0 %v2514
        %2566 = vmatprep.subr.bf16.mxu0 %v2513
        %2567 = vmatpush1.bf16.msra.mxu0 %v2512
        %2568 = vmatprep.subr.bf16.mxu0 %v2511
        %2569 = vmatpush1.bf16.msra.mxu0 %v2510
        %2570 = vmatprep.subr.bf16.mxu0 %v2509
        %2571 = vmatpush1.bf16.msra.mxu0 %v2508
        %2572 = vmatprep.subr.bf16.mxu0 %v2507
        %2573 = vmatpush1.bf16.msra.mxu0 %v2506
        %2574 = vmatprep.subr.bf16.mxu0 %v2505
        %2575 = vmatpush1.bf16.msra.mxu0 %v2504
        %2576 = vmatprep.subr.bf16.mxu0 %v2503
        %2577 = vmatpush1.bf16.msra.mxu0 %v2502
        %2578 = vmatprep.subr.bf16.mxu0 %v2501
        %2579 = vmatpush1.bf16.msra.mxu0 %v2500
        %2580 = vmatprep.subr.bf16.mxu0 %v2531
        %2581 = vmatpush2.bf16.msra.mxu0 %v2530
        %2582 = vmatprep.subr.bf16.mxu0 %v2529
        %2583 = vmatpush2.bf16.msra.mxu0 %v2528
        %2584 = vmatprep.subr.bf16.mxu0 %v2527
        %2585 = vmatpush2.bf16.msra.mxu0 %v2526
        %2586 = vmatprep.subr.bf16.mxu0 %v2525
        %2587 = vmatpush2.bf16.msra.mxu0 %v2524
        %2588 = vmatprep.subr.bf16.mxu0 %v2523
        %2589 = vmatpush2.bf16.msra.mxu0 %v2522
        %2590 = vmatprep.subr.bf16.mxu0 %v2521
        %2591 = vmatpush2.bf16.msra.mxu0 %v2520
        %2592 = vmatprep.subr.bf16.mxu0 %v2519
        %2593 = vmatpush2.bf16.msra.mxu0 %v2518
        %2594 = vmatprep.subr.bf16.mxu0 %v2517
        %2595 = vmatpush2.bf16.msra.mxu0 %v2516
        %2596 = vmatprep.mubr.bf16.mxu0 %v2359
        %2597 = vmatmul.mubr.bf16.gmra.mxu0 %v2358
        %v2598 = vpop.f32.mrf.mxu0
        %v2599 = vadd.f32 %v2397, %v2598
        %v2600 = vpop.f32.mrf.mxu0
        %v2601 = vadd.f32 %v2401, %v2600
        %v2602 = vpop.f32.mrf.mxu0
        %v2603 = vadd.f32 %v2397, %v2602
        %v2604 = vpop.f32.mrf.mxu0
        %v2605 = vadd.f32 %v2401, %v2604
        %2606 = vdwg.mxu0
        %v2607 = vadd.f32 %v1094, %v2599
        %v2608 = vadd.f32 %v1095, %v2601
        %v2609 = vadd.f32 %v1096, %v2603
        %v2610 = vadd.f32 %v1097, %v2605
        %v2611 = vld [vmem:[#allocation15] sm:$0x3]
        %v2612 = vld [vmem:[#allocation17] sm:$0x3]
        %v2613 = vadd.f32 %v2607, %v2608
        %2614 = vadd.xlane.f32.xlu0 %v2613
        %v2615 = vpop.xlane.xlu0 %2614
        %v2616 = vadd.f32 %v2609, %v2610
        %2617 = vadd.xlane.f32.xlu0 %v2616
        %v2618 = vpop.xlane.xlu0 %2617
        %v2619 = vmul.f32 %v2615, %v1110
        %v2620 = vmul.f32 %v2618, %v1110
        %v2621 = vsub.f32 %v2607, %v2619
        %v2622 = vsub.f32 %v2608, %v2619
        %v2623 = vsub.f32 %v2609, %v2620
        %v2624 = vsub.f32 %v2610, %v2620
        %v2625 = vmul.f32 %v2621, %v2621
        %v2626 = vmul.f32 %v2622, %v2622
        %v2627 = vmul.f32 %v2623, %v2623
        %v2628 = vmul.f32 %v2624, %v2624
        %v2629 = vadd.f32 %v2625, %v2626
        %2630 = vadd.xlane.f32.xlu0 %v2629
        %v2631 = vpop.xlane.xlu0 %2630
        %v2632 = vadd.f32 %v2627, %v2628
        %2633 = vadd.xlane.f32.xlu0 %v2632
        %v2634 = vpop.xlane.xlu0 %2633
        %v2635 = vmul.f32 %v2631, %v1127
        %v2636 = vmul.f32 %v2634, %v1127
        %v2638 = vlaneseq
        %v2639 = vshrl.u32 %v2638, 7
        %v2640 = vsub.s32 0, %v2639
        %v2641 = vrot.slane %v2611, %v2640
        %v2642 = vlaneseq
        %v2643 = vshrl.u32 %v2642, 7
        %v2644 = vsub.s32 1, %v2643
        %v2645 = vrot.slane %v2611, %v2644
        %v2648 = vmul.f32 %v2641, %v2621
        %v2649 = vmul.f32 %v2645, %v2622
        %v2650 = vmul.f32 %v2641, %v2623
        %v2651 = vmul.f32 %v2645, %v2624
        %v2652 = vrsqrt.pop %v2635
        %v2653 = vmul.f32 %v2635, %v2652
        %vm2654 = vcmp.eq.f32.partialorder %v2635, inf
        %v2655 = vsel %vm2654, %v2635, %v2653
        %vm2656 = vcmp.eq.f32.partialorder %v2635, 0.0
        %v2657 = vand.u32 %v2635, 2147483648
        %v2658 = vsel %vm2656, %v2657, %v2655
        %v2659 = vrsqrt.pop %v2636
        %v2660 = vmul.f32 %v2636, %v2659
        %vm2661 = vcmp.eq.f32.partialorder %v2636, inf
        %v2662 = vsel %vm2661, %v2636, %v2660
        %vm2663 = vcmp.eq.f32.partialorder %v2636, 0.0
        %v2664 = vand.u32 %v2636, 2147483648
        %v2665 = vsel %vm2663, %v2664, %v2662
        %v2666 = vadd.f32 %v2658, 1e-06
        %v2667 = vadd.f32 %v2665, 1e-06
        %v2668 = vrcp.pop %v2666
        %v2669 = vmul.f32 %v2648, %v2668
        %v2670 = vmul.f32 %v2649, %v2668
        %v2671 = vrcp.pop %v2667
        %v2672 = vmul.f32 %v2650, %v2671
        %v2673 = vmul.f32 %v2651, %v2671
        %v2675 = vlaneseq
        %v2676 = vshrl.u32 %v2675, 7
        %v2677 = vsub.s32 0, %v2676
        %v2678 = vrot.slane %v2612, %v2677
        %v2679 = vlaneseq
        %v2680 = vshrl.u32 %v2679, 7
        %v2681 = vsub.s32 1, %v2680
        %v2682 = vrot.slane %v2612, %v2681
        %v2685 = vadd.f32 %v2669, %v2678
        %v2686 = vadd.f32 %v2670, %v2682
        %v2687 = vadd.f32 %v2672, %v2678
        %v2688 = vadd.f32 %v2673, %v2682
        %v2689 = vpack.c.bf16 %v2687, %v2685
        %v2690 = vpack.c.bf16 %v2688, %v2686
        %v2691 = vld [vmem:[#allocation18] sm:$0xff]
        %v2692 = vld [vmem:[#allocation18 + $0x8] sm:$0xff]
        %v2693 = vld [vmem:[#allocation18 + $0x10] sm:$0xff]
        %v2694 = vld [vmem:[#allocation18 + $0x18] sm:$0xff]
        %v2695 = vld [vmem:[#allocation18 + $0x20] sm:$0xff]
        %v2696 = vld [vmem:[#allocation18 + $0x28] sm:$0xff]
        %v2697 = vld [vmem:[#allocation18 + $0x30] sm:$0xff]
        %v2698 = vld [vmem:[#allocation18 + $0x38] sm:$0xff]
        %v2699 = vld [vmem:[#allocation18 + $0x40] sm:$0xff]
        %v2700 = vld [vmem:[#allocation18 + $0x48] sm:$0xff]
        %v2701 = vld [vmem:[#allocation18 + $0x50] sm:$0xff]
        %v2702 = vld [vmem:[#allocation18 + $0x58] sm:$0xff]
        %v2703 = vld [vmem:[#allocation18 + $0x60] sm:$0xff]
        %v2704 = vld [vmem:[#allocation18 + $0x68] sm:$0xff]
        %v2705 = vld [vmem:[#allocation18 + $0x70] sm:$0xff]
        %v2706 = vld [vmem:[#allocation18 + $0x78] sm:$0xff]
        %v2707 = vld [vmem:[#allocation18 + $0x80] sm:$0xff]
        %v2708 = vld [vmem:[#allocation18 + $0x88] sm:$0xff]
        %v2709 = vld [vmem:[#allocation18 + $0x90] sm:$0xff]
        %v2710 = vld [vmem:[#allocation18 + $0x98] sm:$0xff]
        %v2711 = vld [vmem:[#allocation18 + $0xa0] sm:$0xff]
        %v2712 = vld [vmem:[#allocation18 + $0xa8] sm:$0xff]
        %v2713 = vld [vmem:[#allocation18 + $0xb0] sm:$0xff]
        %v2714 = vld [vmem:[#allocation18 + $0xb8] sm:$0xff]
        %v2715 = vld [vmem:[#allocation18 + $0xc0] sm:$0xff]
        %v2716 = vld [vmem:[#allocation18 + $0xc8] sm:$0xff]
        %v2717 = vld [vmem:[#allocation18 + $0xd0] sm:$0xff]
        %v2718 = vld [vmem:[#allocation18 + $0xd8] sm:$0xff]
        %v2719 = vld [vmem:[#allocation18 + $0xe0] sm:$0xff]
        %v2720 = vld [vmem:[#allocation18 + $0xe8] sm:$0xff]
        %v2721 = vld [vmem:[#allocation18 + $0xf0] sm:$0xff]
        %v2722 = vld [vmem:[#allocation18 + $0xf8] sm:$0xff]
        %v2723 = vld [vmem:[#allocation20] sm:$0x3]
        %v2725 = vlaneseq
        %v2726 = vshrl.u32 %v2725, 7
        %v2727 = vsub.s32 0, %v2726
        %v2728 = vrot.slane %v2723, %v2727
        %v2729 = vlaneseq
        %v2730 = vshrl.u32 %v2729, 7
        %v2731 = vsub.s32 1, %v2730
        %v2732 = vrot.slane %v2723, %v2731
        %v2767 = vunpack.c.l.b16 %v2691
        %v2768 = vunpack.c.h.b16 %v2691
        %v2769 = vunpack.c.l.b16 %v2692
        %v2770 = vunpack.c.h.b16 %v2692
        %v2771 = vunpack.c.l.b16 %v2693
        %v2772 = vunpack.c.h.b16 %v2693
        %v2773 = vunpack.c.l.b16 %v2694
        %v2774 = vunpack.c.h.b16 %v2694
        %v2775 = vunpack.c.l.b16 %v2695
        %v2776 = vunpack.c.h.b16 %v2695
        %v2777 = vunpack.c.l.b16 %v2696
        %v2778 = vunpack.c.h.b16 %v2696
        %v2779 = vunpack.c.l.b16 %v2697
        %v2780 = vunpack.c.h.b16 %v2697
        %v2781 = vunpack.c.l.b16 %v2698
        %v2782 = vunpack.c.h.b16 %v2698
        %v2783 = vunpack.c.l.b16 %v2699
        %v2784 = vunpack.c.h.b16 %v2699
        %v2785 = vunpack.c.l.b16 %v2700
        %v2786 = vunpack.c.h.b16 %v2700
        %v2787 = vunpack.c.l.b16 %v2701
        %v2788 = vunpack.c.h.b16 %v2701
        %v2789 = vunpack.c.l.b16 %v2702
        %v2790 = vunpack.c.h.b16 %v2702
        %v2791 = vunpack.c.l.b16 %v2703
        %v2792 = vunpack.c.h.b16 %v2703
        %v2793 = vunpack.c.l.b16 %v2704
        %v2794 = vunpack.c.h.b16 %v2704
        %v2795 = vunpack.c.l.b16 %v2705
        %v2796 = vunpack.c.h.b16 %v2705
        %v2797 = vunpack.c.l.b16 %v2706
        %v2798 = vunpack.c.h.b16 %v2706
        %v2799 = vunpack.c.l.b16 %v2707
        %v2800 = vunpack.c.h.b16 %v2707
        %v2801 = vunpack.c.l.b16 %v2708
        %v2802 = vunpack.c.h.b16 %v2708
        %v2803 = vunpack.c.l.b16 %v2709
        %v2804 = vunpack.c.h.b16 %v2709
        %v2805 = vunpack.c.l.b16 %v2710
        %v2806 = vunpack.c.h.b16 %v2710
        %v2807 = vunpack.c.l.b16 %v2711
        %v2808 = vunpack.c.h.b16 %v2711
        %v2809 = vunpack.c.l.b16 %v2712
        %v2810 = vunpack.c.h.b16 %v2712
        %v2811 = vunpack.c.l.b16 %v2713
        %v2812 = vunpack.c.h.b16 %v2713
        %v2813 = vunpack.c.l.b16 %v2714
        %v2814 = vunpack.c.h.b16 %v2714
        %v2815 = vunpack.c.l.b16 %v2715
        %v2816 = vunpack.c.h.b16 %v2715
        %v2817 = vunpack.c.l.b16 %v2716
        %v2818 = vunpack.c.h.b16 %v2716
        %v2819 = vunpack.c.l.b16 %v2717
        %v2820 = vunpack.c.h.b16 %v2717
        %v2821 = vunpack.c.l.b16 %v2718
        %v2822 = vunpack.c.h.b16 %v2718
        %v2823 = vunpack.c.l.b16 %v2719
        %v2824 = vunpack.c.h.b16 %v2719
        %v2825 = vunpack.c.l.b16 %v2720
        %v2826 = vunpack.c.h.b16 %v2720
        %v2827 = vunpack.c.l.b16 %v2721
        %v2828 = vunpack.c.h.b16 %v2721
        %v2829 = vunpack.c.l.b16 %v2722
        %v2830 = vunpack.c.h.b16 %v2722
        %v2831 = vpack.c.b16 %v2769, %v2767
        %v2832 = vpack.c.b16 %v2770, %v2768
        %v2833 = vpack.c.b16 %v2773, %v2771
        %v2834 = vpack.c.b16 %v2774, %v2772
        %v2835 = vpack.c.b16 %v2777, %v2775
        %v2836 = vpack.c.b16 %v2778, %v2776
        %v2837 = vpack.c.b16 %v2781, %v2779
        %v2838 = vpack.c.b16 %v2782, %v2780
        %v2839 = vpack.c.b16 %v2785, %v2783
        %v2840 = vpack.c.b16 %v2786, %v2784
        %v2841 = vpack.c.b16 %v2789, %v2787
        %v2842 = vpack.c.b16 %v2790, %v2788
        %v2843 = vpack.c.b16 %v2793, %v2791
        %v2844 = vpack.c.b16 %v2794, %v2792
        %v2845 = vpack.c.b16 %v2797, %v2795
        %v2846 = vpack.c.b16 %v2798, %v2796
        %v2847 = vpack.c.b16 %v2801, %v2799
        %v2848 = vpack.c.b16 %v2802, %v2800
        %v2849 = vpack.c.b16 %v2805, %v2803
        %v2850 = vpack.c.b16 %v2806, %v2804
        %v2851 = vpack.c.b16 %v2809, %v2807
        %v2852 = vpack.c.b16 %v2810, %v2808
        %v2853 = vpack.c.b16 %v2813, %v2811
        %v2854 = vpack.c.b16 %v2814, %v2812
        %v2855 = vpack.c.b16 %v2817, %v2815
        %v2856 = vpack.c.b16 %v2818, %v2816
        %v2857 = vpack.c.b16 %v2821, %v2819
        %v2858 = vpack.c.b16 %v2822, %v2820
        %v2859 = vpack.c.b16 %v2825, %v2823
        %v2860 = vpack.c.b16 %v2826, %v2824
        %v2861 = vpack.c.b16 %v2829, %v2827
        %v2862 = vpack.c.b16 %v2830, %v2828
        %2895 = vmatprep.subr.bf16.mxu0 %v2846
        %2896 = vmatpush1.bf16.msra.mxu0 %v2845
        %2897 = vmatprep.subr.bf16.mxu0 %v2844
        %2898 = vmatpush1.bf16.msra.mxu0 %v2843
        %2899 = vmatprep.subr.bf16.mxu0 %v2842
        %2900 = vmatpush1.bf16.msra.mxu0 %v2841
        %2901 = vmatprep.subr.bf16.mxu0 %v2840
        %2902 = vmatpush1.bf16.msra.mxu0 %v2839
        %2903 = vmatprep.subr.bf16.mxu0 %v2838
        %2904 = vmatpush1.bf16.msra.mxu0 %v2837
        %2905 = vmatprep.subr.bf16.mxu0 %v2836
        %2906 = vmatpush1.bf16.msra.mxu0 %v2835
        %2907 = vmatprep.subr.bf16.mxu0 %v2834
        %2908 = vmatpush1.bf16.msra.mxu0 %v2833
        %2909 = vmatprep.subr.bf16.mxu0 %v2832
        %2910 = vmatpush1.bf16.msra.mxu0 %v2831
        %2911 = vmatprep.subr.bf16.mxu0 %v2862
        %2912 = vmatpush2.bf16.msra.mxu0 %v2861
        %2913 = vmatprep.subr.bf16.mxu0 %v2860
        %2914 = vmatpush2.bf16.msra.mxu0 %v2859
        %2915 = vmatprep.subr.bf16.mxu0 %v2858
        %2916 = vmatpush2.bf16.msra.mxu0 %v2857
        %2917 = vmatprep.subr.bf16.mxu0 %v2856
        %2918 = vmatpush2.bf16.msra.mxu0 %v2855
        %2919 = vmatprep.subr.bf16.mxu0 %v2854
        %2920 = vmatpush2.bf16.msra.mxu0 %v2853
        %2921 = vmatprep.subr.bf16.mxu0 %v2852
        %2922 = vmatpush2.bf16.msra.mxu0 %v2851
        %2923 = vmatprep.subr.bf16.mxu0 %v2850
        %2924 = vmatpush2.bf16.msra.mxu0 %v2849
        %2925 = vmatprep.subr.bf16.mxu0 %v2848
        %2926 = vmatpush2.bf16.msra.mxu0 %v2847
        %2927 = vmatprep.mubr.bf16.mxu0 %v2690
        %2928 = vmatmul.mubr.bf16.gmra.mxu0 %v2689
        %v2929 = vpop.f32.mrf.mxu0
        %v2930 = vadd.f32 %v2728, %v2929
        %v2931 = vpop.f32.mrf.mxu0
        %v2932 = vadd.f32 %v2732, %v2931
        %v2933 = vpop.f32.mrf.mxu0
        %v2934 = vadd.f32 %v2728, %v2933
        %v2935 = vpop.f32.mrf.mxu0
        %v2936 = vadd.f32 %v2732, %v2935
        %2937 = vdwg.mxu0
        %v2938 = vmul.f32 %v2930, 0.088388346
        %v2939 = vmul.f32 %v2932, 0.088388346
        %v2940 = vmul.f32 %v2934, 0.088388346
        %v2941 = vmul.f32 %v2936, 0.088388346
        %v2942 = vpack.c.bf16 %v1100, %v1098
        %v2943 = vpack.c.bf16 %v1101, %v1099
        %v2944 = vld [vmem:[#allocation21] sm:$0xff]
        %v2945 = vld [vmem:[#allocation21 + $0x8] sm:$0xff]
        %v2946 = vld [vmem:[#allocation21 + $0x10] sm:$0xff]
        %v2947 = vld [vmem:[#allocation21 + $0x18] sm:$0xff]
        %v2948 = vld [vmem:[#allocation21 + $0x20] sm:$0xff]
        %v2949 = vld [vmem:[#allocation21 + $0x28] sm:$0xff]
        %v2950 = vld [vmem:[#allocation21 + $0x30] sm:$0xff]
        %v2951 = vld [vmem:[#allocation21 + $0x38] sm:$0xff]
        %v2952 = vld [vmem:[#allocation21 + $0x40] sm:$0xff]
        %v2953 = vld [vmem:[#allocation21 + $0x48] sm:$0xff]
        %v2954 = vld [vmem:[#allocation21 + $0x50] sm:$0xff]
        %v2955 = vld [vmem:[#allocation21 + $0x58] sm:$0xff]
        %v2956 = vld [vmem:[#allocation21 + $0x60] sm:$0xff]
        %v2957 = vld [vmem:[#allocation21 + $0x68] sm:$0xff]
        %v2958 = vld [vmem:[#allocation21 + $0x70] sm:$0xff]
        %v2959 = vld [vmem:[#allocation21 + $0x78] sm:$0xff]
        %v2960 = vld [vmem:[#allocation21 + $0x80] sm:$0xff]
        %v2961 = vld [vmem:[#allocation21 + $0x88] sm:$0xff]
        %v2962 = vld [vmem:[#allocation21 + $0x90] sm:$0xff]
        %v2963 = vld [vmem:[#allocation21 + $0x98] sm:$0xff]
        %v2964 = vld [vmem:[#allocation21 + $0xa0] sm:$0xff]
        %v2965 = vld [vmem:[#allocation21 + $0xa8] sm:$0xff]
        %v2966 = vld [vmem:[#allocation21 + $0xb0] sm:$0xff]
        %v2967 = vld [vmem:[#allocation21 + $0xb8] sm:$0xff]
        %v2968 = vld [vmem:[#allocation21 + $0xc0] sm:$0xff]
        %v2969 = vld [vmem:[#allocation21 + $0xc8] sm:$0xff]
        %v2970 = vld [vmem:[#allocation21 + $0xd0] sm:$0xff]
        %v2971 = vld [vmem:[#allocation21 + $0xd8] sm:$0xff]
        %v2972 = vld [vmem:[#allocation21 + $0xe0] sm:$0xff]
        %v2973 = vld [vmem:[#allocation21 + $0xe8] sm:$0xff]
        %v2974 = vld [vmem:[#allocation21 + $0xf0] sm:$0xff]
        %v2975 = vld [vmem:[#allocation21 + $0xf8] sm:$0xff]
        %v2976 = vld [vmem:[#allocation21 + $0x100] sm:$0xff]
        %v2977 = vld [vmem:[#allocation21 + $0x108] sm:$0xff]
        %v2978 = vld [vmem:[#allocation21 + $0x110] sm:$0xff]
        %v2979 = vld [vmem:[#allocation21 + $0x118] sm:$0xff]
        %v2980 = vld [vmem:[#allocation21 + $0x120] sm:$0xff]
        %v2981 = vld [vmem:[#allocation21 + $0x128] sm:$0xff]
        %v2982 = vld [vmem:[#allocation21 + $0x130] sm:$0xff]
        %v2983 = vld [vmem:[#allocation21 + $0x138] sm:$0xff]
        %v2984 = vld [vmem:[#allocation21 + $0x140] sm:$0xff]
        %v2985 = vld [vmem:[#allocation21 + $0x148] sm:$0xff]
        %v2986 = vld [vmem:[#allocation21 + $0x150] sm:$0xff]
        %v2987 = vld [vmem:[#allocation21 + $0x158] sm:$0xff]
        %v2988 = vld [vmem:[#allocation21 + $0x160] sm:$0xff]
        %v2989 = vld [vmem:[#allocation21 + $0x168] sm:$0xff]
        %v2990 = vld [vmem:[#allocation21 + $0x170] sm:$0xff]
        %v2991 = vld [vmem:[#allocation21 + $0x178] sm:$0xff]
        %v2992 = vld [vmem:[#allocation21 + $0x180] sm:$0xff]
        %v2993 = vld [vmem:[#allocation21 + $0x188] sm:$0xff]
        %v2994 = vld [vmem:[#allocation21 + $0x190] sm:$0xff]
        %v2995 = vld [vmem:[#allocation21 + $0x198] sm:$0xff]
        %v2996 = vld [vmem:[#allocation21 + $0x1a0] sm:$0xff]
        %v2997 = vld [vmem:[#allocation21 + $0x1a8] sm:$0xff]
        %v2998 = vld [vmem:[#allocation21 + $0x1b0] sm:$0xff]
        %v2999 = vld [vmem:[#allocation21 + $0x1b8] sm:$0xff]
        %v3000 = vld [vmem:[#allocation21 + $0x1c0] sm:$0xff]
        %v3001 = vld [vmem:[#allocation21 + $0x1c8] sm:$0xff]
        %v3002 = vld [vmem:[#allocation21 + $0x1d0] sm:$0xff]
        %v3003 = vld [vmem:[#allocation21 + $0x1d8] sm:$0xff]
        %v3004 = vld [vmem:[#allocation21 + $0x1e0] sm:$0xff]
        %v3005 = vld [vmem:[#allocation21 + $0x1e8] sm:$0xff]
        %v3006 = vld [vmem:[#allocation21 + $0x1f0] sm:$0xff]
        %v3007 = vld [vmem:[#allocation21 + $0x1f8] sm:$0xff]
        %v3008 = vld [vmem:[#allocation23] sm:$0xf]
        %v3010 = vlaneseq
        %v3011 = vshrl.u32 %v3010, 7
        %v3012 = vsub.s32 0, %v3011
        %v3013 = vrot.slane %v3008, %v3012
        %v3014 = vlaneseq
        %v3015 = vshrl.u32 %v3014, 7
        %v3016 = vsub.s32 1, %v3015
        %v3017 = vrot.slane %v3008, %v3016
        %v3018 = vlaneseq
        %v3019 = vshrl.u32 %v3018, 7
        %v3020 = vsub.s32 2, %v3019
        %v3021 = vrot.slane %v3008, %v3020
        %v3022 = vlaneseq
        %v3023 = vshrl.u32 %v3022, 7
        %v3024 = vsub.s32 3, %v3023
        %v3025 = vrot.slane %v3008, %v3024
        %v3094 = vunpack.c.l.b16 %v2944
        %v3095 = vunpack.c.h.b16 %v2944
        %v3096 = vunpack.c.l.b16 %v2945
        %v3097 = vunpack.c.h.b16 %v2945
        %v3098 = vunpack.c.l.b16 %v2946
        %v3099 = vunpack.c.h.b16 %v2946
        %v3100 = vunpack.c.l.b16 %v2947
        %v3101 = vunpack.c.h.b16 %v2947
        %v3102 = vunpack.c.l.b16 %v2948
        %v3103 = vunpack.c.h.b16 %v2948
        %v3104 = vunpack.c.l.b16 %v2949
        %v3105 = vunpack.c.h.b16 %v2949
        %v3106 = vunpack.c.l.b16 %v2950
        %v3107 = vunpack.c.h.b16 %v2950
        %v3108 = vunpack.c.l.b16 %v2951
        %v3109 = vunpack.c.h.b16 %v2951
        %v3110 = vunpack.c.l.b16 %v2952
        %v3111 = vunpack.c.h.b16 %v2952
        %v3112 = vunpack.c.l.b16 %v2953
        %v3113 = vunpack.c.h.b16 %v2953
        %v3114 = vunpack.c.l.b16 %v2954
        %v3115 = vunpack.c.h.b16 %v2954
        %v3116 = vunpack.c.l.b16 %v2955
        %v3117 = vunpack.c.h.b16 %v2955
        %v3118 = vunpack.c.l.b16 %v2956
        %v3119 = vunpack.c.h.b16 %v2956
        %v3120 = vunpack.c.l.b16 %v2957
        %v3121 = vunpack.c.h.b16 %v2957
        %v3122 = vunpack.c.l.b16 %v2958
        %v3123 = vunpack.c.h.b16 %v2958
        %v3124 = vunpack.c.l.b16 %v2959
        %v3125 = vunpack.c.h.b16 %v2959
        %v3126 = vunpack.c.l.b16 %v2960
        %v3127 = vunpack.c.h.b16 %v2960
        %v3128 = vunpack.c.l.b16 %v2961
        %v3129 = vunpack.c.h.b16 %v2961
        %v3130 = vunpack.c.l.b16 %v2962
        %v3131 = vunpack.c.h.b16 %v2962
        %v3132 = vunpack.c.l.b16 %v2963
        %v3133 = vunpack.c.h.b16 %v2963
        %v3134 = vunpack.c.l.b16 %v2964
        %v3135 = vunpack.c.h.b16 %v2964
        %v3136 = vunpack.c.l.b16 %v2965
        %v3137 = vunpack.c.h.b16 %v2965
        %v3138 = vunpack.c.l.b16 %v2966
        %v3139 = vunpack.c.h.b16 %v2966
        %v3140 = vunpack.c.l.b16 %v2967
        %v3141 = vunpack.c.h.b16 %v2967
        %v3142 = vunpack.c.l.b16 %v2968
        %v3143 = vunpack.c.h.b16 %v2968
        %v3144 = vunpack.c.l.b16 %v2969
        %v3145 = vunpack.c.h.b16 %v2969
        %v3146 = vunpack.c.l.b16 %v2970
        %v3147 = vunpack.c.h.b16 %v2970
        %v3148 = vunpack.c.l.b16 %v2971
        %v3149 = vunpack.c.h.b16 %v2971
        %v3150 = vunpack.c.l.b16 %v2972
        %v3151 = vunpack.c.h.b16 %v2972
        %v3152 = vunpack.c.l.b16 %v2973
        %v3153 = vunpack.c.h.b16 %v2973
        %v3154 = vunpack.c.l.b16 %v2974
        %v3155 = vunpack.c.h.b16 %v2974
        %v3156 = vunpack.c.l.b16 %v2975
        %v3157 = vunpack.c.h.b16 %v2975
        %v3158 = vunpack.c.l.b16 %v2976
        %v3159 = vunpack.c.h.b16 %v2976
        %v3160 = vunpack.c.l.b16 %v2977
        %v3161 = vunpack.c.h.b16 %v2977
        %v3162 = vunpack.c.l.b16 %v2978
        %v3163 = vunpack.c.h.b16 %v2978
        %v3164 = vunpack.c.l.b16 %v2979
        %v3165 = vunpack.c.h.b16 %v2979
        %v3166 = vunpack.c.l.b16 %v2980
        %v3167 = vunpack.c.h.b16 %v2980
        %v3168 = vunpack.c.l.b16 %v2981
        %v3169 = vunpack.c.h.b16 %v2981
        %v3170 = vunpack.c.l.b16 %v2982
        %v3171 = vunpack.c.h.b16 %v2982
        %v3172 = vunpack.c.l.b16 %v2983
        %v3173 = vunpack.c.h.b16 %v2983
        %v3174 = vunpack.c.l.b16 %v2984
        %v3175 = vunpack.c.h.b16 %v2984
        %v3176 = vunpack.c.l.b16 %v2985
        %v3177 = vunpack.c.h.b16 %v2985
        %v3178 = vunpack.c.l.b16 %v2986
        %v3179 = vunpack.c.h.b16 %v2986
        %v3180 = vunpack.c.l.b16 %v2987
        %v3181 = vunpack.c.h.b16 %v2987
        %v3182 = vunpack.c.l.b16 %v2988
        %v3183 = vunpack.c.h.b16 %v2988
        %v3184 = vunpack.c.l.b16 %v2989
        %v3185 = vunpack.c.h.b16 %v2989
        %v3186 = vunpack.c.l.b16 %v2990
        %v3187 = vunpack.c.h.b16 %v2990
        %v3188 = vunpack.c.l.b16 %v2991
        %v3189 = vunpack.c.h.b16 %v2991
        %v3190 = vunpack.c.l.b16 %v2992
        %v3191 = vunpack.c.h.b16 %v2992
        %v3192 = vunpack.c.l.b16 %v2993
        %v3193 = vunpack.c.h.b16 %v2993
        %v3194 = vunpack.c.l.b16 %v2994
        %v3195 = vunpack.c.h.b16 %v2994
        %v3196 = vunpack.c.l.b16 %v2995
        %v3197 = vunpack.c.h.b16 %v2995
        %v3198 = vunpack.c.l.b16 %v2996
        %v3199 = vunpack.c.h.b16 %v2996
        %v3200 = vunpack.c.l.b16 %v2997
        %v3201 = vunpack.c.h.b16 %v2997
        %v3202 = vunpack.c.l.b16 %v2998
        %v3203 = vunpack.c.h.b16 %v2998
        %v3204 = vunpack.c.l.b16 %v2999
        %v3205 = vunpack.c.h.b16 %v2999
        %v3206 = vunpack.c.l.b16 %v3000
        %v3207 = vunpack.c.h.b16 %v3000
        %v3208 = vunpack.c.l.b16 %v3001
        %v3209 = vunpack.c.h.b16 %v3001
        %v3210 = vunpack.c.l.b16 %v3002
        %v3211 = vunpack.c.h.b16 %v3002
        %v3212 = vunpack.c.l.b16 %v3003
        %v3213 = vunpack.c.h.b16 %v3003
        %v3214 = vunpack.c.l.b16 %v3004
        %v3215 = vunpack.c.h.b16 %v3004
        %v3216 = vunpack.c.l.b16 %v3005
        %v3217 = vunpack.c.h.b16 %v3005
        %v3218 = vunpack.c.l.b16 %v3006
        %v3219 = vunpack.c.h.b16 %v3006
        %v3220 = vunpack.c.l.b16 %v3007
        %v3221 = vunpack.c.h.b16 %v3007
        %v3222 = vpack.c.b16 %v3098, %v3094
        %v3223 = vpack.c.b16 %v3099, %v3095
        %v3224 = vpack.c.b16 %v3100, %v3096
        %v3225 = vpack.c.b16 %v3101, %v3097
        %v3226 = vpack.c.b16 %v3106, %v3102
        %v3227 = vpack.c.b16 %v3107, %v3103
        %v3228 = vpack.c.b16 %v3108, %v3104
        %v3229 = vpack.c.b16 %v3109, %v3105
        %v3230 = vpack.c.b16 %v3114, %v3110
        %v3231 = vpack.c.b16 %v3115, %v3111
        %v3232 = vpack.c.b16 %v3116, %v3112
        %v3233 = vpack.c.b16 %v3117, %v3113
        %v3234 = vpack.c.b16 %v3122, %v3118
        %v3235 = vpack.c.b16 %v3123, %v3119
        %v3236 = vpack.c.b16 %v3124, %v3120
        %v3237 = vpack.c.b16 %v3125, %v3121
        %v3238 = vpack.c.b16 %v3130, %v3126
        %v3239 = vpack.c.b16 %v3131, %v3127
        %v3240 = vpack.c.b16 %v3132, %v3128
        %v3241 = vpack.c.b16 %v3133, %v3129
        %v3242 = vpack.c.b16 %v3138, %v3134
        %v3243 = vpack.c.b16 %v3139, %v3135
        %v3244 = vpack.c.b16 %v3140, %v3136
        %v3245 = vpack.c.b16 %v3141, %v3137
        %v3246 = vpack.c.b16 %v3146, %v3142
        %v3247 = vpack.c.b16 %v3147, %v3143
        %v3248 = vpack.c.b16 %v3148, %v3144
        %v3249 = vpack.c.b16 %v3149, %v3145
        %v3250 = vpack.c.b16 %v3154, %v3150
        %v3251 = vpack.c.b16 %v3155, %v3151
        %v3252 = vpack.c.b16 %v3156, %v3152
        %v3253 = vpack.c.b16 %v3157, %v3153
        %v3254 = vpack.c.b16 %v3162, %v3158
        %v3255 = vpack.c.b16 %v3163, %v3159
        %v3256 = vpack.c.b16 %v3164, %v3160
        %v3257 = vpack.c.b16 %v3165, %v3161
        %v3258 = vpack.c.b16 %v3170, %v3166
        %v3259 = vpack.c.b16 %v3171, %v3167
        %v3260 = vpack.c.b16 %v3172, %v3168
        %v3261 = vpack.c.b16 %v3173, %v3169
        %v3262 = vpack.c.b16 %v3178, %v3174
        %v3263 = vpack.c.b16 %v3179, %v3175
        %v3264 = vpack.c.b16 %v3180, %v3176
        %v3265 = vpack.c.b16 %v3181, %v3177
        %v3266 = vpack.c.b16 %v3186, %v3182
        %v3267 = vpack.c.b16 %v3187, %v3183
        %v3268 = vpack.c.b16 %v3188, %v3184
        %v3269 = vpack.c.b16 %v3189, %v3185
        %v3270 = vpack.c.b16 %v3194, %v3190
        %v3271 = vpack.c.b16 %v3195, %v3191
        %v3272 = vpack.c.b16 %v3196, %v3192
        %v3273 = vpack.c.b16 %v3197, %v3193
        %v3274 = vpack.c.b16 %v3202, %v3198
        %v3275 = vpack.c.b16 %v3203, %v3199
        %v3276 = vpack.c.b16 %v3204, %v3200
        %v3277 = vpack.c.b16 %v3205, %v3201
        %v3278 = vpack.c.b16 %v3210, %v3206
        %v3279 = vpack.c.b16 %v3211, %v3207
        %v3280 = vpack.c.b16 %v3212, %v3208
        %v3281 = vpack.c.b16 %v3213, %v3209
        %v3282 = vpack.c.b16 %v3218, %v3214
        %v3283 = vpack.c.b16 %v3219, %v3215
        %v3284 = vpack.c.b16 %v3220, %v3216
        %v3285 = vpack.c.b16 %v3221, %v3217
        %3350 = vmatprep.subr.bf16.mxu0 %v3251
        %3351 = vmatpush1.bf16.msra.mxu0 %v3250
        %3352 = vmatprep.subr.bf16.mxu0 %v3247
        %3353 = vmatpush1.bf16.msra.mxu0 %v3246
        %3354 = vmatprep.subr.bf16.mxu0 %v3243
        %3355 = vmatpush1.bf16.msra.mxu0 %v3242
        %3356 = vmatprep.subr.bf16.mxu0 %v3239
        %3357 = vmatpush1.bf16.msra.mxu0 %v3238
        %3358 = vmatprep.subr.bf16.mxu0 %v3235
        %3359 = vmatpush1.bf16.msra.mxu0 %v3234
        %3360 = vmatprep.subr.bf16.mxu0 %v3231
        %3361 = vmatpush1.bf16.msra.mxu0 %v3230
        %3362 = vmatprep.subr.bf16.mxu0 %v3227
        %3363 = vmatpush1.bf16.msra.mxu0 %v3226
        %3364 = vmatprep.subr.bf16.mxu0 %v3223
        %3365 = vmatpush1.bf16.msra.mxu0 %v3222
        %3366 = vmatprep.subr.bf16.mxu0 %v3283
        %3367 = vmatpush2.bf16.msra.mxu0 %v3282
        %3368 = vmatprep.subr.bf16.mxu0 %v3279
        %3369 = vmatpush2.bf16.msra.mxu0 %v3278
        %3370 = vmatprep.subr.bf16.mxu0 %v3275
        %3371 = vmatpush2.bf16.msra.mxu0 %v3274
        %3372 = vmatprep.subr.bf16.mxu0 %v3271
        %3373 = vmatpush2.bf16.msra.mxu0 %v3270
        %3374 = vmatprep.subr.bf16.mxu0 %v3267
        %3375 = vmatpush2.bf16.msra.mxu0 %v3266
        %3376 = vmatprep.subr.bf16.mxu0 %v3263
        %3377 = vmatpush2.bf16.msra.mxu0 %v3262
        %3378 = vmatprep.subr.bf16.mxu0 %v3259
        %3379 = vmatpush2.bf16.msra.mxu0 %v3258
        %3380 = vmatprep.subr.bf16.mxu0 %v3255
        %3381 = vmatpush2.bf16.msra.mxu0 %v3254
        %3382 = vmatprep.mubr.bf16.mxu0 %v2943
        %3383 = vmatmul.mubr.bf16.gmra.mxu0 %v2942
        %v3384 = vpop.f32.mrf.mxu0
        %v3385 = vadd.f32 %v3013, %v3384
        %v3386 = vpop.f32.mrf.mxu0
        %v3387 = vadd.f32 %v3017, %v3386
        %v3388 = vpop.f32.mrf.mxu0
        %v3389 = vadd.f32 %v3013, %v3388
        %v3390 = vpop.f32.mrf.mxu0
        %v3391 = vadd.f32 %v3017, %v3390
        %3392 = vdwg.mxu0
        %3393 = vmatprep.subr.bf16.mxu0 %v3253
        %3394 = vmatpush1.bf16.msra.mxu0 %v3252
        %3395 = vmatprep.subr.bf16.mxu0 %v3249
        %3396 = vmatpush1.bf16.msra.mxu0 %v3248
        %3397 = vmatprep.subr.bf16.mxu0 %v3245
        %3398 = vmatpush1.bf16.msra.mxu0 %v3244
        %3399 = vmatprep.subr.bf16.mxu0 %v3241
        %3400 = vmatpush1.bf16.msra.mxu0 %v3240
        %3401 = vmatprep.subr.bf16.mxu0 %v3237
        %3402 = vmatpush1.bf16.msra.mxu0 %v3236
        %3403 = vmatprep.subr.bf16.mxu0 %v3233
        %3404 = vmatpush1.bf16.msra.mxu0 %v3232
        %3405 = vmatprep.subr.bf16.mxu0 %v3229
        %3406 = vmatpush1.bf16.msra.mxu0 %v3228
        %3407 = vmatprep.subr.bf16.mxu0 %v3225
        %3408 = vmatpush1.bf16.msra.mxu0 %v3224
        %3409 = vmatprep.subr.bf16.mxu0 %v3285
        %3410 = vmatpush2.bf16.msra.mxu0 %v3284
        %3411 = vmatprep.subr.bf16.mxu0 %v3281
        %3412 = vmatpush2.bf16.msra.mxu0 %v3280
        %3413 = vmatprep.subr.bf16.mxu0 %v3277
        %3414 = vmatpush2.bf16.msra.mxu0 %v3276
        %3415 = vmatprep.subr.bf16.mxu0 %v3273
        %3416 = vmatpush2.bf16.msra.mxu0 %v3272
        %3417 = vmatprep.subr.bf16.mxu0 %v3269
        %3418 = vmatpush2.bf16.msra.mxu0 %v3268
        %3419 = vmatprep.subr.bf16.mxu0 %v3265
        %3420 = vmatpush2.bf16.msra.mxu0 %v3264
        %3421 = vmatprep.subr.bf16.mxu0 %v3261
        %3422 = vmatpush2.bf16.msra.mxu0 %v3260
        %3423 = vmatprep.subr.bf16.mxu0 %v3257
        %3424 = vmatpush2.bf16.msra.mxu0 %v3256
        %3425 = vmatprep.mubr.bf16.mxu0 %v2943
        %3426 = vmatmul.mubr.bf16.gmra.mxu0 %v2942
        %v3427 = vpop.f32.mrf.mxu0
        %v3428 = vadd.f32 %v3021, %v3427
        %v3429 = vpop.f32.mrf.mxu0
        %v3430 = vadd.f32 %v3025, %v3429
        %v3431 = vpop.f32.mrf.mxu0
        %v3432 = vadd.f32 %v3021, %v3431
        %v3433 = vpop.f32.mrf.mxu0
        %v3434 = vadd.f32 %v3025, %v3433
        %3435 = vdwg.mxu0
        %v3436 = vpack.c.bf16 %v2940, %v2938
        %v3437 = vpack.c.bf16 %v2941, %v2939
        %v3438 = vpack.c.bf16 %v3389, %v3385
        %v3439 = vpack.c.bf16 %v3391, %v3387
        %v3440 = vpack.c.bf16 %v3432, %v3428
        %v3441 = vpack.c.bf16 %v3434, %v3430
        %v3442 = vld [vmem:[%s1090] sm:$0x1]
        %v3443 = vlaneseq
        %v3444 = vshrl.u32 %v3443, 7
        %v3445 = vsub.s32 0, %v3444
        %v3446 = vrot.slane %v3442, %v3445
        %vm3447 = vcmp.eq.s32.totalorder %v3446, 0
        %3448 = vmatprep.subr.bf16.mxu0 0
        %3449 = vmatpush1.bf16.xpose.msra.mxu0 0
        %3450 = vmatprep.subr.bf16.mxu0 0
        %3451 = vmatpush1.bf16.xpose.msra.mxu0 0
        %3452 = vmatprep.subr.bf16.mxu0 0
        %3453 = vmatpush1.bf16.xpose.msra.mxu0 0
        %3454 = vmatprep.subr.bf16.mxu0 0
        %3455 = vmatpush1.bf16.xpose.msra.mxu0 0
        %3456 = vmatprep.subr.bf16.mxu0 0
        %3457 = vmatpush1.bf16.xpose.msra.mxu0 0
        %3458 = vmatprep.subr.bf16.mxu0 0
        %3459 = vmatpush1.bf16.xpose.msra.mxu0 0
        %3460 = vmatprep.subr.bf16.mxu0 0
        %3461 = vmatpush1.bf16.xpose.msra.mxu0 0
        %3462 = vmatprep.subr.bf16.mxu0 0
        %3463 = vmatpush1.bf16.xpose.msra.mxu0 %v3438
        %3464 = vmatprep.subr.bf16.mxu0 0
        %3465 = vmatpush2.bf16.xpose.msra.mxu0 0
        %3466 = vmatprep.subr.bf16.mxu0 0
        %3467 = vmatpush2.bf16.xpose.msra.mxu0 0
        %3468 = vmatprep.subr.bf16.mxu0 0
        %3469 = vmatpush2.bf16.xpose.msra.mxu0 0
        %3470 = vmatprep.subr.bf16.mxu0 0
        %3471 = vmatpush2.bf16.xpose.msra.mxu0 0
        %3472 = vmatprep.subr.bf16.mxu0 0
        %3473 = vmatpush2.bf16.xpose.msra.mxu0 0
        %3474 = vmatprep.subr.bf16.mxu0 0
        %3475 = vmatpush2.bf16.xpose.msra.mxu0 0
        %3476 = vmatprep.subr.bf16.mxu0 0
        %3477 = vmatpush2.bf16.xpose.msra.mxu0 0
        %3478 = vmatprep.subr.bf16.mxu0 0
        %3479 = vmatpush2.bf16.xpose.msra.mxu0 0
        %3480 = vmatprep.mubr.bf16.mxu0 0
        %3481 = vmatmul.mubr.bf16.gmra.mxu0 %v3436
        %v3482 = vpop.f32.mrf.mxu0
        %v3483 = vadd.f32 0.0, %v3482
        %v3484 = vpop.f32.mrf.mxu0
        %v3485 = vpop.f32.mrf.mxu0
        %v3486 = vpop.f32.mrf.mxu0
        %3487 = vdwg.mxu0
        %v3488 = vsel %vm3447, -1e+09, %v3483
        %v3489 = vsel %vm1974, %v3488, -inf
        %3490 = vmax.xlane.f32.xlu0 %v3489
        %v3491 = vpop.xlane.xlu0 %3490
        %v3492 = vsub.f32 %v3488, %v3491
        %v3493 = vmul.f32 %v3492, 1.442695
        %v3494 = vpow.pop %v3493
        %v3495 = vsel %vm1974, %v3494, 0.0
        %3496 = vadd.xlane.f32.xlu0 %v3495
        %v3497 = vpop.xlane.xlu0 %3496
        %v3498 = vrcp.pop %v3497
        %v3499 = vmul.f32 %v3494, %v3498
        %v3500 = vpack.c.bf16 %v3499, %v3499
        %v3502 = vsel %vm1974, %v3500, 0
        %v3505 = vsel %vm1990, %v3440, 0
        %3507 = vmatprep.subr.bf16.mxu0 0
        %3508 = vmatpush1.bf16.msra.mxu0 0
        %3509 = vmatprep.subr.bf16.mxu0 0
        %3510 = vmatpush1.bf16.msra.mxu0 0
        %3511 = vmatprep.subr.bf16.mxu0 0
        %3512 = vmatpush1.bf16.msra.mxu0 0
        %3513 = vmatprep.subr.bf16.mxu0 0
        %3514 = vmatpush1.bf16.msra.mxu0 0
        %3515 = vmatprep.subr.bf16.mxu0 0
        %3516 = vmatpush1.bf16.msra.mxu0 0
        %3517 = vmatprep.subr.bf16.mxu0 0
        %3518 = vmatpush1.bf16.msra.mxu0 0
        %3519 = vmatprep.subr.bf16.mxu0 0
        %3520 = vmatpush1.bf16.msra.mxu0 0
        %3521 = vmatprep.subr.bf16.mxu0 0
        %3522 = vmatpush1.bf16.msra.mxu0 %v3505
        %3523 = vmatprep.subr.bf16.mxu0 0
        %3524 = vmatpush2.bf16.msra.mxu0 0
        %3525 = vmatprep.subr.bf16.mxu0 0
        %3526 = vmatpush2.bf16.msra.mxu0 0
        %3527 = vmatprep.subr.bf16.mxu0 0
        %3528 = vmatpush2.bf16.msra.mxu0 0
        %3529 = vmatprep.subr.bf16.mxu0 0
        %3530 = vmatpush2.bf16.msra.mxu0 0
        %3531 = vmatprep.subr.bf16.mxu0 0
        %3532 = vmatpush2.bf16.msra.mxu0 0
        %3533 = vmatprep.subr.bf16.mxu0 0
        %3534 = vmatpush2.bf16.msra.mxu0 0
        %3535 = vmatprep.subr.bf16.mxu0 0
        %3536 = vmatpush2.bf16.msra.mxu0 0
        %3537 = vmatprep.subr.bf16.mxu0 0
        %3538 = vmatpush2.bf16.msra.mxu0 0
        %3539 = vmatprep.mubr.bf16.mxu0 0
        %3540 = vmatmul.mubr.bf16.gmra.mxu0 %v3502
        %v3541 = vpop.f32.mrf.mxu0
        %v3542 = vadd.f32 0.0, %v3541
        %v3543 = vpop.f32.mrf.mxu0
        %v3544 = vpop.f32.mrf.mxu0
        %v3545 = vpop.f32.mrf.mxu0
        %3546 = vdwg.mxu0
        %3547 = vst [vmem:[#allocation2] sm:$0xff] %v3542
        %3548 = vmatprep.subr.bf16.mxu0 0
        %3549 = vmatpush1.bf16.xpose.msra.mxu0 0
        %3550 = vmatprep.subr.bf16.mxu0 0
        %3551 = vmatpush1.bf16.xpose.msra.mxu0 0
        %3552 = vmatprep.subr.bf16.mxu0 0
        %3553 = vmatpush1.bf16.xpose.msra.mxu0 0
        %3554 = vmatprep.subr.bf16.mxu0 0
        %3555 = vmatpush1.bf16.xpose.msra.mxu0 0
        %3556 = vmatprep.subr.bf16.mxu0 0
        %3557 = vmatpush1.bf16.xpose.msra.mxu0 0
        %3558 = vmatprep.subr.bf16.mxu0 0
        %3559 = vmatpush1.bf16.xpose.msra.mxu0 0
        %3560 = vmatprep.subr.bf16.mxu0 0
        %3561 = vmatpush1.bf16.xpose.msra.mxu0 0
        %3562 = vmatprep.subr.bf16.mxu0 0
        %3563 = vmatpush1.bf16.xpose.msra.mxu0 %v3439
        %3564 = vmatprep.subr.bf16.mxu0 0
        %3565 = vmatpush2.bf16.xpose.msra.mxu0 0
        %3566 = vmatprep.subr.bf16.mxu0 0
        %3567 = vmatpush2.bf16.xpose.msra.mxu0 0
        %3568 = vmatprep.subr.bf16.mxu0 0
        %3569 = vmatpush2.bf16.xpose.msra.mxu0 0
        %3570 = vmatprep.subr.bf16.mxu0 0
        %3571 = vmatpush2.bf16.xpose.msra.mxu0 0
        %3572 = vmatprep.subr.bf16.mxu0 0
        %3573 = vmatpush2.bf16.xpose.msra.mxu0 0
        %3574 = vmatprep.subr.bf16.mxu0 0
        %3575 = vmatpush2.bf16.xpose.msra.mxu0 0
        %3576 = vmatprep.subr.bf16.mxu0 0
        %3577 = vmatpush2.bf16.xpose.msra.mxu0 0
        %3578 = vmatprep.subr.bf16.mxu0 0
        %3579 = vmatpush2.bf16.xpose.msra.mxu0 0
        %3580 = vmatprep.mubr.bf16.mxu0 0
        %3581 = vmatmul.mubr.bf16.gmra.mxu0 %v3437
        %v3582 = vpop.f32.mrf.mxu0
        %v3583 = vadd.f32 0.0, %v3582
        %v3584 = vpop.f32.mrf.mxu0
        %v3585 = vpop.f32.mrf.mxu0
        %v3586 = vpop.f32.mrf.mxu0
        %3587 = vdwg.mxu0
        %v3588 = vsel %vm3447, -1e+09, %v3583
        %v3589 = vsel %vm1974, %v3588, -inf
        %3590 = vmax.xlane.f32.xlu0 %v3589
        %v3591 = vpop.xlane.xlu0 %3590
        %v3592 = vsub.f32 %v3588, %v3591
        %v3593 = vmul.f32 %v3592, 1.442695
        %v3594 = vpow.pop %v3593
        %v3595 = vsel %vm1974, %v3594, 0.0
        %3596 = vadd.xlane.f32.xlu0 %v3595
        %v3597 = vpop.xlane.xlu0 %3596
        %v3598 = vrcp.pop %v3597
        %v3599 = vmul.f32 %v3594, %v3598
        %v3600 = vpack.c.bf16 %v3599, %v3599
        %v3602 = vsel %vm1974, %v3600, 0
        %v3605 = vsel %vm1990, %v3441, 0
        %3607 = vmatprep.subr.bf16.mxu0 0
        %3608 = vmatpush1.bf16.msra.mxu0 0
        %3609 = vmatprep.subr.bf16.mxu0 0
        %3610 = vmatpush1.bf16.msra.mxu0 0
        %3611 = vmatprep.subr.bf16.mxu0 0
        %3612 = vmatpush1.bf16.msra.mxu0 0
        %3613 = vmatprep.subr.bf16.mxu0 0
        %3614 = vmatpush1.bf16.msra.mxu0 0
        %3615 = vmatprep.subr.bf16.mxu0 0
        %3616 = vmatpush1.bf16.msra.mxu0 0
        %3617 = vmatprep.subr.bf16.mxu0 0
        %3618 = vmatpush1.bf16.msra.mxu0 0
        %3619 = vmatprep.subr.bf16.mxu0 0
        %3620 = vmatpush1.bf16.msra.mxu0 0
        %3621 = vmatprep.subr.bf16.mxu0 0
        %3622 = vmatpush1.bf16.msra.mxu0 %v3605
        %3623 = vmatprep.subr.bf16.mxu0 0
        %3624 = vmatpush2.bf16.msra.mxu0 0
        %3625 = vmatprep.subr.bf16.mxu0 0
        %3626 = vmatpush2.bf16.msra.mxu0 0
        %3627 = vmatprep.subr.bf16.mxu0 0
        %3628 = vmatpush2.bf16.msra.mxu0 0
        %3629 = vmatprep.subr.bf16.mxu0 0
        %3630 = vmatpush2.bf16.msra.mxu0 0
        %3631 = vmatprep.subr.bf16.mxu0 0
        %3632 = vmatpush2.bf16.msra.mxu0 0
        %3633 = vmatprep.subr.bf16.mxu0 0
        %3634 = vmatpush2.bf16.msra.mxu0 0
        %3635 = vmatprep.subr.bf16.mxu0 0
        %3636 = vmatpush2.bf16.msra.mxu0 0
        %3637 = vmatprep.subr.bf16.mxu0 0
        %3638 = vmatpush2.bf16.msra.mxu0 0
        %3639 = vmatprep.mubr.bf16.mxu0 0
        %3640 = vmatmul.mubr.bf16.gmra.mxu0 %v3602
        %v3641 = vpop.f32.mrf.mxu0
        %v3642 = vadd.f32 0.0, %v3641
        %v3643 = vpop.f32.mrf.mxu0
        %v3644 = vpop.f32.mrf.mxu0
        %v3645 = vpop.f32.mrf.mxu0
        %3646 = vdwg.mxu0
        %3647 = vst [vmem:[#allocation2 + $0x8] sm:$0xff] %v3642
        %s3648 = scalar_lea.vmem %s1090, 1
        %v3649 = vld [vmem:[%s3648] sm:$0x1]
        %v3650 = vlaneseq
        %v3651 = vshrl.u32 %v3650, 7
        %v3652 = vsub.s32 0, %v3651
        %v3653 = vrot.slane %v3649, %v3652
        %vm3654 = vcmp.eq.s32.totalorder %v3653, 0
        %v3656 = vrot.slane %v3436, 4
        %v3659 = vrot.slane %v3438, 4
        %3661 = vmatprep.subr.bf16.mxu0 0
        %3662 = vmatpush1.bf16.xpose.msra.mxu0 0
        %3663 = vmatprep.subr.bf16.mxu0 0
        %3664 = vmatpush1.bf16.xpose.msra.mxu0 0
        %3665 = vmatprep.subr.bf16.mxu0 0
        %3666 = vmatpush1.bf16.xpose.msra.mxu0 0
        %3667 = vmatprep.subr.bf16.mxu0 0
        %3668 = vmatpush1.bf16.xpose.msra.mxu0 0
        %3669 = vmatprep.subr.bf16.mxu0 0
        %3670 = vmatpush1.bf16.xpose.msra.mxu0 0
        %3671 = vmatprep.subr.bf16.mxu0 0
        %3672 = vmatpush1.bf16.xpose.msra.mxu0 0
        %3673 = vmatprep.subr.bf16.mxu0 0
        %3674 = vmatpush1.bf16.xpose.msra.mxu0 0
        %3675 = vmatprep.subr.bf16.mxu0 0
        %3676 = vmatpush1.bf16.xpose.msra.mxu0 %v3659
        %3677 = vmatprep.subr.bf16.mxu0 0
        %3678 = vmatpush2.bf16.xpose.msra.mxu0 0
        %3679 = vmatprep.subr.bf16.mxu0 0
        %3680 = vmatpush2.bf16.xpose.msra.mxu0 0
        %3681 = vmatprep.subr.bf16.mxu0 0
        %3682 = vmatpush2.bf16.xpose.msra.mxu0 0
        %3683 = vmatprep.subr.bf16.mxu0 0
        %3684 = vmatpush2.bf16.xpose.msra.mxu0 0
        %3685 = vmatprep.subr.bf16.mxu0 0
        %3686 = vmatpush2.bf16.xpose.msra.mxu0 0
        %3687 = vmatprep.subr.bf16.mxu0 0
        %3688 = vmatpush2.bf16.xpose.msra.mxu0 0
        %3689 = vmatprep.subr.bf16.mxu0 0
        %3690 = vmatpush2.bf16.xpose.msra.mxu0 0
        %3691 = vmatprep.subr.bf16.mxu0 0
        %3692 = vmatpush2.bf16.xpose.msra.mxu0 0
        %3693 = vmatprep.mubr.bf16.mxu0 0
        %3694 = vmatmul.mubr.bf16.gmra.mxu0 %v3656
        %v3695 = vpop.f32.mrf.mxu0
        %v3696 = vadd.f32 0.0, %v3695
        %v3697 = vpop.f32.mrf.mxu0
        %v3698 = vpop.f32.mrf.mxu0
        %v3699 = vpop.f32.mrf.mxu0
        %3700 = vdwg.mxu0
        %v3701 = vsel %vm3654, -1e+09, %v3696
        %v3702 = vsel %vm1974, %v3701, -inf
        %3703 = vmax.xlane.f32.xlu0 %v3702
        %v3704 = vpop.xlane.xlu0 %3703
        %v3705 = vsub.f32 %v3701, %v3704
        %v3706 = vmul.f32 %v3705, 1.442695
        %v3707 = vpow.pop %v3706
        %v3708 = vsel %vm1974, %v3707, 0.0
        %3709 = vadd.xlane.f32.xlu0 %v3708
        %v3710 = vpop.xlane.xlu0 %3709
        %v3711 = vrcp.pop %v3710
        %v3712 = vmul.f32 %v3707, %v3711
        %v3713 = vpack.c.bf16 %v3712, %v3712
        %v3715 = vrot.slane %v3440, 4
        %v3717 = vsel %vm1974, %v3713, 0
        %v3720 = vsel %vm1990, %v3715, 0
        %3722 = vmatprep.subr.bf16.mxu0 0
        %3723 = vmatpush1.bf16.msra.mxu0 0
        %3724 = vmatprep.subr.bf16.mxu0 0
        %3725 = vmatpush1.bf16.msra.mxu0 0
        %3726 = vmatprep.subr.bf16.mxu0 0
        %3727 = vmatpush1.bf16.msra.mxu0 0
        %3728 = vmatprep.subr.bf16.mxu0 0
        %3729 = vmatpush1.bf16.msra.mxu0 0
        %3730 = vmatprep.subr.bf16.mxu0 0
        %3731 = vmatpush1.bf16.msra.mxu0 0
        %3732 = vmatprep.subr.bf16.mxu0 0
        %3733 = vmatpush1.bf16.msra.mxu0 0
        %3734 = vmatprep.subr.bf16.mxu0 0
        %3735 = vmatpush1.bf16.msra.mxu0 0
        %3736 = vmatprep.subr.bf16.mxu0 0
        %3737 = vmatpush1.bf16.msra.mxu0 %v3720
        %3738 = vmatprep.subr.bf16.mxu0 0
        %3739 = vmatpush2.bf16.msra.mxu0 0
        %3740 = vmatprep.subr.bf16.mxu0 0
        %3741 = vmatpush2.bf16.msra.mxu0 0
        %3742 = vmatprep.subr.bf16.mxu0 0
        %3743 = vmatpush2.bf16.msra.mxu0 0
        %3744 = vmatprep.subr.bf16.mxu0 0
        %3745 = vmatpush2.bf16.msra.mxu0 0
        %3746 = vmatprep.subr.bf16.mxu0 0
        %3747 = vmatpush2.bf16.msra.mxu0 0
        %3748 = vmatprep.subr.bf16.mxu0 0
        %3749 = vmatpush2.bf16.msra.mxu0 0
        %3750 = vmatprep.subr.bf16.mxu0 0
        %3751 = vmatpush2.bf16.msra.mxu0 0
        %3752 = vmatprep.subr.bf16.mxu0 0
        %3753 = vmatpush2.bf16.msra.mxu0 0
        %3754 = vmatprep.mubr.bf16.mxu0 0
        %3755 = vmatmul.mubr.bf16.gmra.mxu0 %v3717
        %v3756 = vpop.f32.mrf.mxu0
        %v3757 = vadd.f32 0.0, %v3756
        %v3758 = vpop.f32.mrf.mxu0
        %v3759 = vpop.f32.mrf.mxu0
        %v3760 = vpop.f32.mrf.mxu0
        %3761 = vdwg.mxu0
        %3762 = vst [vmem:[#allocation2 + $0x10] sm:$0xff] %v3757
        %v3764 = vrot.slane %v3437, 4
        %v3767 = vrot.slane %v3439, 4
        %3769 = vmatprep.subr.bf16.mxu0 0
        %3770 = vmatpush1.bf16.xpose.msra.mxu0 0
        %3771 = vmatprep.subr.bf16.mxu0 0
        %3772 = vmatpush1.bf16.xpose.msra.mxu0 0
        %3773 = vmatprep.subr.bf16.mxu0 0
        %3774 = vmatpush1.bf16.xpose.msra.mxu0 0
        %3775 = vmatprep.subr.bf16.mxu0 0
        %3776 = vmatpush1.bf16.xpose.msra.mxu0 0
        %3777 = vmatprep.subr.bf16.mxu0 0
        %3778 = vmatpush1.bf16.xpose.msra.mxu0 0
        %3779 = vmatprep.subr.bf16.mxu0 0
        %3780 = vmatpush1.bf16.xpose.msra.mxu0 0
        %3781 = vmatprep.subr.bf16.mxu0 0
        %3782 = vmatpush1.bf16.xpose.msra.mxu0 0
        %3783 = vmatprep.subr.bf16.mxu0 0
        %3784 = vmatpush1.bf16.xpose.msra.mxu0 %v3767
        %3785 = vmatprep.subr.bf16.mxu0 0
        %3786 = vmatpush2.bf16.xpose.msra.mxu0 0
        %3787 = vmatprep.subr.bf16.mxu0 0
        %3788 = vmatpush2.bf16.xpose.msra.mxu0 0
        %3789 = vmatprep.subr.bf16.mxu0 0
        %3790 = vmatpush2.bf16.xpose.msra.mxu0 0
        %3791 = vmatprep.subr.bf16.mxu0 0
        %3792 = vmatpush2.bf16.xpose.msra.mxu0 0
        %3793 = vmatprep.subr.bf16.mxu0 0
        %3794 = vmatpush2.bf16.xpose.msra.mxu0 0
        %3795 = vmatprep.subr.bf16.mxu0 0
        %3796 = vmatpush2.bf16.xpose.msra.mxu0 0
        %3797 = vmatprep.subr.bf16.mxu0 0
        %3798 = vmatpush2.bf16.xpose.msra.mxu0 0
        %3799 = vmatprep.subr.bf16.mxu0 0
        %3800 = vmatpush2.bf16.xpose.msra.mxu0 0
        %3801 = vmatprep.mubr.bf16.mxu0 0
        %3802 = vmatmul.mubr.bf16.gmra.mxu0 %v3764
        %v3803 = vpop.f32.mrf.mxu0
        %v3804 = vadd.f32 0.0, %v3803
        %v3805 = vpop.f32.mrf.mxu0
        %v3806 = vpop.f32.mrf.mxu0
        %v3807 = vpop.f32.mrf.mxu0
        %3808 = vdwg.mxu0
        %v3809 = vsel %vm3654, -1e+09, %v3804
        %v3810 = vsel %vm1974, %v3809, -inf
        %3811 = vmax.xlane.f32.xlu0 %v3810
        %v3812 = vpop.xlane.xlu0 %3811
        %v3813 = vsub.f32 %v3809, %v3812
        %v3814 = vmul.f32 %v3813, 1.442695
        %v3815 = vpow.pop %v3814
        %v3816 = vsel %vm1974, %v3815, 0.0
        %3817 = vadd.xlane.f32.xlu0 %v3816
        %v3818 = vpop.xlane.xlu0 %3817
        %v3819 = vrcp.pop %v3818
        %v3820 = vmul.f32 %v3815, %v3819
        %v3821 = vpack.c.bf16 %v3820, %v3820
        %v3823 = vrot.slane %v3441, 4
        %v3825 = vsel %vm1974, %v3821, 0
        %v3828 = vsel %vm1990, %v3823, 0
        %3830 = vmatprep.subr.bf16.mxu0 0
        %3831 = vmatpush1.bf16.msra.mxu0 0
        %3832 = vmatprep.subr.bf16.mxu0 0
        %3833 = vmatpush1.bf16.msra.mxu0 0
        %3834 = vmatprep.subr.bf16.mxu0 0
        %3835 = vmatpush1.bf16.msra.mxu0 0
        %3836 = vmatprep.subr.bf16.mxu0 0
        %3837 = vmatpush1.bf16.msra.mxu0 0
        %3838 = vmatprep.subr.bf16.mxu0 0
        %3839 = vmatpush1.bf16.msra.mxu0 0
        %3840 = vmatprep.subr.bf16.mxu0 0
        %3841 = vmatpush1.bf16.msra.mxu0 0
        %3842 = vmatprep.subr.bf16.mxu0 0
        %3843 = vmatpush1.bf16.msra.mxu0 0
        %3844 = vmatprep.subr.bf16.mxu0 0
        %3845 = vmatpush1.bf16.msra.mxu0 %v3828
        %3846 = vmatprep.subr.bf16.mxu0 0
        %3847 = vmatpush2.bf16.msra.mxu0 0
        %3848 = vmatprep.subr.bf16.mxu0 0
        %3849 = vmatpush2.bf16.msra.mxu0 0
        %3850 = vmatprep.subr.bf16.mxu0 0
        %3851 = vmatpush2.bf16.msra.mxu0 0
        %3852 = vmatprep.subr.bf16.mxu0 0
        %3853 = vmatpush2.bf16.msra.mxu0 0
        %3854 = vmatprep.subr.bf16.mxu0 0
        %3855 = vmatpush2.bf16.msra.mxu0 0
        %3856 = vmatprep.subr.bf16.mxu0 0
        %3857 = vmatpush2.bf16.msra.mxu0 0
        %3858 = vmatprep.subr.bf16.mxu0 0
        %3859 = vmatpush2.bf16.msra.mxu0 0
        %3860 = vmatprep.subr.bf16.mxu0 0
        %3861 = vmatpush2.bf16.msra.mxu0 0
        %3862 = vmatprep.mubr.bf16.mxu0 0
        %3863 = vmatmul.mubr.bf16.gmra.mxu0 %v3825
        %v3864 = vpop.f32.mrf.mxu0
        %v3865 = vadd.f32 0.0, %v3864
        %v3866 = vpop.f32.mrf.mxu0
        %v3867 = vpop.f32.mrf.mxu0
        %v3868 = vpop.f32.mrf.mxu0
        %3869 = vdwg.mxu0
        %3870 = vst [vmem:[#allocation2 + $0x18] sm:$0xff] %v3865
        %v3871 = vld [vmem:[#allocation2] sm:$0xff]
        %v3872 = vld [vmem:[#allocation2 + $0x8] sm:$0xff]
        %v3873 = vld [vmem:[#allocation2 + $0x10] sm:$0xff]
        %v3874 = vld [vmem:[#allocation2 + $0x18] sm:$0xff]
        %v3875 = vpack.c.bf16 %v3873, %v3871
        %v3876 = vpack.c.bf16 %v3874, %v3872
        %v3877 = vld [vmem:[#allocation24] sm:$0xff]
        %v3878 = vld [vmem:[#allocation24 + $0x8] sm:$0xff]
        %v3879 = vld [vmem:[#allocation24 + $0x10] sm:$0xff]
        %v3880 = vld [vmem:[#allocation24 + $0x18] sm:$0xff]
        %v3881 = vld [vmem:[#allocation24 + $0x20] sm:$0xff]
        %v3882 = vld [vmem:[#allocation24 + $0x28] sm:$0xff]
        %v3883 = vld [vmem:[#allocation24 + $0x30] sm:$0xff]
        %v3884 = vld [vmem:[#allocation24 + $0x38] sm:$0xff]
        %v3885 = vld [vmem:[#allocation24 + $0x40] sm:$0xff]
        %v3886 = vld [vmem:[#allocation24 + $0x48] sm:$0xff]
        %v3887 = vld [vmem:[#allocation24 + $0x50] sm:$0xff]
        %v3888 = vld [vmem:[#allocation24 + $0x58] sm:$0xff]
        %v3889 = vld [vmem:[#allocation24 + $0x60] sm:$0xff]
        %v3890 = vld [vmem:[#allocation24 + $0x68] sm:$0xff]
        %v3891 = vld [vmem:[#allocation24 + $0x70] sm:$0xff]
        %v3892 = vld [vmem:[#allocation24 + $0x78] sm:$0xff]
        %v3893 = vld [vmem:[#allocation24 + $0x80] sm:$0xff]
        %v3894 = vld [vmem:[#allocation24 + $0x88] sm:$0xff]
        %v3895 = vld [vmem:[#allocation24 + $0x90] sm:$0xff]
        %v3896 = vld [vmem:[#allocation24 + $0x98] sm:$0xff]
        %v3897 = vld [vmem:[#allocation24 + $0xa0] sm:$0xff]
        %v3898 = vld [vmem:[#allocation24 + $0xa8] sm:$0xff]
        %v3899 = vld [vmem:[#allocation24 + $0xb0] sm:$0xff]
        %v3900 = vld [vmem:[#allocation24 + $0xb8] sm:$0xff]
        %v3901 = vld [vmem:[#allocation24 + $0xc0] sm:$0xff]
        %v3902 = vld [vmem:[#allocation24 + $0xc8] sm:$0xff]
        %v3903 = vld [vmem:[#allocation24 + $0xd0] sm:$0xff]
        %v3904 = vld [vmem:[#allocation24 + $0xd8] sm:$0xff]
        %v3905 = vld [vmem:[#allocation24 + $0xe0] sm:$0xff]
        %v3906 = vld [vmem:[#allocation24 + $0xe8] sm:$0xff]
        %v3907 = vld [vmem:[#allocation24 + $0xf0] sm:$0xff]
        %v3908 = vld [vmem:[#allocation24 + $0xf8] sm:$0xff]
        %v3909 = vld [vmem:[#allocation26] sm:$0x3]
        %v3911 = vlaneseq
        %v3912 = vshrl.u32 %v3911, 7
        %v3913 = vsub.s32 0, %v3912
        %v3914 = vrot.slane %v3909, %v3913
        %v3915 = vlaneseq
        %v3916 = vshrl.u32 %v3915, 7
        %v3917 = vsub.s32 1, %v3916
        %v3918 = vrot.slane %v3909, %v3917
        %v3953 = vunpack.c.l.b16 %v3877
        %v3954 = vunpack.c.h.b16 %v3877
        %v3955 = vunpack.c.l.b16 %v3878
        %v3956 = vunpack.c.h.b16 %v3878
        %v3957 = vunpack.c.l.b16 %v3879
        %v3958 = vunpack.c.h.b16 %v3879
        %v3959 = vunpack.c.l.b16 %v3880
        %v3960 = vunpack.c.h.b16 %v3880
        %v3961 = vunpack.c.l.b16 %v3881
        %v3962 = vunpack.c.h.b16 %v3881
        %v3963 = vunpack.c.l.b16 %v3882
        %v3964 = vunpack.c.h.b16 %v3882
        %v3965 = vunpack.c.l.b16 %v3883
        %v3966 = vunpack.c.h.b16 %v3883
        %v3967 = vunpack.c.l.b16 %v3884
        %v3968 = vunpack.c.h.b16 %v3884
        %v3969 = vunpack.c.l.b16 %v3885
        %v3970 = vunpack.c.h.b16 %v3885
        %v3971 = vunpack.c.l.b16 %v3886
        %v3972 = vunpack.c.h.b16 %v3886
        %v3973 = vunpack.c.l.b16 %v3887
        %v3974 = vunpack.c.h.b16 %v3887
        %v3975 = vunpack.c.l.b16 %v3888
        %v3976 = vunpack.c.h.b16 %v3888
        %v3977 = vunpack.c.l.b16 %v3889
        %v3978 = vunpack.c.h.b16 %v3889
        %v3979 = vunpack.c.l.b16 %v3890
        %v3980 = vunpack.c.h.b16 %v3890
        %v3981 = vunpack.c.l.b16 %v3891
        %v3982 = vunpack.c.h.b16 %v3891
        %v3983 = vunpack.c.l.b16 %v3892
        %v3984 = vunpack.c.h.b16 %v3892
        %v3985 = vunpack.c.l.b16 %v3893
        %v3986 = vunpack.c.h.b16 %v3893
        %v3987 = vunpack.c.l.b16 %v3894
        %v3988 = vunpack.c.h.b16 %v3894
        %v3989 = vunpack.c.l.b16 %v3895
        %v3990 = vunpack.c.h.b16 %v3895
        %v3991 = vunpack.c.l.b16 %v3896
        %v3992 = vunpack.c.h.b16 %v3896
        %v3993 = vunpack.c.l.b16 %v3897
        %v3994 = vunpack.c.h.b16 %v3897
        %v3995 = vunpack.c.l.b16 %v3898
        %v3996 = vunpack.c.h.b16 %v3898
        %v3997 = vunpack.c.l.b16 %v3899
        %v3998 = vunpack.c.h.b16 %v3899
        %v3999 = vunpack.c.l.b16 %v3900
        %v4000 = vunpack.c.h.b16 %v3900
        %v4001 = vunpack.c.l.b16 %v3901
        %v4002 = vunpack.c.h.b16 %v3901
        %v4003 = vunpack.c.l.b16 %v3902
        %v4004 = vunpack.c.h.b16 %v3902
        %v4005 = vunpack.c.l.b16 %v3903
        %v4006 = vunpack.c.h.b16 %v3903
        %v4007 = vunpack.c.l.b16 %v3904
        %v4008 = vunpack.c.h.b16 %v3904
        %v4009 = vunpack.c.l.b16 %v3905
        %v4010 = vunpack.c.h.b16 %v3905
        %v4011 = vunpack.c.l.b16 %v3906
        %v4012 = vunpack.c.h.b16 %v3906
        %v4013 = vunpack.c.l.b16 %v3907
        %v4014 = vunpack.c.h.b16 %v3907
        %v4015 = vunpack.c.l.b16 %v3908
        %v4016 = vunpack.c.h.b16 %v3908
        %v4017 = vpack.c.b16 %v3955, %v3953
        %v4018 = vpack.c.b16 %v3956, %v3954
        %v4019 = vpack.c.b16 %v3959, %v3957
        %v4020 = vpack.c.b16 %v3960, %v3958
        %v4021 = vpack.c.b16 %v3963, %v3961
        %v4022 = vpack.c.b16 %v3964, %v3962
        %v4023 = vpack.c.b16 %v3967, %v3965
        %v4024 = vpack.c.b16 %v3968, %v3966
        %v4025 = vpack.c.b16 %v3971, %v3969
        %v4026 = vpack.c.b16 %v3972, %v3970
        %v4027 = vpack.c.b16 %v3975, %v3973
        %v4028 = vpack.c.b16 %v3976, %v3974
        %v4029 = vpack.c.b16 %v3979, %v3977
        %v4030 = vpack.c.b16 %v3980, %v3978
        %v4031 = vpack.c.b16 %v3983, %v3981
        %v4032 = vpack.c.b16 %v3984, %v3982
        %v4033 = vpack.c.b16 %v3987, %v3985
        %v4034 = vpack.c.b16 %v3988, %v3986
        %v4035 = vpack.c.b16 %v3991, %v3989
        %v4036 = vpack.c.b16 %v3992, %v3990
        %v4037 = vpack.c.b16 %v3995, %v3993
        %v4038 = vpack.c.b16 %v3996, %v3994
        %v4039 = vpack.c.b16 %v3999, %v3997
        %v4040 = vpack.c.b16 %v4000, %v3998
        %v4041 = vpack.c.b16 %v4003, %v4001
        %v4042 = vpack.c.b16 %v4004, %v4002
        %v4043 = vpack.c.b16 %v4007, %v4005
        %v4044 = vpack.c.b16 %v4008, %v4006
        %v4045 = vpack.c.b16 %v4011, %v4009
        %v4046 = vpack.c.b16 %v4012, %v4010
        %v4047 = vpack.c.b16 %v4015, %v4013
        %v4048 = vpack.c.b16 %v4016, %v4014
        %4081 = vmatprep.subr.bf16.mxu0 %v4032
        %4082 = vmatpush1.bf16.msra.mxu0 %v4031
        %4083 = vmatprep.subr.bf16.mxu0 %v4030
        %4084 = vmatpush1.bf16.msra.mxu0 %v4029
        %4085 = vmatprep.subr.bf16.mxu0 %v4028
        %4086 = vmatpush1.bf16.msra.mxu0 %v4027
        %4087 = vmatprep.subr.bf16.mxu0 %v4026
        %4088 = vmatpush1.bf16.msra.mxu0 %v4025
        %4089 = vmatprep.subr.bf16.mxu0 %v4024
        %4090 = vmatpush1.bf16.msra.mxu0 %v4023
        %4091 = vmatprep.subr.bf16.mxu0 %v4022
        %4092 = vmatpush1.bf16.msra.mxu0 %v4021
        %4093 = vmatprep.subr.bf16.mxu0 %v4020
        %4094 = vmatpush1.bf16.msra.mxu0 %v4019
        %4095 = vmatprep.subr.bf16.mxu0 %v4018
        %4096 = vmatpush1.bf16.msra.mxu0 %v4017
        %4097 = vmatprep.subr.bf16.mxu0 %v4048
        %4098 = vmatpush2.bf16.msra.mxu0 %v4047
        %4099 = vmatprep.subr.bf16.mxu0 %v4046
        %4100 = vmatpush2.bf16.msra.mxu0 %v4045
        %4101 = vmatprep.subr.bf16.mxu0 %v4044
        %4102 = vmatpush2.bf16.msra.mxu0 %v4043
        %4103 = vmatprep.subr.bf16.mxu0 %v4042
        %4104 = vmatpush2.bf16.msra.mxu0 %v4041
        %4105 = vmatprep.subr.bf16.mxu0 %v4040
        %4106 = vmatpush2.bf16.msra.mxu0 %v4039
        %4107 = vmatprep.subr.bf16.mxu0 %v4038
        %4108 = vmatpush2.bf16.msra.mxu0 %v4037
        %4109 = vmatprep.subr.bf16.mxu0 %v4036
        %4110 = vmatpush2.bf16.msra.mxu0 %v4035
        %4111 = vmatprep.subr.bf16.mxu0 %v4034
        %4112 = vmatpush2.bf16.msra.mxu0 %v4033
        %4113 = vmatprep.mubr.bf16.mxu0 %v3876
        %4114 = vmatmul.mubr.bf16.gmra.mxu0 %v3875
        %v4115 = vpop.f32.mrf.mxu0
        %v4116 = vadd.f32 %v3914, %v4115
        %v4117 = vpop.f32.mrf.mxu0
        %v4118 = vadd.f32 %v3918, %v4117
        %v4119 = vpop.f32.mrf.mxu0
        %v4120 = vadd.f32 %v3914, %v4119
        %v4121 = vpop.f32.mrf.mxu0
        %v4122 = vadd.f32 %v3918, %v4121
        %4123 = vdwg.mxu0
        %v4124 = vadd.f32 %v2607, %v4116
        %v4125 = vadd.f32 %v2608, %v4118
        %v4126 = vadd.f32 %v2609, %v4120
        %v4127 = vadd.f32 %v2610, %v4122
        %v4128 = vld [vmem:[#allocation27] sm:$0x3]
        %v4129 = vld [vmem:[#allocation29] sm:$0x3]
        %v4130 = vadd.f32 %v4124, %v4125
        %4131 = vadd.xlane.f32.xlu0 %v4130
        %v4132 = vpop.xlane.xlu0 %4131
        %v4133 = vadd.f32 %v4126, %v4127
        %4134 = vadd.xlane.f32.xlu0 %v4133
        %v4135 = vpop.xlane.xlu0 %4134
        %v4136 = vmul.f32 %v4132, %v1110
        %v4137 = vmul.f32 %v4135, %v1110
        %v4138 = vsub.f32 %v4124, %v4136
        %v4139 = vsub.f32 %v4125, %v4136
        %v4140 = vsub.f32 %v4126, %v4137
        %v4141 = vsub.f32 %v4127, %v4137
        %v4142 = vmul.f32 %v4138, %v4138
        %v4143 = vmul.f32 %v4139, %v4139
        %v4144 = vmul.f32 %v4140, %v4140
        %v4145 = vmul.f32 %v4141, %v4141
        %v4146 = vadd.f32 %v4142, %v4143
        %4147 = vadd.xlane.f32.xlu0 %v4146
        %v4148 = vpop.xlane.xlu0 %4147
        %v4149 = vadd.f32 %v4144, %v4145
        %4150 = vadd.xlane.f32.xlu0 %v4149
        %v4151 = vpop.xlane.xlu0 %4150
        %v4152 = vmul.f32 %v4148, %v1127
        %v4153 = vmul.f32 %v4151, %v1127
        %v4155 = vlaneseq
        %v4156 = vshrl.u32 %v4155, 7
        %v4157 = vsub.s32 0, %v4156
        %v4158 = vrot.slane %v4128, %v4157
        %v4159 = vlaneseq
        %v4160 = vshrl.u32 %v4159, 7
        %v4161 = vsub.s32 1, %v4160
        %v4162 = vrot.slane %v4128, %v4161
        %v4165 = vmul.f32 %v4158, %v4138
        %v4166 = vmul.f32 %v4162, %v4139
        %v4167 = vmul.f32 %v4158, %v4140
        %v4168 = vmul.f32 %v4162, %v4141
        %v4169 = vrsqrt.pop %v4152
        %v4170 = vmul.f32 %v4152, %v4169
        %vm4171 = vcmp.eq.f32.partialorder %v4152, inf
        %v4172 = vsel %vm4171, %v4152, %v4170
        %vm4173 = vcmp.eq.f32.partialorder %v4152, 0.0
        %v4174 = vand.u32 %v4152, 2147483648
        %v4175 = vsel %vm4173, %v4174, %v4172
        %v4176 = vrsqrt.pop %v4153
        %v4177 = vmul.f32 %v4153, %v4176
        %vm4178 = vcmp.eq.f32.partialorder %v4153, inf
        %v4179 = vsel %vm4178, %v4153, %v4177
        %vm4180 = vcmp.eq.f32.partialorder %v4153, 0.0
        %v4181 = vand.u32 %v4153, 2147483648
        %v4182 = vsel %vm4180, %v4181, %v4179
        %v4183 = vadd.f32 %v4175, 1e-06
        %v4184 = vadd.f32 %v4182, 1e-06
        %v4185 = vrcp.pop %v4183
        %v4186 = vmul.f32 %v4165, %v4185
        %v4187 = vmul.f32 %v4166, %v4185
        %v4188 = vrcp.pop %v4184
        %v4189 = vmul.f32 %v4167, %v4188
        %v4190 = vmul.f32 %v4168, %v4188
        %v4192 = vlaneseq
        %v4193 = vshrl.u32 %v4192, 7
        %v4194 = vsub.s32 0, %v4193
        %v4195 = vrot.slane %v4129, %v4194
        %v4196 = vlaneseq
        %v4197 = vshrl.u32 %v4196, 7
        %v4198 = vsub.s32 1, %v4197
        %v4199 = vrot.slane %v4129, %v4198
        %v4202 = vadd.f32 %v4186, %v4195
        %v4203 = vadd.f32 %v4187, %v4199
        %v4204 = vadd.f32 %v4189, %v4195
        %v4205 = vadd.f32 %v4190, %v4199
        %v4206 = vpack.c.bf16 %v4204, %v4202
        %v4207 = vpack.c.bf16 %v4205, %v4203
        %v4208 = vld [vmem:[#allocation30] sm:$0xff]
        %v4209 = vld [vmem:[#allocation30 + $0x8] sm:$0xff]
        %v4210 = vld [vmem:[#allocation30 + $0x10] sm:$0xff]
        %v4211 = vld [vmem:[#allocation30 + $0x18] sm:$0xff]
        %v4212 = vld [vmem:[#allocation30 + $0x20] sm:$0xff]
        %v4213 = vld [vmem:[#allocation30 + $0x28] sm:$0xff]
        %v4214 = vld [vmem:[#allocation30 + $0x30] sm:$0xff]
        %v4215 = vld [vmem:[#allocation30 + $0x38] sm:$0xff]
        %v4216 = vld [vmem:[#allocation30 + $0x40] sm:$0xff]
        %v4217 = vld [vmem:[#allocation30 + $0x48] sm:$0xff]
        %v4218 = vld [vmem:[#allocation30 + $0x50] sm:$0xff]
        %v4219 = vld [vmem:[#allocation30 + $0x58] sm:$0xff]
        %v4220 = vld [vmem:[#allocation30 + $0x60] sm:$0xff]
        %v4221 = vld [vmem:[#allocation30 + $0x68] sm:$0xff]
        %v4222 = vld [vmem:[#allocation30 + $0x70] sm:$0xff]
        %v4223 = vld [vmem:[#allocation30 + $0x78] sm:$0xff]
        %v4224 = vld [vmem:[#allocation30 + $0x80] sm:$0xff]
        %v4225 = vld [vmem:[#allocation30 + $0x88] sm:$0xff]
        %v4226 = vld [vmem:[#allocation30 + $0x90] sm:$0xff]
        %v4227 = vld [vmem:[#allocation30 + $0x98] sm:$0xff]
        %v4228 = vld [vmem:[#allocation30 + $0xa0] sm:$0xff]
        %v4229 = vld [vmem:[#allocation30 + $0xa8] sm:$0xff]
        %v4230 = vld [vmem:[#allocation30 + $0xb0] sm:$0xff]
        %v4231 = vld [vmem:[#allocation30 + $0xb8] sm:$0xff]
        %v4232 = vld [vmem:[#allocation30 + $0xc0] sm:$0xff]
        %v4233 = vld [vmem:[#allocation30 + $0xc8] sm:$0xff]
        %v4234 = vld [vmem:[#allocation30 + $0xd0] sm:$0xff]
        %v4235 = vld [vmem:[#allocation30 + $0xd8] sm:$0xff]
        %v4236 = vld [vmem:[#allocation30 + $0xe0] sm:$0xff]
        %v4237 = vld [vmem:[#allocation30 + $0xe8] sm:$0xff]
        %v4238 = vld [vmem:[#allocation30 + $0xf0] sm:$0xff]
        %v4239 = vld [vmem:[#allocation30 + $0xf8] sm:$0xff]
        %v4240 = vld [vmem:[#allocation30 + $0x100] sm:$0xff]
        %v4241 = vld [vmem:[#allocation30 + $0x108] sm:$0xff]
        %v4242 = vld [vmem:[#allocation30 + $0x110] sm:$0xff]
        %v4243 = vld [vmem:[#allocation30 + $0x118] sm:$0xff]
        %v4244 = vld [vmem:[#allocation30 + $0x120] sm:$0xff]
        %v4245 = vld [vmem:[#allocation30 + $0x128] sm:$0xff]
        %v4246 = vld [vmem:[#allocation30 + $0x130] sm:$0xff]
        %v4247 = vld [vmem:[#allocation30 + $0x138] sm:$0xff]
        %v4248 = vld [vmem:[#allocation30 + $0x140] sm:$0xff]
        %v4249 = vld [vmem:[#allocation30 + $0x148] sm:$0xff]
        %v4250 = vld [vmem:[#allocation30 + $0x150] sm:$0xff]
        %v4251 = vld [vmem:[#allocation30 + $0x158] sm:$0xff]
        %v4252 = vld [vmem:[#allocation30 + $0x160] sm:$0xff]
        %v4253 = vld [vmem:[#allocation30 + $0x168] sm:$0xff]
        %v4254 = vld [vmem:[#allocation30 + $0x170] sm:$0xff]
        %v4255 = vld [vmem:[#allocation30 + $0x178] sm:$0xff]
        %v4256 = vld [vmem:[#allocation30 + $0x180] sm:$0xff]
        %v4257 = vld [vmem:[#allocation30 + $0x188] sm:$0xff]
        %v4258 = vld [vmem:[#allocation30 + $0x190] sm:$0xff]
        %v4259 = vld [vmem:[#allocation30 + $0x198] sm:$0xff]
        %v4260 = vld [vmem:[#allocation30 + $0x1a0] sm:$0xff]
        %v4261 = vld [vmem:[#allocation30 + $0x1a8] sm:$0xff]
        %v4262 = vld [vmem:[#allocation30 + $0x1b0] sm:$0xff]
        %v4263 = vld [vmem:[#allocation30 + $0x1b8] sm:$0xff]
        %v4264 = vld [vmem:[#allocation30 + $0x1c0] sm:$0xff]
        %v4265 = vld [vmem:[#allocation30 + $0x1c8] sm:$0xff]
        %v4266 = vld [vmem:[#allocation30 + $0x1d0] sm:$0xff]
        %v4267 = vld [vmem:[#allocation30 + $0x1d8] sm:$0xff]
        %v4268 = vld [vmem:[#allocation30 + $0x1e0] sm:$0xff]
        %v4269 = vld [vmem:[#allocation30 + $0x1e8] sm:$0xff]
        %v4270 = vld [vmem:[#allocation30 + $0x1f0] sm:$0xff]
        %v4271 = vld [vmem:[#allocation30 + $0x1f8] sm:$0xff]
        %v4272 = vld [vmem:[#allocation32] sm:$0xf]
        %v4274 = vlaneseq
        %v4275 = vshrl.u32 %v4274, 7
        %v4276 = vsub.s32 0, %v4275
        %v4277 = vrot.slane %v4272, %v4276
        %v4278 = vlaneseq
        %v4279 = vshrl.u32 %v4278, 7
        %v4280 = vsub.s32 1, %v4279
        %v4281 = vrot.slane %v4272, %v4280
        %v4282 = vlaneseq
        %v4283 = vshrl.u32 %v4282, 7
        %v4284 = vsub.s32 2, %v4283
        %v4285 = vrot.slane %v4272, %v4284
        %v4286 = vlaneseq
        %v4287 = vshrl.u32 %v4286, 7
        %v4288 = vsub.s32 3, %v4287
        %v4289 = vrot.slane %v4272, %v4288
        %v4358 = vunpack.c.l.b16 %v4208
        %v4359 = vunpack.c.h.b16 %v4208
        %v4360 = vunpack.c.l.b16 %v4209
        %v4361 = vunpack.c.h.b16 %v4209
        %v4362 = vunpack.c.l.b16 %v4210
        %v4363 = vunpack.c.h.b16 %v4210
        %v4364 = vunpack.c.l.b16 %v4211
        %v4365 = vunpack.c.h.b16 %v4211
        %v4366 = vunpack.c.l.b16 %v4212
        %v4367 = vunpack.c.h.b16 %v4212
        %v4368 = vunpack.c.l.b16 %v4213
        %v4369 = vunpack.c.h.b16 %v4213
        %v4370 = vunpack.c.l.b16 %v4214
        %v4371 = vunpack.c.h.b16 %v4214
        %v4372 = vunpack.c.l.b16 %v4215
        %v4373 = vunpack.c.h.b16 %v4215
        %v4374 = vunpack.c.l.b16 %v4216
        %v4375 = vunpack.c.h.b16 %v4216
        %v4376 = vunpack.c.l.b16 %v4217
        %v4377 = vunpack.c.h.b16 %v4217
        %v4378 = vunpack.c.l.b16 %v4218
        %v4379 = vunpack.c.h.b16 %v4218
        %v4380 = vunpack.c.l.b16 %v4219
        %v4381 = vunpack.c.h.b16 %v4219
        %v4382 = vunpack.c.l.b16 %v4220
        %v4383 = vunpack.c.h.b16 %v4220
        %v4384 = vunpack.c.l.b16 %v4221
        %v4385 = vunpack.c.h.b16 %v4221
        %v4386 = vunpack.c.l.b16 %v4222
        %v4387 = vunpack.c.h.b16 %v4222
        %v4388 = vunpack.c.l.b16 %v4223
        %v4389 = vunpack.c.h.b16 %v4223
        %v4390 = vunpack.c.l.b16 %v4224
        %v4391 = vunpack.c.h.b16 %v4224
        %v4392 = vunpack.c.l.b16 %v4225
        %v4393 = vunpack.c.h.b16 %v4225
        %v4394 = vunpack.c.l.b16 %v4226
        %v4395 = vunpack.c.h.b16 %v4226
        %v4396 = vunpack.c.l.b16 %v4227
        %v4397 = vunpack.c.h.b16 %v4227
        %v4398 = vunpack.c.l.b16 %v4228
        %v4399 = vunpack.c.h.b16 %v4228
        %v4400 = vunpack.c.l.b16 %v4229
        %v4401 = vunpack.c.h.b16 %v4229
        %v4402 = vunpack.c.l.b16 %v4230
        %v4403 = vunpack.c.h.b16 %v4230
        %v4404 = vunpack.c.l.b16 %v4231
        %v4405 = vunpack.c.h.b16 %v4231
        %v4406 = vunpack.c.l.b16 %v4232
        %v4407 = vunpack.c.h.b16 %v4232
        %v4408 = vunpack.c.l.b16 %v4233
        %v4409 = vunpack.c.h.b16 %v4233
        %v4410 = vunpack.c.l.b16 %v4234
        %v4411 = vunpack.c.h.b16 %v4234
        %v4412 = vunpack.c.l.b16 %v4235
        %v4413 = vunpack.c.h.b16 %v4235
        %v4414 = vunpack.c.l.b16 %v4236
        %v4415 = vunpack.c.h.b16 %v4236
        %v4416 = vunpack.c.l.b16 %v4237
        %v4417 = vunpack.c.h.b16 %v4237
        %v4418 = vunpack.c.l.b16 %v4238
        %v4419 = vunpack.c.h.b16 %v4238
        %v4420 = vunpack.c.l.b16 %v4239
        %v4421 = vunpack.c.h.b16 %v4239
        %v4422 = vunpack.c.l.b16 %v4240
        %v4423 = vunpack.c.h.b16 %v4240
        %v4424 = vunpack.c.l.b16 %v4241
        %v4425 = vunpack.c.h.b16 %v4241
        %v4426 = vunpack.c.l.b16 %v4242
        %v4427 = vunpack.c.h.b16 %v4242
        %v4428 = vunpack.c.l.b16 %v4243
        %v4429 = vunpack.c.h.b16 %v4243
        %v4430 = vunpack.c.l.b16 %v4244
        %v4431 = vunpack.c.h.b16 %v4244
        %v4432 = vunpack.c.l.b16 %v4245
        %v4433 = vunpack.c.h.b16 %v4245
        %v4434 = vunpack.c.l.b16 %v4246
        %v4435 = vunpack.c.h.b16 %v4246
        %v4436 = vunpack.c.l.b16 %v4247
        %v4437 = vunpack.c.h.b16 %v4247
        %v4438 = vunpack.c.l.b16 %v4248
        %v4439 = vunpack.c.h.b16 %v4248
        %v4440 = vunpack.c.l.b16 %v4249
        %v4441 = vunpack.c.h.b16 %v4249
        %v4442 = vunpack.c.l.b16 %v4250
        %v4443 = vunpack.c.h.b16 %v4250
        %v4444 = vunpack.c.l.b16 %v4251
        %v4445 = vunpack.c.h.b16 %v4251
        %v4446 = vunpack.c.l.b16 %v4252
        %v4447 = vunpack.c.h.b16 %v4252
        %v4448 = vunpack.c.l.b16 %v4253
        %v4449 = vunpack.c.h.b16 %v4253
        %v4450 = vunpack.c.l.b16 %v4254
        %v4451 = vunpack.c.h.b16 %v4254
        %v4452 = vunpack.c.l.b16 %v4255
        %v4453 = vunpack.c.h.b16 %v4255
        %v4454 = vunpack.c.l.b16 %v4256
        %v4455 = vunpack.c.h.b16 %v4256
        %v4456 = vunpack.c.l.b16 %v4257
        %v4457 = vunpack.c.h.b16 %v4257
        %v4458 = vunpack.c.l.b16 %v4258
        %v4459 = vunpack.c.h.b16 %v4258
        %v4460 = vunpack.c.l.b16 %v4259
        %v4461 = vunpack.c.h.b16 %v4259
        %v4462 = vunpack.c.l.b16 %v4260
        %v4463 = vunpack.c.h.b16 %v4260
        %v4464 = vunpack.c.l.b16 %v4261
        %v4465 = vunpack.c.h.b16 %v4261
        %v4466 = vunpack.c.l.b16 %v4262
        %v4467 = vunpack.c.h.b16 %v4262
        %v4468 = vunpack.c.l.b16 %v4263
        %v4469 = vunpack.c.h.b16 %v4263
        %v4470 = vunpack.c.l.b16 %v4264
        %v4471 = vunpack.c.h.b16 %v4264
        %v4472 = vunpack.c.l.b16 %v4265
        %v4473 = vunpack.c.h.b16 %v4265
        %v4474 = vunpack.c.l.b16 %v4266
        %v4475 = vunpack.c.h.b16 %v4266
        %v4476 = vunpack.c.l.b16 %v4267
        %v4477 = vunpack.c.h.b16 %v4267
        %v4478 = vunpack.c.l.b16 %v4268
        %v4479 = vunpack.c.h.b16 %v4268
        %v4480 = vunpack.c.l.b16 %v4269
        %v4481 = vunpack.c.h.b16 %v4269
        %v4482 = vunpack.c.l.b16 %v4270
        %v4483 = vunpack.c.h.b16 %v4270
        %v4484 = vunpack.c.l.b16 %v4271
        %v4485 = vunpack.c.h.b16 %v4271
        %v4486 = vpack.c.b16 %v4362, %v4358
        %v4487 = vpack.c.b16 %v4363, %v4359
        %v4488 = vpack.c.b16 %v4364, %v4360
        %v4489 = vpack.c.b16 %v4365, %v4361
        %v4490 = vpack.c.b16 %v4370, %v4366
        %v4491 = vpack.c.b16 %v4371, %v4367
        %v4492 = vpack.c.b16 %v4372, %v4368
        %v4493 = vpack.c.b16 %v4373, %v4369
        %v4494 = vpack.c.b16 %v4378, %v4374
        %v4495 = vpack.c.b16 %v4379, %v4375
        %v4496 = vpack.c.b16 %v4380, %v4376
        %v4497 = vpack.c.b16 %v4381, %v4377
        %v4498 = vpack.c.b16 %v4386, %v4382
        %v4499 = vpack.c.b16 %v4387, %v4383
        %v4500 = vpack.c.b16 %v4388, %v4384
        %v4501 = vpack.c.b16 %v4389, %v4385
        %v4502 = vpack.c.b16 %v4394, %v4390
        %v4503 = vpack.c.b16 %v4395, %v4391
        %v4504 = vpack.c.b16 %v4396, %v4392
        %v4505 = vpack.c.b16 %v4397, %v4393
        %v4506 = vpack.c.b16 %v4402, %v4398
        %v4507 = vpack.c.b16 %v4403, %v4399
        %v4508 = vpack.c.b16 %v4404, %v4400
        %v4509 = vpack.c.b16 %v4405, %v4401
        %v4510 = vpack.c.b16 %v4410, %v4406
        %v4511 = vpack.c.b16 %v4411, %v4407
        %v4512 = vpack.c.b16 %v4412, %v4408
        %v4513 = vpack.c.b16 %v4413, %v4409
        %v4514 = vpack.c.b16 %v4418, %v4414
        %v4515 = vpack.c.b16 %v4419, %v4415
        %v4516 = vpack.c.b16 %v4420, %v4416
        %v4517 = vpack.c.b16 %v4421, %v4417
        %v4518 = vpack.c.b16 %v4426, %v4422
        %v4519 = vpack.c.b16 %v4427, %v4423
        %v4520 = vpack.c.b16 %v4428, %v4424
        %v4521 = vpack.c.b16 %v4429, %v4425
        %v4522 = vpack.c.b16 %v4434, %v4430
        %v4523 = vpack.c.b16 %v4435, %v4431
        %v4524 = vpack.c.b16 %v4436, %v4432
        %v4525 = vpack.c.b16 %v4437, %v4433
        %v4526 = vpack.c.b16 %v4442, %v4438
        %v4527 = vpack.c.b16 %v4443, %v4439
        %v4528 = vpack.c.b16 %v4444, %v4440
        %v4529 = vpack.c.b16 %v4445, %v4441
        %v4530 = vpack.c.b16 %v4450, %v4446
        %v4531 = vpack.c.b16 %v4451, %v4447
        %v4532 = vpack.c.b16 %v4452, %v4448
        %v4533 = vpack.c.b16 %v4453, %v4449
        %v4534 = vpack.c.b16 %v4458, %v4454
        %v4535 = vpack.c.b16 %v4459, %v4455
        %v4536 = vpack.c.b16 %v4460, %v4456
        %v4537 = vpack.c.b16 %v4461, %v4457
        %v4538 = vpack.c.b16 %v4466, %v4462
        %v4539 = vpack.c.b16 %v4467, %v4463
        %v4540 = vpack.c.b16 %v4468, %v4464
        %v4541 = vpack.c.b16 %v4469, %v4465
        %v4542 = vpack.c.b16 %v4474, %v4470
        %v4543 = vpack.c.b16 %v4475, %v4471
        %v4544 = vpack.c.b16 %v4476, %v4472
        %v4545 = vpack.c.b16 %v4477, %v4473
        %v4546 = vpack.c.b16 %v4482, %v4478
        %v4547 = vpack.c.b16 %v4483, %v4479
        %v4548 = vpack.c.b16 %v4484, %v4480
        %v4549 = vpack.c.b16 %v4485, %v4481
        %4614 = vmatprep.subr.bf16.mxu0 %v4515
        %4615 = vmatpush1.bf16.msra.mxu0 %v4514
        %4616 = vmatprep.subr.bf16.mxu0 %v4511
        %4617 = vmatpush1.bf16.msra.mxu0 %v4510
        %4618 = vmatprep.subr.bf16.mxu0 %v4507
        %4619 = vmatpush1.bf16.msra.mxu0 %v4506
        %4620 = vmatprep.subr.bf16.mxu0 %v4503
        %4621 = vmatpush1.bf16.msra.mxu0 %v4502
        %4622 = vmatprep.subr.bf16.mxu0 %v4499
        %4623 = vmatpush1.bf16.msra.mxu0 %v4498
        %4624 = vmatprep.subr.bf16.mxu0 %v4495
        %4625 = vmatpush1.bf16.msra.mxu0 %v4494
        %4626 = vmatprep.subr.bf16.mxu0 %v4491
        %4627 = vmatpush1.bf16.msra.mxu0 %v4490
        %4628 = vmatprep.subr.bf16.mxu0 %v4487
        %4629 = vmatpush1.bf16.msra.mxu0 %v4486
        %4630 = vmatprep.subr.bf16.mxu0 %v4547
        %4631 = vmatpush2.bf16.msra.mxu0 %v4546
        %4632 = vmatprep.subr.bf16.mxu0 %v4543
        %4633 = vmatpush2.bf16.msra.mxu0 %v4542
        %4634 = vmatprep.subr.bf16.mxu0 %v4539
        %4635 = vmatpush2.bf16.msra.mxu0 %v4538
        %4636 = vmatprep.subr.bf16.mxu0 %v4535
        %4637 = vmatpush2.bf16.msra.mxu0 %v4534
        %4638 = vmatprep.subr.bf16.mxu0 %v4531
        %4639 = vmatpush2.bf16.msra.mxu0 %v4530
        %4640 = vmatprep.subr.bf16.mxu0 %v4527
        %4641 = vmatpush2.bf16.msra.mxu0 %v4526
        %4642 = vmatprep.subr.bf16.mxu0 %v4523
        %4643 = vmatpush2.bf16.msra.mxu0 %v4522
        %4644 = vmatprep.subr.bf16.mxu0 %v4519
        %4645 = vmatpush2.bf16.msra.mxu0 %v4518
        %4646 = vmatprep.mubr.bf16.mxu0 %v4207
        %4647 = vmatmul.mubr.bf16.gmra.mxu0 %v4206
        %v4648 = vpop.f32.mrf.mxu0
        %v4649 = vadd.f32 %v4277, %v4648
        %v4650 = vpop.f32.mrf.mxu0
        %v4651 = vadd.f32 %v4281, %v4650
        %v4652 = vpop.f32.mrf.mxu0
        %v4653 = vadd.f32 %v4277, %v4652
        %v4654 = vpop.f32.mrf.mxu0
        %v4655 = vadd.f32 %v4281, %v4654
        %4656 = vdwg.mxu0
        %4657 = vmatprep.subr.bf16.mxu0 %v4517
        %4658 = vmatpush1.bf16.msra.mxu0 %v4516
        %4659 = vmatprep.subr.bf16.mxu0 %v4513
        %4660 = vmatpush1.bf16.msra.mxu0 %v4512
        %4661 = vmatprep.subr.bf16.mxu0 %v4509
        %4662 = vmatpush1.bf16.msra.mxu0 %v4508
        %4663 = vmatprep.subr.bf16.mxu0 %v4505
        %4664 = vmatpush1.bf16.msra.mxu0 %v4504
        %4665 = vmatprep.subr.bf16.mxu0 %v4501
        %4666 = vmatpush1.bf16.msra.mxu0 %v4500
        %4667 = vmatprep.subr.bf16.mxu0 %v4497
        %4668 = vmatpush1.bf16.msra.mxu0 %v4496
        %4669 = vmatprep.subr.bf16.mxu0 %v4493
        %4670 = vmatpush1.bf16.msra.mxu0 %v4492
        %4671 = vmatprep.subr.bf16.mxu0 %v4489
        %4672 = vmatpush1.bf16.msra.mxu0 %v4488
        %4673 = vmatprep.subr.bf16.mxu0 %v4549
        %4674 = vmatpush2.bf16.msra.mxu0 %v4548
        %4675 = vmatprep.subr.bf16.mxu0 %v4545
        %4676 = vmatpush2.bf16.msra.mxu0 %v4544
        %4677 = vmatprep.subr.bf16.mxu0 %v4541
        %4678 = vmatpush2.bf16.msra.mxu0 %v4540
        %4679 = vmatprep.subr.bf16.mxu0 %v4537
        %4680 = vmatpush2.bf16.msra.mxu0 %v4536
        %4681 = vmatprep.subr.bf16.mxu0 %v4533
        %4682 = vmatpush2.bf16.msra.mxu0 %v4532
        %4683 = vmatprep.subr.bf16.mxu0 %v4529
        %4684 = vmatpush2.bf16.msra.mxu0 %v4528
        %4685 = vmatprep.subr.bf16.mxu0 %v4525
        %4686 = vmatpush2.bf16.msra.mxu0 %v4524
        %4687 = vmatprep.subr.bf16.mxu0 %v4521
        %4688 = vmatpush2.bf16.msra.mxu0 %v4520
        %4689 = vmatprep.mubr.bf16.mxu0 %v4207
        %4690 = vmatmul.mubr.bf16.gmra.mxu0 %v4206
        %v4691 = vpop.f32.mrf.mxu0
        %v4692 = vadd.f32 %v4285, %v4691
        %v4693 = vpop.f32.mrf.mxu0
        %v4694 = vadd.f32 %v4289, %v4693
        %v4695 = vpop.f32.mrf.mxu0
        %v4696 = vadd.f32 %v4285, %v4695
        %v4697 = vpop.f32.mrf.mxu0
        %v4698 = vadd.f32 %v4289, %v4697
        %4699 = vdwg.mxu0
        %v4700 = vmax.f32 %v4649, 0.0
        %v4701 = vmax.f32 %v4651, 0.0
        %v4702 = vmax.f32 %v4692, 0.0
        %v4703 = vmax.f32 %v4694, 0.0
        %v4704 = vmax.f32 %v4653, 0.0
        %v4705 = vmax.f32 %v4655, 0.0
        %v4706 = vmax.f32 %v4696, 0.0
        %v4707 = vmax.f32 %v4698, 0.0
        %v4708 = vpack.c.bf16 %v4704, %v4700
        %v4709 = vpack.c.bf16 %v4705, %v4701
        %v4710 = vpack.c.bf16 %v4706, %v4702
        %v4711 = vpack.c.bf16 %v4707, %v4703
        %v4712 = vld [vmem:[#allocation33] sm:$0xff]
        %v4713 = vld [vmem:[#allocation33 + $0x8] sm:$0xff]
        %v4714 = vld [vmem:[#allocation33 + $0x10] sm:$0xff]
        %v4715 = vld [vmem:[#allocation33 + $0x18] sm:$0xff]
        %v4716 = vld [vmem:[#allocation33 + $0x20] sm:$0xff]
        %v4717 = vld [vmem:[#allocation33 + $0x28] sm:$0xff]
        %v4718 = vld [vmem:[#allocation33 + $0x30] sm:$0xff]
        %v4719 = vld [vmem:[#allocation33 + $0x38] sm:$0xff]
        %v4720 = vld [vmem:[#allocation33 + $0x40] sm:$0xff]
        %v4721 = vld [vmem:[#allocation33 + $0x48] sm:$0xff]
        %v4722 = vld [vmem:[#allocation33 + $0x50] sm:$0xff]
        %v4723 = vld [vmem:[#allocation33 + $0x58] sm:$0xff]
        %v4724 = vld [vmem:[#allocation33 + $0x60] sm:$0xff]
        %v4725 = vld [vmem:[#allocation33 + $0x68] sm:$0xff]
        %v4726 = vld [vmem:[#allocation33 + $0x70] sm:$0xff]
        %v4727 = vld [vmem:[#allocation33 + $0x78] sm:$0xff]
        %v4728 = vld [vmem:[#allocation33 + $0x80] sm:$0xff]
        %v4729 = vld [vmem:[#allocation33 + $0x88] sm:$0xff]
        %v4730 = vld [vmem:[#allocation33 + $0x90] sm:$0xff]
        %v4731 = vld [vmem:[#allocation33 + $0x98] sm:$0xff]
        %v4732 = vld [vmem:[#allocation33 + $0xa0] sm:$0xff]
        %v4733 = vld [vmem:[#allocation33 + $0xa8] sm:$0xff]
        %v4734 = vld [vmem:[#allocation33 + $0xb0] sm:$0xff]
        %v4735 = vld [vmem:[#allocation33 + $0xb8] sm:$0xff]
        %v4736 = vld [vmem:[#allocation33 + $0xc0] sm:$0xff]
        %v4737 = vld [vmem:[#allocation33 + $0xc8] sm:$0xff]
        %v4738 = vld [vmem:[#allocation33 + $0xd0] sm:$0xff]
        %v4739 = vld [vmem:[#allocation33 + $0xd8] sm:$0xff]
        %v4740 = vld [vmem:[#allocation33 + $0xe0] sm:$0xff]
        %v4741 = vld [vmem:[#allocation33 + $0xe8] sm:$0xff]
        %v4742 = vld [vmem:[#allocation33 + $0xf0] sm:$0xff]
        %v4743 = vld [vmem:[#allocation33 + $0xf8] sm:$0xff]
        %v4744 = vld [vmem:[#allocation33 + $0x100] sm:$0xff]
        %v4745 = vld [vmem:[#allocation33 + $0x108] sm:$0xff]
        %v4746 = vld [vmem:[#allocation33 + $0x110] sm:$0xff]
        %v4747 = vld [vmem:[#allocation33 + $0x118] sm:$0xff]
        %v4748 = vld [vmem:[#allocation33 + $0x120] sm:$0xff]
        %v4749 = vld [vmem:[#allocation33 + $0x128] sm:$0xff]
        %v4750 = vld [vmem:[#allocation33 + $0x130] sm:$0xff]
        %v4751 = vld [vmem:[#allocation33 + $0x138] sm:$0xff]
        %v4752 = vld [vmem:[#allocation33 + $0x140] sm:$0xff]
        %v4753 = vld [vmem:[#allocation33 + $0x148] sm:$0xff]
        %v4754 = vld [vmem:[#allocation33 + $0x150] sm:$0xff]
        %v4755 = vld [vmem:[#allocation33 + $0x158] sm:$0xff]
        %v4756 = vld [vmem:[#allocation33 + $0x160] sm:$0xff]
        %v4757 = vld [vmem:[#allocation33 + $0x168] sm:$0xff]
        %v4758 = vld [vmem:[#allocation33 + $0x170] sm:$0xff]
        %v4759 = vld [vmem:[#allocation33 + $0x178] sm:$0xff]
        %v4760 = vld [vmem:[#allocation33 + $0x180] sm:$0xff]
        %v4761 = vld [vmem:[#allocation33 + $0x188] sm:$0xff]
        %v4762 = vld [vmem:[#allocation33 + $0x190] sm:$0xff]
        %v4763 = vld [vmem:[#allocation33 + $0x198] sm:$0xff]
        %v4764 = vld [vmem:[#allocation33 + $0x1a0] sm:$0xff]
        %v4765 = vld [vmem:[#allocation33 + $0x1a8] sm:$0xff]
        %v4766 = vld [vmem:[#allocation33 + $0x1b0] sm:$0xff]
        %v4767 = vld [vmem:[#allocation33 + $0x1b8] sm:$0xff]
        %v4768 = vld [vmem:[#allocation33 + $0x1c0] sm:$0xff]
        %v4769 = vld [vmem:[#allocation33 + $0x1c8] sm:$0xff]
        %v4770 = vld [vmem:[#allocation33 + $0x1d0] sm:$0xff]
        %v4771 = vld [vmem:[#allocation33 + $0x1d8] sm:$0xff]
        %v4772 = vld [vmem:[#allocation33 + $0x1e0] sm:$0xff]
        %v4773 = vld [vmem:[#allocation33 + $0x1e8] sm:$0xff]
        %v4774 = vld [vmem:[#allocation33 + $0x1f0] sm:$0xff]
        %v4775 = vld [vmem:[#allocation33 + $0x1f8] sm:$0xff]
        %v4776 = vld [vmem:[#allocation35] sm:$0x3]
        %v4778 = vlaneseq
        %v4779 = vshrl.u32 %v4778, 7
        %v4780 = vsub.s32 0, %v4779
        %v4781 = vrot.slane %v4776, %v4780
        %v4782 = vlaneseq
        %v4783 = vshrl.u32 %v4782, 7
        %v4784 = vsub.s32 1, %v4783
        %v4785 = vrot.slane %v4776, %v4784
        %v4852 = vunpack.c.l.b16 %v4712
        %v4853 = vunpack.c.h.b16 %v4712
        %v4854 = vunpack.c.l.b16 %v4713
        %v4855 = vunpack.c.h.b16 %v4713
        %v4856 = vunpack.c.l.b16 %v4714
        %v4857 = vunpack.c.h.b16 %v4714
        %v4858 = vunpack.c.l.b16 %v4715
        %v4859 = vunpack.c.h.b16 %v4715
        %v4860 = vunpack.c.l.b16 %v4716
        %v4861 = vunpack.c.h.b16 %v4716
        %v4862 = vunpack.c.l.b16 %v4717
        %v4863 = vunpack.c.h.b16 %v4717
        %v4864 = vunpack.c.l.b16 %v4718
        %v4865 = vunpack.c.h.b16 %v4718
        %v4866 = vunpack.c.l.b16 %v4719
        %v4867 = vunpack.c.h.b16 %v4719
        %v4868 = vunpack.c.l.b16 %v4720
        %v4869 = vunpack.c.h.b16 %v4720
        %v4870 = vunpack.c.l.b16 %v4721
        %v4871 = vunpack.c.h.b16 %v4721
        %v4872 = vunpack.c.l.b16 %v4722
        %v4873 = vunpack.c.h.b16 %v4722
        %v4874 = vunpack.c.l.b16 %v4723
        %v4875 = vunpack.c.h.b16 %v4723
        %v4876 = vunpack.c.l.b16 %v4724
        %v4877 = vunpack.c.h.b16 %v4724
        %v4878 = vunpack.c.l.b16 %v4725
        %v4879 = vunpack.c.h.b16 %v4725
        %v4880 = vunpack.c.l.b16 %v4726
        %v4881 = vunpack.c.h.b16 %v4726
        %v4882 = vunpack.c.l.b16 %v4727
        %v4883 = vunpack.c.h.b16 %v4727
        %v4884 = vunpack.c.l.b16 %v4728
        %v4885 = vunpack.c.h.b16 %v4728
        %v4886 = vunpack.c.l.b16 %v4729
        %v4887 = vunpack.c.h.b16 %v4729
        %v4888 = vunpack.c.l.b16 %v4730
        %v4889 = vunpack.c.h.b16 %v4730
        %v4890 = vunpack.c.l.b16 %v4731
        %v4891 = vunpack.c.h.b16 %v4731
        %v4892 = vunpack.c.l.b16 %v4732
        %v4893 = vunpack.c.h.b16 %v4732
        %v4894 = vunpack.c.l.b16 %v4733
        %v4895 = vunpack.c.h.b16 %v4733
        %v4896 = vunpack.c.l.b16 %v4734
        %v4897 = vunpack.c.h.b16 %v4734
        %v4898 = vunpack.c.l.b16 %v4735
        %v4899 = vunpack.c.h.b16 %v4735
        %v4900 = vunpack.c.l.b16 %v4736
        %v4901 = vunpack.c.h.b16 %v4736
        %v4902 = vunpack.c.l.b16 %v4737
        %v4903 = vunpack.c.h.b16 %v4737
        %v4904 = vunpack.c.l.b16 %v4738
        %v4905 = vunpack.c.h.b16 %v4738
        %v4906 = vunpack.c.l.b16 %v4739
        %v4907 = vunpack.c.h.b16 %v4739
        %v4908 = vunpack.c.l.b16 %v4740
        %v4909 = vunpack.c.h.b16 %v4740
        %v4910 = vunpack.c.l.b16 %v4741
        %v4911 = vunpack.c.h.b16 %v4741
        %v4912 = vunpack.c.l.b16 %v4742
        %v4913 = vunpack.c.h.b16 %v4742
        %v4914 = vunpack.c.l.b16 %v4743
        %v4915 = vunpack.c.h.b16 %v4743
        %v4916 = vunpack.c.l.b16 %v4744
        %v4917 = vunpack.c.h.b16 %v4744
        %v4918 = vunpack.c.l.b16 %v4745
        %v4919 = vunpack.c.h.b16 %v4745
        %v4920 = vunpack.c.l.b16 %v4746
        %v4921 = vunpack.c.h.b16 %v4746
        %v4922 = vunpack.c.l.b16 %v4747
        %v4923 = vunpack.c.h.b16 %v4747
        %v4924 = vunpack.c.l.b16 %v4748
        %v4925 = vunpack.c.h.b16 %v4748
        %v4926 = vunpack.c.l.b16 %v4749
        %v4927 = vunpack.c.h.b16 %v4749
        %v4928 = vunpack.c.l.b16 %v4750
        %v4929 = vunpack.c.h.b16 %v4750
        %v4930 = vunpack.c.l.b16 %v4751
        %v4931 = vunpack.c.h.b16 %v4751
        %v4932 = vunpack.c.l.b16 %v4752
        %v4933 = vunpack.c.h.b16 %v4752
        %v4934 = vunpack.c.l.b16 %v4753
        %v4935 = vunpack.c.h.b16 %v4753
        %v4936 = vunpack.c.l.b16 %v4754
        %v4937 = vunpack.c.h.b16 %v4754
        %v4938 = vunpack.c.l.b16 %v4755
        %v4939 = vunpack.c.h.b16 %v4755
        %v4940 = vunpack.c.l.b16 %v4756
        %v4941 = vunpack.c.h.b16 %v4756
        %v4942 = vunpack.c.l.b16 %v4757
        %v4943 = vunpack.c.h.b16 %v4757
        %v4944 = vunpack.c.l.b16 %v4758
        %v4945 = vunpack.c.h.b16 %v4758
        %v4946 = vunpack.c.l.b16 %v4759
        %v4947 = vunpack.c.h.b16 %v4759
        %v4948 = vunpack.c.l.b16 %v4760
        %v4949 = vunpack.c.h.b16 %v4760
        %v4950 = vunpack.c.l.b16 %v4761
        %v4951 = vunpack.c.h.b16 %v4761
        %v4952 = vunpack.c.l.b16 %v4762
        %v4953 = vunpack.c.h.b16 %v4762
        %v4954 = vunpack.c.l.b16 %v4763
        %v4955 = vunpack.c.h.b16 %v4763
        %v4956 = vunpack.c.l.b16 %v4764
        %v4957 = vunpack.c.h.b16 %v4764
        %v4958 = vunpack.c.l.b16 %v4765
        %v4959 = vunpack.c.h.b16 %v4765
        %v4960 = vunpack.c.l.b16 %v4766
        %v4961 = vunpack.c.h.b16 %v4766
        %v4962 = vunpack.c.l.b16 %v4767
        %v4963 = vunpack.c.h.b16 %v4767
        %v4964 = vunpack.c.l.b16 %v4768
        %v4965 = vunpack.c.h.b16 %v4768
        %v4966 = vunpack.c.l.b16 %v4769
        %v4967 = vunpack.c.h.b16 %v4769
        %v4968 = vunpack.c.l.b16 %v4770
        %v4969 = vunpack.c.h.b16 %v4770
        %v4970 = vunpack.c.l.b16 %v4771
        %v4971 = vunpack.c.h.b16 %v4771
        %v4972 = vunpack.c.l.b16 %v4772
        %v4973 = vunpack.c.h.b16 %v4772
        %v4974 = vunpack.c.l.b16 %v4773
        %v4975 = vunpack.c.h.b16 %v4773
        %v4976 = vunpack.c.l.b16 %v4774
        %v4977 = vunpack.c.h.b16 %v4774
        %v4978 = vunpack.c.l.b16 %v4775
        %v4979 = vunpack.c.h.b16 %v4775
        %v4980 = vpack.c.b16 %v4854, %v4852
        %v4981 = vpack.c.b16 %v4855, %v4853
        %v4982 = vpack.c.b16 %v4858, %v4856
        %v4983 = vpack.c.b16 %v4859, %v4857
        %v4984 = vpack.c.b16 %v4862, %v4860
        %v4985 = vpack.c.b16 %v4863, %v4861
        %v4986 = vpack.c.b16 %v4866, %v4864
        %v4987 = vpack.c.b16 %v4867, %v4865
        %v4988 = vpack.c.b16 %v4870, %v4868
        %v4989 = vpack.c.b16 %v4871, %v4869
        %v4990 = vpack.c.b16 %v4874, %v4872
        %v4991 = vpack.c.b16 %v4875, %v4873
        %v4992 = vpack.c.b16 %v4878, %v4876
        %v4993 = vpack.c.b16 %v4879, %v4877
        %v4994 = vpack.c.b16 %v4882, %v4880
        %v4995 = vpack.c.b16 %v4883, %v4881
        %v4996 = vpack.c.b16 %v4886, %v4884
        %v4997 = vpack.c.b16 %v4887, %v4885
        %v4998 = vpack.c.b16 %v4890, %v4888
        %v4999 = vpack.c.b16 %v4891, %v4889
        %v5000 = vpack.c.b16 %v4894, %v4892
        %v5001 = vpack.c.b16 %v4895, %v4893
        %v5002 = vpack.c.b16 %v4898, %v4896
        %v5003 = vpack.c.b16 %v4899, %v4897
        %v5004 = vpack.c.b16 %v4902, %v4900
        %v5005 = vpack.c.b16 %v4903, %v4901
        %v5006 = vpack.c.b16 %v4906, %v4904
        %v5007 = vpack.c.b16 %v4907, %v4905
        %v5008 = vpack.c.b16 %v4910, %v4908
        %v5009 = vpack.c.b16 %v4911, %v4909
        %v5010 = vpack.c.b16 %v4914, %v4912
        %v5011 = vpack.c.b16 %v4915, %v4913
        %v5012 = vpack.c.b16 %v4918, %v4916
        %v5013 = vpack.c.b16 %v4919, %v4917
        %v5014 = vpack.c.b16 %v4922, %v4920
        %v5015 = vpack.c.b16 %v4923, %v4921
        %v5016 = vpack.c.b16 %v4926, %v4924
        %v5017 = vpack.c.b16 %v4927, %v4925
        %v5018 = vpack.c.b16 %v4930, %v4928
        %v5019 = vpack.c.b16 %v4931, %v4929
        %v5020 = vpack.c.b16 %v4934, %v4932
        %v5021 = vpack.c.b16 %v4935, %v4933
        %v5022 = vpack.c.b16 %v4938, %v4936
        %v5023 = vpack.c.b16 %v4939, %v4937
        %v5024 = vpack.c.b16 %v4942, %v4940
        %v5025 = vpack.c.b16 %v4943, %v4941
        %v5026 = vpack.c.b16 %v4946, %v4944
        %v5027 = vpack.c.b16 %v4947, %v4945
        %v5028 = vpack.c.b16 %v4950, %v4948
        %v5029 = vpack.c.b16 %v4951, %v4949
        %v5030 = vpack.c.b16 %v4954, %v4952
        %v5031 = vpack.c.b16 %v4955, %v4953
        %v5032 = vpack.c.b16 %v4958, %v4956
        %v5033 = vpack.c.b16 %v4959, %v4957
        %v5034 = vpack.c.b16 %v4962, %v4960
        %v5035 = vpack.c.b16 %v4963, %v4961
        %v5036 = vpack.c.b16 %v4966, %v4964
        %v5037 = vpack.c.b16 %v4967, %v4965
        %v5038 = vpack.c.b16 %v4970, %v4968
        %v5039 = vpack.c.b16 %v4971, %v4969
        %v5040 = vpack.c.b16 %v4974, %v4972
        %v5041 = vpack.c.b16 %v4975, %v4973
        %v5042 = vpack.c.b16 %v4978, %v4976
        %v5043 = vpack.c.b16 %v4979, %v4977
        %5108 = vmatprep.subr.bf16.mxu0 %v4995
        %5109 = vmatpush1.bf16.msra.mxu0 %v4994
        %5110 = vmatprep.subr.bf16.mxu0 %v4993
        %5111 = vmatpush1.bf16.msra.mxu0 %v4992
        %5112 = vmatprep.subr.bf16.mxu0 %v4991
        %5113 = vmatpush1.bf16.msra.mxu0 %v4990
        %5114 = vmatprep.subr.bf16.mxu0 %v4989
        %5115 = vmatpush1.bf16.msra.mxu0 %v4988
        %5116 = vmatprep.subr.bf16.mxu0 %v4987
        %5117 = vmatpush1.bf16.msra.mxu0 %v4986
        %5118 = vmatprep.subr.bf16.mxu0 %v4985
        %5119 = vmatpush1.bf16.msra.mxu0 %v4984
        %5120 = vmatprep.subr.bf16.mxu0 %v4983
        %5121 = vmatpush1.bf16.msra.mxu0 %v4982
        %5122 = vmatprep.subr.bf16.mxu0 %v4981
        %5123 = vmatpush1.bf16.msra.mxu0 %v4980
        %5124 = vmatprep.subr.bf16.mxu0 %v5011
        %5125 = vmatpush2.bf16.msra.mxu0 %v5010
        %5126 = vmatprep.subr.bf16.mxu0 %v5009
        %5127 = vmatpush2.bf16.msra.mxu0 %v5008
        %5128 = vmatprep.subr.bf16.mxu0 %v5007
        %5129 = vmatpush2.bf16.msra.mxu0 %v5006
        %5130 = vmatprep.subr.bf16.mxu0 %v5005
        %5131 = vmatpush2.bf16.msra.mxu0 %v5004
        %5132 = vmatprep.subr.bf16.mxu0 %v5003
        %5133 = vmatpush2.bf16.msra.mxu0 %v5002
        %5134 = vmatprep.subr.bf16.mxu0 %v5001
        %5135 = vmatpush2.bf16.msra.mxu0 %v5000
        %5136 = vmatprep.subr.bf16.mxu0 %v4999
        %5137 = vmatpush2.bf16.msra.mxu0 %v4998
        %5138 = vmatprep.subr.bf16.mxu0 %v4997
        %5139 = vmatpush2.bf16.msra.mxu0 %v4996
        %5140 = vmatprep.mubr.bf16.mxu0 %v4709
        %5141 = vmatmul.mubr.bf16.gmra.mxu0 %v4708
        %v5142 = vpop.f32.mrf.mxu0
        %v5143 = vadd.f32 %v4781, %v5142
        %v5144 = vpop.f32.mrf.mxu0
        %v5145 = vadd.f32 %v4785, %v5144
        %v5146 = vpop.f32.mrf.mxu0
        %v5147 = vadd.f32 %v4781, %v5146
        %v5148 = vpop.f32.mrf.mxu0
        %v5149 = vadd.f32 %v4785, %v5148
        %5150 = vdwg.mxu0
        %5151 = vmatprep.subr.bf16.mxu0 %v5027
        %5152 = vmatpush1.bf16.msra.mxu0 %v5026
        %5153 = vmatprep.subr.bf16.mxu0 %v5025
        %5154 = vmatpush1.bf16.msra.mxu0 %v5024
        %5155 = vmatprep.subr.bf16.mxu0 %v5023
        %5156 = vmatpush1.bf16.msra.mxu0 %v5022
        %5157 = vmatprep.subr.bf16.mxu0 %v5021
        %5158 = vmatpush1.bf16.msra.mxu0 %v5020
        %5159 = vmatprep.subr.bf16.mxu0 %v5019
        %5160 = vmatpush1.bf16.msra.mxu0 %v5018
        %5161 = vmatprep.subr.bf16.mxu0 %v5017
        %5162 = vmatpush1.bf16.msra.mxu0 %v5016
        %5163 = vmatprep.subr.bf16.mxu0 %v5015
        %5164 = vmatpush1.bf16.msra.mxu0 %v5014
        %5165 = vmatprep.subr.bf16.mxu0 %v5013
        %5166 = vmatpush1.bf16.msra.mxu0 %v5012
        %5167 = vmatprep.subr.bf16.mxu0 %v5043
        %5168 = vmatpush2.bf16.msra.mxu0 %v5042
        %5169 = vmatprep.subr.bf16.mxu0 %v5041
        %5170 = vmatpush2.bf16.msra.mxu0 %v5040
        %5171 = vmatprep.subr.bf16.mxu0 %v5039
        %5172 = vmatpush2.bf16.msra.mxu0 %v5038
        %5173 = vmatprep.subr.bf16.mxu0 %v5037
        %5174 = vmatpush2.bf16.msra.mxu0 %v5036
        %5175 = vmatprep.subr.bf16.mxu0 %v5035
        %5176 = vmatpush2.bf16.msra.mxu0 %v5034
        %5177 = vmatprep.subr.bf16.mxu0 %v5033
        %5178 = vmatpush2.bf16.msra.mxu0 %v5032
        %5179 = vmatprep.subr.bf16.mxu0 %v5031
        %5180 = vmatpush2.bf16.msra.mxu0 %v5030
        %5181 = vmatprep.subr.bf16.mxu0 %v5029
        %5182 = vmatpush2.bf16.msra.mxu0 %v5028
        %5183 = vmatprep.mubr.bf16.mxu0 %v4711
        %5184 = vmatmul.mubr.bf16.gmra.mxu0 %v4710
        %v5185 = vpop.f32.mrf.mxu0
        %v5186 = vadd.f32 %v5143, %v5185
        %v5187 = vpop.f32.mrf.mxu0
        %v5188 = vadd.f32 %v5145, %v5187
        %v5189 = vpop.f32.mrf.mxu0
        %v5190 = vadd.f32 %v5147, %v5189
        %v5191 = vpop.f32.mrf.mxu0
        %v5192 = vadd.f32 %v5149, %v5191
        %5193 = vdwg.mxu0
        %v5194 = vadd.f32 %v4124, %v5186
        %v5195 = vadd.f32 %v4125, %v5188
        %v5196 = vadd.f32 %v4126, %v5190
        %v5197 = vadd.f32 %v4127, %v5192
        %5198 = vst [vmem:[%s1078] sm:$0xff] %v5194
        %5199 = vst [vmem:[%s1078 + $0x8] sm:$0xff] %v5195
        %5200 = vst [vmem:[%s1078 + $0x10] sm:$0xff] %v5196
        %5201 = vst [vmem:[%s1078 + $0x18] sm:$0xff] %v5197
        %s5202 = sand.u32 %s585, 1
        %s5203 = scalar_lea.sflag [#allocation5], %s5202
        %s5204 = sand.u32 %s585, 1
        %s5205 = smul.addr %s5204, 32
        %s5206 = scalar_lea.vmem [#allocation36], %s5205
        // Predicated region
        $region201: #{decoder_layer_forward.1} parent=115 // pred_check
          %p5207 = pneg %p595
        $region202: #{decoder_layer_forward.1} parent=115 // pred_check_branch
          %5209 = sbr.rel (%p5207) target = $region204
        $region203: #{decoder_layer_forward.1} parent=115 // pred_region
          %s5210 = smul.u32 2, %s53
          %s5212 = ssub.s32 512, 512
          %5213 = vsyncadd %s5203, %s5212
          %s5214 = smul.addr %s5210, 2
          %s5215 = smul.addr %s5214, 128
          %s5216 = scalar_lea.hbm %s24, %s5215
          %s5217 = sshll.u32 %s5206, 4
          %s5218 = int_to_ptr.vmem [resolvable:$true] %s5217
          %5223 = dma.vmem_to_hbm [thread:$0]  %s5218, 512, %s5216, %s5203, 256, 256, 16
        $region204: #{decoder_layer_forward.1} parent=115 // pred_fallthru
          _
      $region116: #{decoder_layer_forward.1} parent=5 // pred_fallthru
        _
      %p5224 = scmp.le.s32.totalorder 2, %s48
      // Predicated region
      $region205: #{decoder_layer_forward.1} parent=5 // pred_check
        %p5225 = pneg %p5224
      $region206: #{decoder_layer_forward.1} parent=5 // pred_check_branch
        %5227 = sbr.rel (%p5225) target = $region208
      $region207: #{decoder_layer_forward.1} parent=5 // pred_region
        %s5228 = ssub.s32 %s48, 2
        // Predicated region
        $region209: #{decoder_layer_forward.1} parent=207 // pred_check
          %p5229 = pneg %p601
        $region210: #{decoder_layer_forward.1} parent=207 // pred_check_branch
          %5231 = sbr.rel (%p5229) target = $region212
        $region211: #{decoder_layer_forward.1} parent=207 // pred_region
          %s5232 = sand.u32 %s586, 1
          %s5233 = scalar_lea.sflag [#allocation5], %s5232
          %s5234 = sand.u32 %s586, 1
          %s5235 = smul.addr %s5234, 32
          %s5236 = scalar_lea.vmem [#allocation36], %s5235
          %5237 = dma.done %s5233, 512
        $region212: #{decoder_layer_forward.1} parent=207 // pred_fallthru
          _
      $region208: #{decoder_layer_forward.1} parent=5 // pred_fallthru
        _
    $region6: #{decoder_layer_forward.1} parent=1 // loop_footer
      %s52 = sadd.s32 1, %s48
    $region7: #{decoder_layer_forward.1} parent=1 // loop_footer_branch
      %47 = sbr.rel target = $region3
    $region8: #{decoder_layer_forward.1} parent=1 // loop_exit
      _
    %5238 = vsyncpa [#allocation4], 1
    %s5239 = scalar_lea.sflag [#allocation4], 1
    %5240 = vsyncpa %s5239, 1
    %5241 = vsyncpa [#allocation7], 1
    %s5242 = scalar_lea.sflag [#allocation7], 1
    %5243 = vsyncpa %s5242, 1
    %5244 = vsyncpa [#allocation10], 1
    %5245 = vsyncpa [#allocation13], 1
    %5246 = vsyncpa [#allocation16], 1
    %5247 = vsyncpa [#allocation19], 1
    %5248 = vsyncpa [#allocation22], 1
    %5249 = vsyncpa [#allocation25], 1
    %5250 = vsyncpa [#allocation28], 1
    %5251 = vsyncpa [#allocation31], 1
    %5252 = vsyncpa [#allocation34], 1
    %5253 = vsyncpa [#allocation5], 1
    %s5254 = scalar_lea.sflag [#allocation5], 1
    %5255 = vsyncpa %s5254, 1

</llo_original>
